<compile_context>
chip_gen: v7x
topology: tpu7x:2x2x1
jax: 0.10.0
libtpu: 0.0.40
codegen_flags: <defaults>
</compile_context>

<pallas_src>
import functools
import math

import jax
import jax.numpy as jnp
from jax import lax
from jax.experimental import pallas as pl
from jax.experimental.pallas import tpu as pltpu


# --------------------------------------------------------------------------
# Kernel
# --------------------------------------------------------------------------
def _block_kernel(x_ref, ln1_g_ref, ln1_b_ref, wqkv_ref, wp_ref, bp_ref,
                  ln2_g_ref, ln2_b_ref, w1_ref, b1_ref, w2_ref, b2_ref,
                  out_ref, *, num_heads, eps, tdtype):
    # x_ref/out_ref : (1, N, C)
    # wqkv : (C, 3C) (scale folded into q cols)   wp : (C, C)
    # w1   : (C, hidden)   w2 : (hidden, C)   biases / LN params : (1, dim) f32
    x = x_ref[0]                                   # (N, C) float32
    N, C = x.shape
    hd = C // num_heads
    mm_dtype = wqkv_ref.dtype                      # f32 or bf16 (host decides)

    def layer_norm(v, g, b):
        mu = jnp.mean(v, axis=-1, keepdims=True)
        d = v - mu
        var = jnp.mean(d * d, axis=-1, keepdims=True)
        return d * lax.rsqrt(var + eps) * g + b

    def mm(a, b):
        # MXU matmul, f32 accumulation; inputs cast to the weight dtype.
        return jnp.dot(a.astype(mm_dtype), b.astype(mm_dtype),
                       preferred_element_type=jnp.float32)

    # ---------------- attention branch ----------------
    h1 = layer_norm(x, ln1_g_ref[...], ln1_b_ref[...])     # (N, C) f32
    qkv = mm(h1, wqkv_ref[...])                             # (N, 3C): ONE lane-dense matmul

    dn_nt = (((1,), (1,)), ((), ()))                        # a @ b.T (contract last dims)
    heads = []
    # TODO(synk): for production H (e.g. 12) stage q/k/v into an (H, N, hd)
    # VMEM scratch and iterate with lax.fori_loop to bound live ranges; a
    # static unroll with static lane slices is used here for lowering robustness.
    for h in range(num_heads):
        q_h = qkv[:, h * hd:(h + 1) * hd]                   # static 64-lane slices:
        k_h = qkv[:, C + h * hd:C + (h + 1) * hd]           # cheap XLU/masked-load work
        v_h = qkv[:, 2 * C + h * hd:2 * C + (h + 1) * hd]
        s = lax.dot_general(q_h.astype(mm_dtype), k_h.astype(mm_dtype), dn_nt,
                            preferred_element_type=jnp.float32)      # (N, N)
        s = s - jnp.max(s, axis=-1, keepdims=True)
        p = jnp.exp(s.astype(tdtype))                       # EUP; bf16 on v6e+/v7x
        denom = jnp.sum(p.astype(jnp.float32), axis=-1, keepdims=True)
        # normalize after PV:  (p / denom) @ v  ==  (p @ v) * (1 / denom)
        heads.append(mm(p, v_h) * pl.reciprocal(denom, approx=True))  # (N, hd) f32
    o = jnp.concatenate(heads, axis=-1)                     # (N, C), head-major like torch
    x1 = x + mm(o, wp_ref[...]) + bp_ref[...]               # ONE (C,C) proj matmul + residual

    # ---------------- MLP branch ----------------
    h2 = layer_norm(x1, ln2_g_ref[...], ln2_b_ref[...])
    z = mm(h2, w1_ref[...]) + b1_ref[...]                   # (N, hidden)
    # TODO(synk): nn.GELU() is the exact erf GELU; tanh approximation is used
    # here (max abs deviation ~3e-4) since erf is not guaranteed to lower in Mosaic.
    zt = z.astype(tdtype)                                   # bf16 transcendental on v6e+/v7x
    c = math.sqrt(2.0 / math.pi)
    g = 0.5 * zt * (1.0 + jnp.tanh(c * (zt + 0.044715 * (zt * zt * zt))))
    mlp = mm(g, w2_ref[...]) + b2_ref[...]

    out_ref[0] = (x1 + mlp).astype(out_ref.dtype)


# --------------------------------------------------------------------------
# Host-side packing (call ONCE, outside the per-step path)
# --------------------------------------------------------------------------
def prepare_block_params(params, *, num_heads, qk_scale=None,
                         compute_dtype=jnp.bfloat16):
    """Pack nn.Linear/LayerNorm weights into the kernel's lane-dense layouts.

    Do this once and reuse the result; under jit these transposes/casts are
    real XLA ops, so keeping them out of the per-call path avoids an extra
    read+write of all block weights per forward pass.
    """
    w_qkv = jnp.asarray(params["w_qkv"])                 # (3C, C), nn.Linear (out, in)
    three_c, C = w_qkv.shape
    assert three_c == 3 * C and C % num_heads == 0
    hd = C // num_heads
    scale = qk_scale if qk_scale is not None else hd ** (-0.5)

    wqkv = w_qkv.T                                       # (C, 3C) fused, lane-dense
    col_scale = jnp.concatenate([jnp.full((C,), scale, jnp.float32),
                                 jnp.ones((2 * C,), jnp.float32)])
    wqkv = wqkv * col_scale[None, :]                     # fold softmax scale into q cols
    wp = jnp.asarray(params["w_proj"]).T                 # (C, C)
    w1 = jnp.asarray(params["w_fc1"]).T                  # (C, hidden)
    w2 = jnp.asarray(params["w_fc2"]).T                  # (hidden, C)
    wqkv, wp, w1, w2 = (w.astype(compute_dtype) for w in (wqkv, wp, w1, w2))

    r2 = lambda v: jnp.asarray(v, jnp.float32).reshape(1, -1)   # biases / LN stay f32
    return (r2(params["ln1_g"]), r2(params["ln1_b"]),
            wqkv, wp, r2(params["b_proj"]),
            r2(params["ln2_g"]), r2(params["ln2_b"]),
            w1, r2(params["b_fc1"]), w2, r2(params["b_fc2"]))


def _default_transcendental_dtype():
    # bf16 EUP/VPU exist on v6e and later; keep f32 on v5e/v5p/v4 and unknown.
    try:
        kind = jax.devices()[0].device_kind.lower()
    except Exception:
        return jnp.float32
    if ("v6" in kind) or ("v7" in kind) or ("tpu7" in kind):
        return jnp.bfloat16
    return jnp.float32


def _default_vmem_limit_bytes():
    # Raise the scoped-VMEM limit well above the 16/32 MiB defaults, with
    # headroom under the chip's physical VMEM (64 MiB on v7x, 128 MiB v5e/v6e).
    try:
        cap = getattr(pltpu.get_tpu_info(), "vmem_capacity_bytes", None)
        if cap:
            return int(cap * 0.85)
    except Exception:
        pass
    return 56 * 1024 * 1024


# --------------------------------------------------------------------------
# pallas_call wrapper
# --------------------------------------------------------------------------
def vit_block(x, prepped, *, num_heads, eps=1e-5, transcendental_dtype=None,
              single_buffer_weights=True, vmem_limit_bytes=None):
    """Fused ViT Block forward.  `prepped` comes from prepare_block_params()."""
    (ln1_g, ln1_b, wqkv, wp, bp, ln2_g, ln2_b, w1, b1, w2, b2) = prepped
    B, N, C = x.shape
    assert C % num_heads == 0
    hd = C // num_heads
    hidden = w1.shape[1]
    if transcendental_dtype is None:
        transcendental_dtype = _default_transcendental_dtype()
    if vmem_limit_bytes is None:
        vmem_limit_bytes = _default_vmem_limit_bytes()

    # Advisory cost estimate so XLA schedules neighbors around the fused call.
    flops = 2 * B * (N * C * 3 * C            # fused qkv projection
                     + 2 * num_heads * N * N * hd   # qk^T and pv
                     + N * C * C              # output projection
                     + 2 * N * C * hidden)    # fc1 + fc2
    transcendentals = B * (num_heads * N * N + N * hidden + num_heads * N)
    weight_bytes = sum(int(w.size) * w.dtype.itemsize for w in prepped)
    bytes_accessed = 2 * int(x.size) * x.dtype.itemsize + weight_bytes
    cost = pl.CostEstimate(flops=flops, transcendentals=transcendentals,
                           bytes_accessed=bytes_accessed)

    kernel = functools.partial(_block_kernel, num_heads=num_heads, eps=eps,
                               tdtype=transcendental_dtype)

    def call(weight_buffers):
        if weight_buffers is None:
            wspec = lambda shape: pl.BlockSpec(shape, lambda b: (0,) * len(shape))
        else:
            pm = pl.Buffered(weight_buffers)   # grid-invariant -> single buffer
            wspec = lambda shape: pl.BlockSpec(shape, lambda b: (0,) * len(shape),
                                               pipeline_mode=pm)
        grid_spec = pltpu.PrefetchScalarGridSpec(
            num_scalar_prefetch=0,
            grid=(B,),
            in_specs=[
                pl.BlockSpec((1, N, C), lambda b: (b, 0, 0)),   # x
                wspec((1, C)),            # ln1 gamma
                wspec((1, C)),            # ln1 beta
                wspec((C, 3 * C)),        # fused qkv weight (scale folded)
                wspec((C, C)),            # proj weight
                wspec((1, C)),            # proj bias
                wspec((1, C)),            # ln2 gamma
                wspec((1, C)),            # ln2 beta
                wspec((C, hidden)),       # fc1 weight^T
                wspec((1, hidden)),       # fc1 bias
                wspec((hidden, C)),       # fc2 weight^T
                wspec((1, C)),            # fc2 bias
            ],
            out_specs=pl.BlockSpec((1, N, C), lambda b: (b, 0, 0)),
        )
        return pl.pallas_call(
            kernel,
            out_shape=jax.ShapeDtypeStruct((B, N, C), x.dtype),
            grid_spec=grid_spec,
            compiler_params=pltpu.CompilerParams(
                dimension_semantics=("parallel",),   # one batch element per TC on v7x
                vmem_limit_bytes=int(vmem_limit_bytes)),
            cost_estimate=cost,
        )(x, ln1_g, ln1_b, wqkv, wp, bp, ln2_g, ln2_b, w1, b1, w2, b2)

    if single_buffer_weights:
        try:
            return call(1)
        except Exception:
            # Installed jax rejects pipeline_mode / Buffered(1): fall back to
            # default double buffering so the kernel still compiles and runs.
            pass
    return call(None)


# --------------------------------------------------------------------------
# Pure-JAX reference (transcription of the PyTorch Block.forward)
# --------------------------------------------------------------------------
def _reference_block(x, p, *, num_heads, eps=1e-5):
    B, N, C = x.shape
    hd = C // num_heads
    scale = hd ** (-0.5)

    def ln(v, g, b):
        mu = v.mean(-1, keepdims=True)
        var = ((v - mu) ** 2).mean(-1, keepdims=True)
        return (v - mu) / jnp.sqrt(var + eps) * g + b

    h = ln(x, p["ln1_g"], p["ln1_b"])
    qkv = (h @ p["w_qkv"].T).reshape(B, N, 3, num_heads, hd).transpose(2, 0, 3, 1, 4)
    q, k, v = qkv[0], qkv[1], qkv[2]
    attn = jnp.einsum("bhnd,bhmd->bhnm", q, k) * scale
    attn = jax.nn.softmax(attn, axis=-1)
    o = jnp.einsum("bhnm,bhmd->bhnd", attn, v).transpose(0, 2, 1, 3).reshape(B, N, C)
    x = x + o @ p["w_proj"].T + p["b_proj"]
    h2 = ln(x, p["ln2_g"], p["ln2_b"])
    z = h2 @ p["w_fc1"].T + p["b_fc1"]
    z = 0.5 * z * (1.0 + jax.scipy.special.erf(z / math.sqrt(2.0)))   # exact nn.GELU
    return x + z @ p["w_fc2"].T + p["b_fc2"]


if __name__ == "__main__":
    B, N, C, H = 2, 16, 32, 4
    hidden = int(C * 4.0)

    key = jax.random.PRNGKey(0)
    ks = jax.random.split(key, 12)
    nrm = lambda k, shape: jax.random.normal(k, shape, dtype=jnp.float32)

    x = nrm(ks[0], (B, N, C))
    params = dict(
        ln1_g=1.0 + 0.1 * nrm(ks[1], (C,)),
        ln1_b=0.1 * nrm(ks[2], (C,)),
        w_qkv=0.02 * nrm(ks[3], (3 * C, C)),      # nn.Linear (out, in), qkv_bias=False
        w_proj=0.02 * nrm(ks[4], (C, C)),
        b_proj=0.01 * nrm(ks[5], (C,)),
        ln2_g=1.0 + 0.1 * nrm(ks[6], (C,)),
        ln2_b=0.1 * nrm(ks[7], (C,)),
        w_fc1=0.02 * nrm(ks[8], (hidden, C)),
        b_fc1=0.01 * nrm(ks[9], (hidden,)),
        w_fc2=0.02 * nrm(ks[10], (C, hidden)),
        b_fc2=0.01 * nrm(ks[11], (C,)),
    )

    ref = _reference_block(x, params, num_heads=H)

    # f32 MXU + f32 transcendentals: tight parity with the PyTorch module.
    prepped_f32 = prepare_block_params(params, num_heads=H, compute_dtype=jnp.float32)
    out_f32 = jax.block_until_ready(
        vit_block(x, prepped_f32, num_heads=H, transcendental_dtype=jnp.float32))
    assert out_f32.shape == (B, N, C)
    assert jnp.allclose(out_f32, ref, atol=2e-3, rtol=2e-3), "f32 kernel mismatch vs reference"

    # Default fast path: bf16 weights on the MXU (f32 accumulate), weights
    # packed once on the host, bf16 transcendentals on v6e+/v7x (f32 on v5e).
    prepped = prepare_block_params(params, num_heads=H)
    out = jax.block_until_ready(vit_block(x, prepped, num_heads=H))
    assert jnp.allclose(out, ref, atol=2e-2, rtol=2e-2), "bf16 kernel mismatch vs reference"

    print("KERNEL_OK")
</pallas_src>

<mosaic_0001>
module attributes {stable_mosaic.version = 11 : i64} {
  func.func @_block_kernel(%arg0: i32, %arg1: memref<1x16x32xf32, #tpu.memory_space<vmem>>, %arg2: memref<1x32xf32, #tpu.memory_space<vmem>>, %arg3: memref<1x32xf32, #tpu.memory_space<vmem>>, %arg4: memref<32x96xf32, #tpu.memory_space<vmem>>, %arg5: memref<32x32xf32, #tpu.memory_space<vmem>>, %arg6: memref<1x32xf32, #tpu.memory_space<vmem>>, %arg7: memref<1x32xf32, #tpu.memory_space<vmem>>, %arg8: memref<1x32xf32, #tpu.memory_space<vmem>>, %arg9: memref<32x128xf32, #tpu.memory_space<vmem>>, %arg10: memref<1x128xf32, #tpu.memory_space<vmem>>, %arg11: memref<128x32xf32, #tpu.memory_space<vmem>>, %arg12: memref<1x32xf32, #tpu.memory_space<vmem>>, %arg13: memref<1x16x32xf32, #tpu.memory_space<vmem>>) attributes {dimension_semantics = [#tpu.dimension_semantics<parallel>], iteration_bounds = array<i64: 2>, scalar_prefetch = 0 : i64, scratch_operands = 0 : i64, tpu.core_type = #tpu.core_type<tc>, window_params = [{transform_indices = @transform_0, window_bounds = array<i64: 1, 16, 32>}, {pipeline_mode = #tpu.pipeline_mode<synchronous>, transform_indices = @transform_1, window_bounds = array<i64: 1, 32>}, {pipeline_mode = #tpu.pipeline_mode<synchronous>, transform_indices = @transform_2, window_bounds = array<i64: 1, 32>}, {pipeline_mode = #tpu.pipeline_mode<synchronous>, transform_indices = @transform_3, window_bounds = array<i64: 32, 96>}, {pipeline_mode = #tpu.pipeline_mode<synchronous>, transform_indices = @transform_4, window_bounds = array<i64: 32, 32>}, {pipeline_mode = #tpu.pipeline_mode<synchronous>, transform_indices = @transform_5, window_bounds = array<i64: 1, 32>}, {pipeline_mode = #tpu.pipeline_mode<synchronous>, transform_indices = @transform_6, window_bounds = array<i64: 1, 32>}, {pipeline_mode = #tpu.pipeline_mode<synchronous>, transform_indices = @transform_7, window_bounds = array<i64: 1, 32>}, {pipeline_mode = #tpu.pipeline_mode<synchronous>, transform_indices = @transform_8, window_bounds = array<i64: 32, 128>}, {pipeline_mode = #tpu.pipeline_mode<synchronous>, transform_indices = @transform_9, window_bounds = array<i64: 1, 128>}, {pipeline_mode = #tpu.pipeline_mode<synchronous>, transform_indices = @transform_10, window_bounds = array<i64: 128, 32>}, {pipeline_mode = #tpu.pipeline_mode<synchronous>, transform_indices = @transform_11, window_bounds = array<i64: 1, 32>}, {transform_indices = @transform_12, window_bounds = array<i64: 1, 16, 32>}]} {
    %c0 = arith.constant 0 : index
    %c0_0 = arith.constant 0 : index
    %c0_1 = arith.constant 0 : index
    %0 = vector.load %arg1[%c0, %c0_0, %c0_1] : memref<1x16x32xf32, #tpu.memory_space<vmem>>, vector<1x16x32xf32>
    %1 = vector.shape_cast %0 : vector<1x16x32xf32> to vector<16x32xf32>
    %c0_2 = arith.constant 0 : index
    %c0_3 = arith.constant 0 : index
    %2 = vector.load %arg2[%c0_2, %c0_3] : memref<1x32xf32, #tpu.memory_space<vmem>>, vector<1x32xf32>
    %c0_4 = arith.constant 0 : index
    %c0_5 = arith.constant 0 : index
    %3 = vector.load %arg3[%c0_4, %c0_5] : memref<1x32xf32, #tpu.memory_space<vmem>>, vector<1x32xf32>
    %cst = arith.constant dense<0.000000e+00> : vector<16xf32>
    %4 = vector.multi_reduction <add>, %1, %cst [1] : vector<16x32xf32> to vector<16xf32>
    %5 = vector.shape_cast %4 : vector<16xf32> to vector<16x1xf32>
    %cst_6 = arith.constant 3.200000e+01 : f32
    %6 = vector.broadcast %cst_6 : f32 to vector<16x1xf32>
    %7 = arith.divf %5, %6 : vector<16x1xf32>
    %8 = vector.broadcast %7 : vector<16x1xf32> to vector<16x32xf32>
    %9 = arith.subf %1, %8 : vector<16x32xf32>
    %10 = arith.mulf %9, %9 : vector<16x32xf32>
    %cst_7 = arith.constant dense<0.000000e+00> : vector<16xf32>
    %11 = vector.multi_reduction <add>, %10, %cst_7 [1] : vector<16x32xf32> to vector<16xf32>
    %12 = vector.shape_cast %11 : vector<16xf32> to vector<16x1xf32>
    %cst_8 = arith.constant 3.200000e+01 : f32
    %13 = vector.broadcast %cst_8 : f32 to vector<16x1xf32>
    %14 = arith.divf %12, %13 : vector<16x1xf32>
    %cst_9 = arith.constant 9.99999974E-6 : f32
    %15 = vector.broadcast %cst_9 : f32 to vector<16x1xf32>
    %16 = arith.addf %14, %15 : vector<16x1xf32>
    %17 = math.rsqrt %16 : vector<16x1xf32>
    %18 = vector.broadcast %17 : vector<16x1xf32> to vector<16x32xf32>
    %19 = arith.mulf %9, %18 : vector<16x32xf32>
    %20 = vector.broadcast %2 : vector<1x32xf32> to vector<16x32xf32>
    %21 = arith.mulf %19, %20 : vector<16x32xf32>
    %22 = vector.broadcast %3 : vector<1x32xf32> to vector<16x32xf32>
    %23 = arith.addf %21, %22 : vector<16x32xf32>
    %c0_10 = arith.constant 0 : index
    %c0_11 = arith.constant 0 : index
    %24 = vector.load %arg4[%c0_10, %c0_11] : memref<32x96xf32, #tpu.memory_space<vmem>>, vector<32x96xf32>
    %cst_12 = arith.constant dense<0.000000e+00> : vector<16x96xf32>
    %25 = tpu.matmul %23, %24, %cst_12 {dimension_numbers = #tpu.dot_dimension_numbers<[1], [0], [0], [1], [0, 0, 1, 1], [], []>} : vector<16x32xf32>, vector<32x96xf32>, vector<16x96xf32> -> vector<16x96xf32>
    %26 = vector.extract_strided_slice %25 {offsets = [0, 0], sizes = [16, 8], strides = [1, 1]} : vector<16x96xf32> to vector<16x8xf32>
    %27 = vector.extract_strided_slice %25 {offsets = [0, 32], sizes = [16, 8], strides = [1, 1]} : vector<16x96xf32> to vector<16x8xf32>
    %28 = vector.extract_strided_slice %25 {offsets = [0, 64], sizes = [16, 8], strides = [1, 1]} : vector<16x96xf32> to vector<16x8xf32>
    %cst_13 = arith.constant dense<0.000000e+00> : vector<16x16xf32>
    %29 = tpu.matmul %26, %27, %cst_13 {dimension_numbers = #tpu.dot_dimension_numbers<[1], [1], [0], [0], [0, 0, 1, 0], [], []>} : vector<16x8xf32>, vector<16x8xf32>, vector<16x16xf32> -> vector<16x16xf32>
    %cst_14 = arith.constant dense<0xFF800000> : vector<16xf32>
    %30 = vector.multi_reduction <maximumf>, %29, %cst_14 [1] : vector<16x16xf32> to vector<16xf32>
    %31 = vector.shape_cast %30 : vector<16xf32> to vector<16x1xf32>
    %32 = vector.broadcast %31 : vector<16x1xf32> to vector<16x16xf32>
    %33 = arith.subf %29, %32 : vector<16x16xf32>
    %34 = math.exp %33 : vector<16x16xf32>
    %cst_15 = arith.constant dense<0.000000e+00> : vector<16xf32>
    %35 = vector.multi_reduction <add>, %34, %cst_15 [1] : vector<16x16xf32> to vector<16xf32>
    %36 = vector.shape_cast %35 : vector<16xf32> to vector<16x1xf32>
    %cst_16 = arith.constant dense<0.000000e+00> : vector<16x8xf32>
    %37 = tpu.matmul %34, %28, %cst_16 {dimension_numbers = #tpu.dot_dimension_numbers<[1], [0], [0], [1], [0, 0, 1, 1], [], []>} : vector<16x16xf32>, vector<16x8xf32>, vector<16x8xf32> -> vector<16x8xf32>
    %38 = tpu.reciprocal %36 {approx = true} : vector<16x1xf32> -> vector<16x1xf32>
    %39 = vector.broadcast %38 : vector<16x1xf32> to vector<16x8xf32>
    %40 = arith.mulf %37, %39 : vector<16x8xf32>
    %41 = vector.extract_strided_slice %25 {offsets = [0, 8], sizes = [16, 8], strides = [1, 1]} : vector<16x96xf32> to vector<16x8xf32>
    %42 = vector.extract_strided_slice %25 {offsets = [0, 40], sizes = [16, 8], strides = [1, 1]} : vector<16x96xf32> to vector<16x8xf32>
    %43 = vector.extract_strided_slice %25 {offsets = [0, 72], sizes = [16, 8], strides = [1, 1]} : vector<16x96xf32> to vector<16x8xf32>
    %cst_17 = arith.constant dense<0.000000e+00> : vector<16x16xf32>
    %44 = tpu.matmul %41, %42, %cst_17 {dimension_numbers = #tpu.dot_dimension_numbers<[1], [1], [0], [0], [0, 0, 1, 0], [], []>} : vector<16x8xf32>, vector<16x8xf32>, vector<16x16xf32> -> vector<16x16xf32>
    %cst_18 = arith.constant dense<0xFF800000> : vector<16xf32>
    %45 = vector.multi_reduction <maximumf>, %44, %cst_18 [1] : vector<16x16xf32> to vector<16xf32>
    %46 = vector.shape_cast %45 : vector<16xf32> to vector<16x1xf32>
    %47 = vector.broadcast %46 : vector<16x1xf32> to vector<16x16xf32>
    %48 = arith.subf %44, %47 : vector<16x16xf32>
    %49 = math.exp %48 : vector<16x16xf32>
    %cst_19 = arith.constant dense<0.000000e+00> : vector<16xf32>
    %50 = vector.multi_reduction <add>, %49, %cst_19 [1] : vector<16x16xf32> to vector<16xf32>
    %51 = vector.shape_cast %50 : vector<16xf32> to vector<16x1xf32>
    %cst_20 = arith.constant dense<0.000000e+00> : vector<16x8xf32>
    %52 = tpu.matmul %49, %43, %cst_20 {dimension_numbers = #tpu.dot_dimension_numbers<[1], [0], [0], [1], [0, 0, 1, 1], [], []>} : vector<16x16xf32>, vector<16x8xf32>, vector<16x8xf32> -> vector<16x8xf32>
    %53 = tpu.reciprocal %51 {approx = true} : vector<16x1xf32> -> vector<16x1xf32>
    %54 = vector.broadcast %53 : vector<16x1xf32> to vector<16x8xf32>
    %55 = arith.mulf %52, %54 : vector<16x8xf32>
    %56 = vector.extract_strided_slice %25 {offsets = [0, 16], sizes = [16, 8], strides = [1, 1]} : vector<16x96xf32> to vector<16x8xf32>
    %57 = vector.extract_strided_slice %25 {offsets = [0, 48], sizes = [16, 8], strides = [1, 1]} : vector<16x96xf32> to vector<16x8xf32>
    %58 = vector.extract_strided_slice %25 {offsets = [0, 80], sizes = [16, 8], strides = [1, 1]} : vector<16x96xf32> to vector<16x8xf32>
    %cst_21 = arith.constant dense<0.000000e+00> : vector<16x16xf32>
    %59 = tpu.matmul %56, %57, %cst_21 {dimension_numbers = #tpu.dot_dimension_numbers<[1], [1], [0], [0], [0, 0, 1, 0], [], []>} : vector<16x8xf32>, vector<16x8xf32>, vector<16x16xf32> -> vector<16x16xf32>
    %cst_22 = arith.constant dense<0xFF800000> : vector<16xf32>
    %60 = vector.multi_reduction <maximumf>, %59, %cst_22 [1] : vector<16x16xf32> to vector<16xf32>
    %61 = vector.shape_cast %60 : vector<16xf32> to vector<16x1xf32>
    %62 = vector.broadcast %61 : vector<16x1xf32> to vector<16x16xf32>
    %63 = arith.subf %59, %62 : vector<16x16xf32>
    %64 = math.exp %63 : vector<16x16xf32>
    %cst_23 = arith.constant dense<0.000000e+00> : vector<16xf32>
    %65 = vector.multi_reduction <add>, %64, %cst_23 [1] : vector<16x16xf32> to vector<16xf32>
    %66 = vector.shape_cast %65 : vector<16xf32> to vector<16x1xf32>
    %cst_24 = arith.constant dense<0.000000e+00> : vector<16x8xf32>
    %67 = tpu.matmul %64, %58, %cst_24 {dimension_numbers = #tpu.dot_dimension_numbers<[1], [0], [0], [1], [0, 0, 1, 1], [], []>} : vector<16x16xf32>, vector<16x8xf32>, vector<16x8xf32> -> vector<16x8xf32>
    %68 = tpu.reciprocal %66 {approx = true} : vector<16x1xf32> -> vector<16x1xf32>
    %69 = vector.broadcast %68 : vector<16x1xf32> to vector<16x8xf32>
    %70 = arith.mulf %67, %69 : vector<16x8xf32>
    %71 = vector.extract_strided_slice %25 {offsets = [0, 24], sizes = [16, 8], strides = [1, 1]} : vector<16x96xf32> to vector<16x8xf32>
    %72 = vector.extract_strided_slice %25 {offsets = [0, 56], sizes = [16, 8], strides = [1, 1]} : vector<16x96xf32> to vector<16x8xf32>
    %73 = vector.extract_strided_slice %25 {offsets = [0, 88], sizes = [16, 8], strides = [1, 1]} : vector<16x96xf32> to vector<16x8xf32>
    %cst_25 = arith.constant dense<0.000000e+00> : vector<16x16xf32>
    %74 = tpu.matmul %71, %72, %cst_25 {dimension_numbers = #tpu.dot_dimension_numbers<[1], [1], [0], [0], [0, 0, 1, 0], [], []>} : vector<16x8xf32>, vector<16x8xf32>, vector<16x16xf32> -> vector<16x16xf32>
    %cst_26 = arith.constant dense<0xFF800000> : vector<16xf32>
    %75 = vector.multi_reduction <maximumf>, %74, %cst_26 [1] : vector<16x16xf32> to vector<16xf32>
    %76 = vector.shape_cast %75 : vector<16xf32> to vector<16x1xf32>
    %77 = vector.broadcast %76 : vector<16x1xf32> to vector<16x16xf32>
    %78 = arith.subf %74, %77 : vector<16x16xf32>
    %79 = math.exp %78 : vector<16x16xf32>
    %cst_27 = arith.constant dense<0.000000e+00> : vector<16xf32>
    %80 = vector.multi_reduction <add>, %79, %cst_27 [1] : vector<16x16xf32> to vector<16xf32>
    %81 = vector.shape_cast %80 : vector<16xf32> to vector<16x1xf32>
    %cst_28 = arith.constant dense<0.000000e+00> : vector<16x8xf32>
    %82 = tpu.matmul %79, %73, %cst_28 {dimension_numbers = #tpu.dot_dimension_numbers<[1], [0], [0], [1], [0, 0, 1, 1], [], []>} : vector<16x16xf32>, vector<16x8xf32>, vector<16x8xf32> -> vector<16x8xf32>
    %83 = tpu.reciprocal %81 {approx = true} : vector<16x1xf32> -> vector<16x1xf32>
    %84 = vector.broadcast %83 : vector<16x1xf32> to vector<16x8xf32>
    %85 = arith.mulf %82, %84 : vector<16x8xf32>
    %86 = tpu.concatenate %40, %55, %70, %85 in 1 : vector<16x8xf32>, vector<16x8xf32>, vector<16x8xf32>, vector<16x8xf32> -> vector<16x32xf32>
    %c0_29 = arith.constant 0 : index
    %c0_30 = arith.constant 0 : index
    %87 = vector.load %arg5[%c0_29, %c0_30] : memref<32x32xf32, #tpu.memory_space<vmem>>, vector<32x32xf32>
    %cst_31 = arith.constant dense<0.000000e+00> : vector<16x32xf32>
    %88 = tpu.matmul %86, %87, %cst_31 {dimension_numbers = #tpu.dot_dimension_numbers<[1], [0], [0], [1], [0, 0, 1, 1], [], []>} : vector<16x32xf32>, vector<32x32xf32>, vector<16x32xf32> -> vector<16x32xf32>
    %89 = arith.addf %1, %88 : vector<16x32xf32>
    %c0_32 = arith.constant 0 : index
    %c0_33 = arith.constant 0 : index
    %90 = vector.load %arg6[%c0_32, %c0_33] : memref<1x32xf32, #tpu.memory_space<vmem>>, vector<1x32xf32>
    %91 = vector.broadcast %90 : vector<1x32xf32> to vector<16x32xf32>
    %92 = arith.addf %89, %91 : vector<16x32xf32>
    %c0_34 = arith.constant 0 : index
    %c0_35 = arith.constant 0 : index
    %93 = vector.load %arg7[%c0_34, %c0_35] : memref<1x32xf32, #tpu.memory_space<vmem>>, vector<1x32xf32>
    %c0_36 = arith.constant 0 : index
    %c0_37 = arith.constant 0 : index
    %94 = vector.load %arg8[%c0_36, %c0_37] : memref<1x32xf32, #tpu.memory_space<vmem>>, vector<1x32xf32>
    %cst_38 = arith.constant dense<0.000000e+00> : vector<16xf32>
    %95 = vector.multi_reduction <add>, %92, %cst_38 [1] : vector<16x32xf32> to vector<16xf32>
    %96 = vector.shape_cast %95 : vector<16xf32> to vector<16x1xf32>
    %cst_39 = arith.constant 3.200000e+01 : f32
    %97 = vector.broadcast %cst_39 : f32 to vector<16x1xf32>
    %98 = arith.divf %96, %97 : vector<16x1xf32>
    %99 = vector.broadcast %98 : vector<16x1xf32> to vector<16x32xf32>
    %100 = arith.subf %92, %99 : vector<16x32xf32>
    %101 = arith.mulf %100, %100 : vector<16x32xf32>
    %cst_40 = arith.constant dense<0.000000e+00> : vector<16xf32>
    %102 = vector.multi_reduction <add>, %101, %cst_40 [1] : vector<16x32xf32> to vector<16xf32>
    %103 = vector.shape_cast %102 : vector<16xf32> to vector<16x1xf32>
    %cst_41 = arith.constant 3.200000e+01 : f32
    %104 = vector.broadcast %cst_41 : f32 to vector<16x1xf32>
    %105 = arith.divf %103, %104 : vector<16x1xf32>
    %cst_42 = arith.constant 9.99999974E-6 : f32
    %106 = vector.broadcast %cst_42 : f32 to vector<16x1xf32>
    %107 = arith.addf %105, %106 : vector<16x1xf32>
    %108 = math.rsqrt %107 : vector<16x1xf32>
    %109 = vector.broadcast %108 : vector<16x1xf32> to vector<16x32xf32>
    %110 = arith.mulf %100, %109 : vector<16x32xf32>
    %111 = vector.broadcast %93 : vector<1x32xf32> to vector<16x32xf32>
    %112 = arith.mulf %110, %111 : vector<16x32xf32>
    %113 = vector.broadcast %94 : vector<1x32xf32> to vector<16x32xf32>
    %114 = arith.addf %112, %113 : vector<16x32xf32>
    %c0_43 = arith.constant 0 : index
    %c0_44 = arith.constant 0 : index
    %115 = vector.load %arg9[%c0_43, %c0_44] : memref<32x128xf32, #tpu.memory_space<vmem>>, vector<32x128xf32>
    %cst_45 = arith.constant dense<0.000000e+00> : vector<16x128xf32>
    %116 = tpu.matmul %114, %115, %cst_45 {dimension_numbers = #tpu.dot_dimension_numbers<[1], [0], [0], [1], [0, 0, 1, 1], [], []>} : vector<16x32xf32>, vector<32x128xf32>, vector<16x128xf32> -> vector<16x128xf32>
    %c0_46 = arith.constant 0 : index
    %c0_47 = arith.constant 0 : index
    %117 = vector.load %arg10[%c0_46, %c0_47] : memref<1x128xf32, #tpu.memory_space<vmem>>, vector<1x128xf32>
    %118 = vector.broadcast %117 : vector<1x128xf32> to vector<16x128xf32>
    %119 = arith.addf %116, %118 : vector<16x128xf32>
    %cst_48 = arith.constant 5.000000e-01 : f32
    %120 = vector.broadcast %cst_48 : f32 to vector<16x128xf32>
    %121 = arith.mulf %120, %119 : vector<16x128xf32>
    %122 = arith.mulf %119, %119 : vector<16x128xf32>
    %123 = arith.mulf %122, %119 : vector<16x128xf32>
    %cst_49 = arith.constant 4.471500e-02 : f32
    %124 = vector.broadcast %cst_49 : f32 to vector<16x128xf32>
    %125 = arith.mulf %124, %123 : vector<16x128xf32>
    %126 = arith.addf %119, %125 : vector<16x128xf32>
    %cst_50 = arith.constant 0.797884583 : f32
    %127 = vector.broadcast %cst_50 : f32 to vector<16x128xf32>
    %128 = arith.mulf %127, %126 : vector<16x128xf32>
    %129 = math.tanh %128 : vector<16x128xf32>
    %cst_51 = arith.constant 1.000000e+00 : f32
    %130 = vector.broadcast %cst_51 : f32 to vector<16x128xf32>
    %131 = arith.addf %130, %129 : vector<16x128xf32>
    %132 = arith.mulf %121, %131 : vector<16x128xf32>
    %c0_52 = arith.constant 0 : index
    %c0_53 = arith.constant 0 : index
    %133 = vector.load %arg11[%c0_52, %c0_53] : memref<128x32xf32, #tpu.memory_space<vmem>>, vector<128x32xf32>
    %cst_54 = arith.constant dense<0.000000e+00> : vector<16x32xf32>
    %134 = tpu.matmul %132, %133, %cst_54 {dimension_numbers = #tpu.dot_dimension_numbers<[1], [0], [0], [1], [0, 0, 1, 1], [], []>} : vector<16x128xf32>, vector<128x32xf32>, vector<16x32xf32> -> vector<16x32xf32>
    %c0_55 = arith.constant 0 : index
    %c0_56 = arith.constant 0 : index
    %135 = vector.load %arg12[%c0_55, %c0_56] : memref<1x32xf32, #tpu.memory_space<vmem>>, vector<1x32xf32>
    %136 = vector.broadcast %135 : vector<1x32xf32> to vector<16x32xf32>
    %137 = arith.addf %134, %136 : vector<16x32xf32>
    %138 = arith.addf %92, %137 : vector<16x32xf32>
    %c0_57 = arith.constant 0 : index
    %c0_58 = arith.constant 0 : index
    %c0_59 = arith.constant 0 : index
    %139 = vector.load %arg13[%c0_57, %c0_58, %c0_59] : memref<1x16x32xf32, #tpu.memory_space<vmem>>, vector<1x16x32xf32>
    %140 = vector.shape_cast %139 : vector<1x16x32xf32> to vector<16x32xf32>
    %141 = vector.shape_cast %138 : vector<16x32xf32> to vector<1x16x32xf32>
    tpu.vector_store %arg13[%c0_57, %c0_58, %c0_59], %141 {strides = array<i32>} : memref<1x16x32xf32, #tpu.memory_space<vmem>>, vector<1x16x32xf32>,
    return
  }
  func.func @transform_0(%arg0: i32) -> (i32, i32, i32) {
    %c0_i32 = arith.constant 0 : i32
    %c0_i32_0 = arith.constant 0 : i32
    %c0_i32_1 = arith.constant 0 : i32
    return %arg0, %c0_i32, %c0_i32_0 : i32, i32, i32
  }
  func.func @transform_1(%arg0: i32) -> (i32, i32) {
    %c0_i32 = arith.constant 0 : i32
    %c0_i32_0 = arith.constant 0 : i32
    %c0_i32_1 = arith.constant 0 : i32
    return %c0_i32, %c0_i32_0 : i32, i32
  }
  func.func @transform_2(%arg0: i32) -> (i32, i32) {
    %c0_i32 = arith.constant 0 : i32
    %c0_i32_0 = arith.constant 0 : i32
    %c0_i32_1 = arith.constant 0 : i32
    return %c0_i32, %c0_i32_0 : i32, i32
  }
  func.func @transform_3(%arg0: i32) -> (i32, i32) {
    %c0_i32 = arith.constant 0 : i32
    %c0_i32_0 = arith.constant 0 : i32
    %c0_i32_1 = arith.constant 0 : i32
    return %c0_i32, %c0_i32_0 : i32, i32
  }
  func.func @transform_4(%arg0: i32) -> (i32, i32) {
    %c0_i32 = arith.constant 0 : i32
    %c0_i32_0 = arith.constant 0 : i32
    %c0_i32_1 = arith.constant 0 : i32
    return %c0_i32, %c0_i32_0 : i32, i32
  }
  func.func @transform_5(%arg0: i32) -> (i32, i32) {
    %c0_i32 = arith.constant 0 : i32
    %c0_i32_0 = arith.constant 0 : i32
    %c0_i32_1 = arith.constant 0 : i32
    return %c0_i32, %c0_i32_0 : i32, i32
  }
  func.func @transform_6(%arg0: i32) -> (i32, i32) {
    %c0_i32 = arith.constant 0 : i32
    %c0_i32_0 = arith.constant 0 : i32
    %c0_i32_1 = arith.constant 0 : i32
    return %c0_i32, %c0_i32_0 : i32, i32
  }
  func.func @transform_7(%arg0: i32) -> (i32, i32) {
    %c0_i32 = arith.constant 0 : i32
    %c0_i32_0 = arith.constant 0 : i32
    %c0_i32_1 = arith.constant 0 : i32
    return %c0_i32, %c0_i32_0 : i32, i32
  }
  func.func @transform_8(%arg0: i32) -> (i32, i32) {
    %c0_i32 = arith.constant 0 : i32
    %c0_i32_0 = arith.constant 0 : i32
    %c0_i32_1 = arith.constant 0 : i32
    return %c0_i32, %c0_i32_0 : i32, i32
  }
  func.func @transform_9(%arg0: i32) -> (i32, i32) {
    %c0_i32 = arith.constant 0 : i32
    %c0_i32_0 = arith.constant 0 : i32
    %c0_i32_1 = arith.constant 0 : i32
    return %c0_i32, %c0_i32_0 : i32, i32
  }
  func.func @transform_10(%arg0: i32) -> (i32, i32) {
    %c0_i32 = arith.constant 0 : i32
    %c0_i32_0 = arith.constant 0 : i32
    %c0_i32_1 = arith.constant 0 : i32
    return %c0_i32, %c0_i32_0 : i32, i32
  }
  func.func @transform_11(%arg0: i32) -> (i32, i32) {
    %c0_i32 = arith.constant 0 : i32
    %c0_i32_0 = arith.constant 0 : i32
    %c0_i32_1 = arith.constant 0 : i32
    return %c0_i32, %c0_i32_0 : i32, i32
  }
  func.func @transform_12(%arg0: i32) -> (i32, i32, i32) {
    %c0_i32 = arith.constant 0 : i32
    %c0_i32_0 = arith.constant 0 : i32
    %c0_i32_1 = arith.constant 0 : i32
    return %arg0, %c0_i32, %c0_i32_0 : i32, i32, i32
  }
}

module attributes {stable_mosaic.version = 11 : i64} {
  func.func @_block_kernel(%arg0: i32, %arg1: memref<1x16x32xf32, #tpu.memory_space<vmem>>, %arg2: memref<1x32xf32, #tpu.memory_space<vmem>>, %arg3: memref<1x32xf32, #tpu.memory_space<vmem>>, %arg4: memref<32x96xf32, #tpu.memory_space<vmem>>, %arg5: memref<32x32xf32, #tpu.memory_space<vmem>>, %arg6: memref<1x32xf32, #tpu.memory_space<vmem>>, %arg7: memref<1x32xf32, #tpu.memory_space<vmem>>, %arg8: memref<1x32xf32, #tpu.memory_space<vmem>>, %arg9: memref<32x128xf32, #tpu.memory_space<vmem>>, %arg10: memref<1x128xf32, #tpu.memory_space<vmem>>, %arg11: memref<128x32xf32, #tpu.memory_space<vmem>>, %arg12: memref<1x32xf32, #tpu.memory_space<vmem>>, %arg13: memref<1x16x32xf32, #tpu.memory_space<vmem>>) attributes {dimension_semantics = [#tpu.dimension_semantics<parallel>], iteration_bounds = array<i64: 2>, scalar_prefetch = 0 : i64, scratch_operands = 0 : i64, tpu.core_type = #tpu.core_type<tc>, window_params = [{transform_indices = @transform_0, window_bounds = array<i64: 1, 16, 32>}, {pipeline_mode = #tpu.pipeline_mode<synchronous>, transform_indices = @transform_1, window_bounds = array<i64: 1, 32>}, {pipeline_mode = #tpu.pipeline_mode<synchronous>, transform_indices = @transform_2, window_bounds = array<i64: 1, 32>}, {pipeline_mode = #tpu.pipeline_mode<synchronous>, transform_indices = @transform_3, window_bounds = array<i64: 32, 96>}, {pipeline_mode = #tpu.pipeline_mode<synchronous>, transform_indices = @transform_4, window_bounds = array<i64: 32, 32>}, {pipeline_mode = #tpu.pipeline_mode<synchronous>, transform_indices = @transform_5, window_bounds = array<i64: 1, 32>}, {pipeline_mode = #tpu.pipeline_mode<synchronous>, transform_indices = @transform_6, window_bounds = array<i64: 1, 32>}, {pipeline_mode = #tpu.pipeline_mode<synchronous>, transform_indices = @transform_7, window_bounds = array<i64: 1, 32>}, {pipeline_mode = #tpu.pipeline_mode<synchronous>, transform_indices = @transform_8, window_bounds = array<i64: 32, 128>}, {pipeline_mode = #tpu.pipeline_mode<synchronous>, transform_indices = @transform_9, window_bounds = array<i64: 1, 128>}, {pipeline_mode = #tpu.pipeline_mode<synchronous>, transform_indices = @transform_10, window_bounds = array<i64: 128, 32>}, {pipeline_mode = #tpu.pipeline_mode<synchronous>, transform_indices = @transform_11, window_bounds = array<i64: 1, 32>}, {transform_indices = @transform_12, window_bounds = array<i64: 1, 16, 32>}]} {
    %c0 = arith.constant 0 : index
    %c0_0 = arith.constant 0 : index
    %c0_1 = arith.constant 0 : index
    %0 = vector.load %arg1[%c0, %c0_0, %c0_1] : memref<1x16x32xf32, #tpu.memory_space<vmem>>, vector<1x16x32xf32>
    %1 = vector.shape_cast %0 : vector<1x16x32xf32> to vector<16x32xf32>
    %c0_2 = arith.constant 0 : index
    %c0_3 = arith.constant 0 : index
    %2 = vector.load %arg2[%c0_2, %c0_3] : memref<1x32xf32, #tpu.memory_space<vmem>>, vector<1x32xf32>
    %c0_4 = arith.constant 0 : index
    %c0_5 = arith.constant 0 : index
    %3 = vector.load %arg3[%c0_4, %c0_5] : memref<1x32xf32, #tpu.memory_space<vmem>>, vector<1x32xf32>
    %cst = arith.constant dense<0.000000e+00> : vector<16xf32>
    %4 = vector.multi_reduction <add>, %1, %cst [1] : vector<16x32xf32> to vector<16xf32>
    %5 = vector.shape_cast %4 : vector<16xf32> to vector<16x1xf32>
    %cst_6 = arith.constant 3.200000e+01 : f32
    %6 = vector.broadcast %cst_6 : f32 to vector<16x1xf32>
    %7 = arith.divf %5, %6 : vector<16x1xf32>
    %8 = vector.broadcast %7 : vector<16x1xf32> to vector<16x32xf32>
    %9 = arith.subf %1, %8 : vector<16x32xf32>
    %10 = arith.mulf %9, %9 : vector<16x32xf32>
    %cst_7 = arith.constant dense<0.000000e+00> : vector<16xf32>
    %11 = vector.multi_reduction <add>, %10, %cst_7 [1] : vector<16x32xf32> to vector<16xf32>
    %12 = vector.shape_cast %11 : vector<16xf32> to vector<16x1xf32>
    %cst_8 = arith.constant 3.200000e+01 : f32
    %13 = vector.broadcast %cst_8 : f32 to vector<16x1xf32>
    %14 = arith.divf %12, %13 : vector<16x1xf32>
    %cst_9 = arith.constant 9.99999974E-6 : f32
    %15 = vector.broadcast %cst_9 : f32 to vector<16x1xf32>
    %16 = arith.addf %14, %15 : vector<16x1xf32>
    %17 = math.rsqrt %16 : vector<16x1xf32>
    %18 = vector.broadcast %17 : vector<16x1xf32> to vector<16x32xf32>
    %19 = arith.mulf %9, %18 : vector<16x32xf32>
    %20 = vector.broadcast %2 : vector<1x32xf32> to vector<16x32xf32>
    %21 = arith.mulf %19, %20 : vector<16x32xf32>
    %22 = vector.broadcast %3 : vector<1x32xf32> to vector<16x32xf32>
    %23 = arith.addf %21, %22 : vector<16x32xf32>
    %c0_10 = arith.constant 0 : index
    %c0_11 = arith.constant 0 : index
    %24 = vector.load %arg4[%c0_10, %c0_11] : memref<32x96xf32, #tpu.memory_space<vmem>>, vector<32x96xf32>
    %cst_12 = arith.constant dense<0.000000e+00> : vector<16x96xf32>
    %25 = tpu.matmul %23, %24, %cst_12 {dimension_numbers = #tpu.dot_dimension_numbers<[1], [0], [0], [1], [0, 0, 1, 1], [], []>} : vector<16x32xf32>, vector<32x96xf32>, vector<16x96xf32> -> vector<16x96xf32>
    %26 = vector.extract_strided_slice %25 {offsets = [0, 0], sizes = [16, 8], strides = [1, 1]} : vector<16x96xf32> to vector<16x8xf32>
    %27 = vector.extract_strided_slice %25 {offsets = [0, 32], sizes = [16, 8], strides = [1, 1]} : vector<16x96xf32> to vector<16x8xf32>
    %28 = vector.extract_strided_slice %25 {offsets = [0, 64], sizes = [16, 8], strides = [1, 1]} : vector<16x96xf32> to vector<16x8xf32>
    %cst_13 = arith.constant dense<0.000000e+00> : vector<16x16xf32>
    %29 = tpu.matmul %26, %27, %cst_13 {dimension_numbers = #tpu.dot_dimension_numbers<[1], [1], [0], [0], [0, 0, 1, 0], [], []>} : vector<16x8xf32>, vector<16x8xf32>, vector<16x16xf32> -> vector<16x16xf32>
    %cst_14 = arith.constant dense<0xFF800000> : vector<16xf32>
    %30 = vector.multi_reduction <maximumf>, %29, %cst_14 [1] : vector<16x16xf32> to vector<16xf32>
    %31 = vector.shape_cast %30 : vector<16xf32> to vector<16x1xf32>
    %32 = vector.broadcast %31 : vector<16x1xf32> to vector<16x16xf32>
    %33 = arith.subf %29, %32 : vector<16x16xf32>
    %34 = math.exp %33 : vector<16x16xf32>
    %cst_15 = arith.constant dense<0.000000e+00> : vector<16xf32>
    %35 = vector.multi_reduction <add>, %34, %cst_15 [1] : vector<16x16xf32> to vector<16xf32>
    %36 = vector.shape_cast %35 : vector<16xf32> to vector<16x1xf32>
    %cst_16 = arith.constant dense<0.000000e+00> : vector<16x8xf32>
    %37 = tpu.matmul %34, %28, %cst_16 {dimension_numbers = #tpu.dot_dimension_numbers<[1], [0], [0], [1], [0, 0, 1, 1], [], []>} : vector<16x16xf32>, vector<16x8xf32>, vector<16x8xf32> -> vector<16x8xf32>
    %38 = tpu.reciprocal %36 {approx = true} : vector<16x1xf32> -> vector<16x1xf32>
    %39 = vector.broadcast %38 : vector<16x1xf32> to vector<16x8xf32>
    %40 = arith.mulf %37, %39 : vector<16x8xf32>
    %41 = vector.extract_strided_slice %25 {offsets = [0, 8], sizes = [16, 8], strides = [1, 1]} : vector<16x96xf32> to vector<16x8xf32>
    %42 = vector.extract_strided_slice %25 {offsets = [0, 40], sizes = [16, 8], strides = [1, 1]} : vector<16x96xf32> to vector<16x8xf32>
    %43 = vector.extract_strided_slice %25 {offsets = [0, 72], sizes = [16, 8], strides = [1, 1]} : vector<16x96xf32> to vector<16x8xf32>
    %cst_17 = arith.constant dense<0.000000e+00> : vector<16x16xf32>
    %44 = tpu.matmul %41, %42, %cst_17 {dimension_numbers = #tpu.dot_dimension_numbers<[1], [1], [0], [0], [0, 0, 1, 0], [], []>} : vector<16x8xf32>, vector<16x8xf32>, vector<16x16xf32> -> vector<16x16xf32>
    %cst_18 = arith.constant dense<0xFF800000> : vector<16xf32>
    %45 = vector.multi_reduction <maximumf>, %44, %cst_18 [1] : vector<16x16xf32> to vector<16xf32>
    %46 = vector.shape_cast %45 : vector<16xf32> to vector<16x1xf32>
    %47 = vector.broadcast %46 : vector<16x1xf32> to vector<16x16xf32>
    %48 = arith.subf %44, %47 : vector<16x16xf32>
    %49 = math.exp %48 : vector<16x16xf32>
    %cst_19 = arith.constant dense<0.000000e+00> : vector<16xf32>
    %50 = vector.multi_reduction <add>, %49, %cst_19 [1] : vector<16x16xf32> to vector<16xf32>
    %51 = vector.shape_cast %50 : vector<16xf32> to vector<16x1xf32>
    %cst_20 = arith.constant dense<0.000000e+00> : vector<16x8xf32>
    %52 = tpu.matmul %49, %43, %cst_20 {dimension_numbers = #tpu.dot_dimension_numbers<[1], [0], [0], [1], [0, 0, 1, 1], [], []>} : vector<16x16xf32>, vector<16x8xf32>, vector<16x8xf32> -> vector<16x8xf32>
    %53 = tpu.reciprocal %51 {approx = true} : vector<16x1xf32> -> vector<16x1xf32>
    %54 = vector.broadcast %53 : vector<16x1xf32> to vector<16x8xf32>
    %55 = arith.mulf %52, %54 : vector<16x8xf32>
    %56 = vector.extract_strided_slice %25 {offsets = [0, 16], sizes = [16, 8], strides = [1, 1]} : vector<16x96xf32> to vector<16x8xf32>
    %57 = vector.extract_strided_slice %25 {offsets = [0, 48], sizes = [16, 8], strides = [1, 1]} : vector<16x96xf32> to vector<16x8xf32>
    %58 = vector.extract_strided_slice %25 {offsets = [0, 80], sizes = [16, 8], strides = [1, 1]} : vector<16x96xf32> to vector<16x8xf32>
    %cst_21 = arith.constant dense<0.000000e+00> : vector<16x16xf32>
    %59 = tpu.matmul %56, %57, %cst_21 {dimension_numbers = #tpu.dot_dimension_numbers<[1], [1], [0], [0], [0, 0, 1, 0], [], []>} : vector<16x8xf32>, vector<16x8xf32>, vector<16x16xf32> -> vector<16x16xf32>
    %cst_22 = arith.constant dense<0xFF800000> : vector<16xf32>
    %60 = vector.multi_reduction <maximumf>, %59, %cst_22 [1] : vector<16x16xf32> to vector<16xf32>
    %61 = vector.shape_cast %60 : vector<16xf32> to vector<16x1xf32>
    %62 = vector.broadcast %61 : vector<16x1xf32> to vector<16x16xf32>
    %63 = arith.subf %59, %62 : vector<16x16xf32>
    %64 = math.exp %63 : vector<16x16xf32>
    %cst_23 = arith.constant dense<0.000000e+00> : vector<16xf32>
    %65 = vector.multi_reduction <add>, %64, %cst_23 [1] : vector<16x16xf32> to vector<16xf32>
    %66 = vector.shape_cast %65 : vector<16xf32> to vector<16x1xf32>
    %cst_24 = arith.constant dense<0.000000e+00> : vector<16x8xf32>
    %67 = tpu.matmul %64, %58, %cst_24 {dimension_numbers = #tpu.dot_dimension_numbers<[1], [0], [0], [1], [0, 0, 1, 1], [], []>} : vector<16x16xf32>, vector<16x8xf32>, vector<16x8xf32> -> vector<16x8xf32>
    %68 = tpu.reciprocal %66 {approx = true} : vector<16x1xf32> -> vector<16x1xf32>
    %69 = vector.broadcast %68 : vector<16x1xf32> to vector<16x8xf32>
    %70 = arith.mulf %67, %69 : vector<16x8xf32>
    %71 = vector.extract_strided_slice %25 {offsets = [0, 24], sizes = [16, 8], strides = [1, 1]} : vector<16x96xf32> to vector<16x8xf32>
    %72 = vector.extract_strided_slice %25 {offsets = [0, 56], sizes = [16, 8], strides = [1, 1]} : vector<16x96xf32> to vector<16x8xf32>
    %73 = vector.extract_strided_slice %25 {offsets = [0, 88], sizes = [16, 8], strides = [1, 1]} : vector<16x96xf32> to vector<16x8xf32>
    %cst_25 = arith.constant dense<0.000000e+00> : vector<16x16xf32>
    %74 = tpu.matmul %71, %72, %cst_25 {dimension_numbers = #tpu.dot_dimension_numbers<[1], [1], [0], [0], [0, 0, 1, 0], [], []>} : vector<16x8xf32>, vector<16x8xf32>, vector<16x16xf32> -> vector<16x16xf32>
    %cst_26 = arith.constant dense<0xFF800000> : vector<16xf32>
    %75 = vector.multi_reduction <maximumf>, %74, %cst_26 [1] : vector<16x16xf32> to vector<16xf32>
    %76 = vector.shape_cast %75 : vector<16xf32> to vector<16x1xf32>
    %77 = vector.broadcast %76 : vector<16x1xf32> to vector<16x16xf32>
    %78 = arith.subf %74, %77 : vector<16x16xf32>
    %79 = math.exp %78 : vector<16x16xf32>
    %cst_27 = arith.constant dense<0.000000e+00> : vector<16xf32>
    %80 = vector.multi_reduction <add>, %79, %cst_27 [1] : vector<16x16xf32> to vector<16xf32>
    %81 = vector.shape_cast %80 : vector<16xf32> to vector<16x1xf32>
    %cst_28 = arith.constant dense<0.000000e+00> : vector<16x8xf32>
    %82 = tpu.matmul %79, %73, %cst_28 {dimension_numbers = #tpu.dot_dimension_numbers<[1], [0], [0], [1], [0, 0, 1, 1], [], []>} : vector<16x16xf32>, vector<16x8xf32>, vector<16x8xf32> -> vector<16x8xf32>
    %83 = tpu.reciprocal %81 {approx = true} : vector<16x1xf32> -> vector<16x1xf32>
    %84 = vector.broadcast %83 : vector<16x1xf32> to vector<16x8xf32>
    %85 = arith.mulf %82, %84 : vector<16x8xf32>
    %86 = tpu.concatenate %40, %55, %70, %85 in 1 : vector<16x8xf32>, vector<16x8xf32>, vector<16x8xf32>, vector<16x8xf32> -> vector<16x32xf32>
    %c0_29 = arith.constant 0 : index
    %c0_30 = arith.constant 0 : index
    %87 = vector.load %arg5[%c0_29, %c0_30] : memref<32x32xf32, #tpu.memory_space<vmem>>, vector<32x32xf32>
    %cst_31 = arith.constant dense<0.000000e+00> : vector<16x32xf32>
    %88 = tpu.matmul %86, %87, %cst_31 {dimension_numbers = #tpu.dot_dimension_numbers<[1], [0], [0], [1], [0, 0, 1, 1], [], []>} : vector<16x32xf32>, vector<32x32xf32>, vector<16x32xf32> -> vector<16x32xf32>
    %89 = arith.addf %1, %88 : vector<16x32xf32>
    %c0_32 = arith.constant 0 : index
    %c0_33 = arith.constant 0 : index
    %90 = vector.load %arg6[%c0_32, %c0_33] : memref<1x32xf32, #tpu.memory_space<vmem>>, vector<1x32xf32>
    %91 = vector.broadcast %90 : vector<1x32xf32> to vector<16x32xf32>
    %92 = arith.addf %89, %91 : vector<16x32xf32>
    %c0_34 = arith.constant 0 : index
    %c0_35 = arith.constant 0 : index
    %93 = vector.load %arg7[%c0_34, %c0_35] : memref<1x32xf32, #tpu.memory_space<vmem>>, vector<1x32xf32>
    %c0_36 = arith.constant 0 : index
    %c0_37 = arith.constant 0 : index
    %94 = vector.load %arg8[%c0_36, %c0_37] : memref<1x32xf32, #tpu.memory_space<vmem>>, vector<1x32xf32>
    %cst_38 = arith.constant dense<0.000000e+00> : vector<16xf32>
    %95 = vector.multi_reduction <add>, %92, %cst_38 [1] : vector<16x32xf32> to vector<16xf32>
    %96 = vector.shape_cast %95 : vector<16xf32> to vector<16x1xf32>
    %cst_39 = arith.constant 3.200000e+01 : f32
    %97 = vector.broadcast %cst_39 : f32 to vector<16x1xf32>
    %98 = arith.divf %96, %97 : vector<16x1xf32>
    %99 = vector.broadcast %98 : vector<16x1xf32> to vector<16x32xf32>
    %100 = arith.subf %92, %99 : vector<16x32xf32>
    %101 = arith.mulf %100, %100 : vector<16x32xf32>
    %cst_40 = arith.constant dense<0.000000e+00> : vector<16xf32>
    %102 = vector.multi_reduction <add>, %101, %cst_40 [1] : vector<16x32xf32> to vector<16xf32>
    %103 = vector.shape_cast %102 : vector<16xf32> to vector<16x1xf32>
    %cst_41 = arith.constant 3.200000e+01 : f32
    %104 = vector.broadcast %cst_41 : f32 to vector<16x1xf32>
    %105 = arith.divf %103, %104 : vector<16x1xf32>
    %cst_42 = arith.constant 9.99999974E-6 : f32
    %106 = vector.broadcast %cst_42 : f32 to vector<16x1xf32>
    %107 = arith.addf %105, %106 : vector<16x1xf32>
    %108 = math.rsqrt %107 : vector<16x1xf32>
    %109 = vector.broadcast %108 : vector<16x1xf32> to vector<16x32xf32>
    %110 = arith.mulf %100, %109 : vector<16x32xf32>
    %111 = vector.broadcast %93 : vector<1x32xf32> to vector<16x32xf32>
    %112 = arith.mulf %110, %111 : vector<16x32xf32>
    %113 = vector.broadcast %94 : vector<1x32xf32> to vector<16x32xf32>
    %114 = arith.addf %112, %113 : vector<16x32xf32>
    %c0_43 = arith.constant 0 : index
    %c0_44 = arith.constant 0 : index
    %115 = vector.load %arg9[%c0_43, %c0_44] : memref<32x128xf32, #tpu.memory_space<vmem>>, vector<32x128xf32>
    %cst_45 = arith.constant dense<0.000000e+00> : vector<16x128xf32>
    %116 = tpu.matmul %114, %115, %cst_45 {dimension_numbers = #tpu.dot_dimension_numbers<[1], [0], [0], [1], [0, 0, 1, 1], [], []>} : vector<16x32xf32>, vector<32x128xf32>, vector<16x128xf32> -> vector<16x128xf32>
    %c0_46 = arith.constant 0 : index
    %c0_47 = arith.constant 0 : index
    %117 = vector.load %arg10[%c0_46, %c0_47] : memref<1x128xf32, #tpu.memory_space<vmem>>, vector<1x128xf32>
    %118 = vector.broadcast %117 : vector<1x128xf32> to vector<16x128xf32>
    %119 = arith.addf %116, %118 : vector<16x128xf32>
    %cst_48 = arith.constant 5.000000e-01 : f32
    %120 = vector.broadcast %cst_48 : f32 to vector<16x128xf32>
    %121 = arith.mulf %120, %119 : vector<16x128xf32>
    %122 = arith.mulf %119, %119 : vector<16x128xf32>
    %123 = arith.mulf %122, %119 : vector<16x128xf32>
    %cst_49 = arith.constant 4.471500e-02 : f32
    %124 = vector.broadcast %cst_49 : f32 to vector<16x128xf32>
    %125 = arith.mulf %124, %123 : vector<16x128xf32>
    %126 = arith.addf %119, %125 : vector<16x128xf32>
    %cst_50 = arith.constant 0.797884583 : f32
    %127 = vector.broadcast %cst_50 : f32 to vector<16x128xf32>
    %128 = arith.mulf %127, %126 : vector<16x128xf32>
    %129 = math.tanh %128 : vector<16x128xf32>
    %cst_51 = arith.constant 1.000000e+00 : f32
    %130 = vector.broadcast %cst_51 : f32 to vector<16x128xf32>
    %131 = arith.addf %130, %129 : vector<16x128xf32>
    %132 = arith.mulf %121, %131 : vector<16x128xf32>
    %c0_52 = arith.constant 0 : index
    %c0_53 = arith.constant 0 : index
    %133 = vector.load %arg11[%c0_52, %c0_53] : memref<128x32xf32, #tpu.memory_space<vmem>>, vector<128x32xf32>
    %cst_54 = arith.constant dense<0.000000e+00> : vector<16x32xf32>
    %134 = tpu.matmul %132, %133, %cst_54 {dimension_numbers = #tpu.dot_dimension_numbers<[1], [0], [0], [1], [0, 0, 1, 1], [], []>} : vector<16x128xf32>, vector<128x32xf32>, vector<16x32xf32> -> vector<16x32xf32>
    %c0_55 = arith.constant 0 : index
    %c0_56 = arith.constant 0 : index
    %135 = vector.load %arg12[%c0_55, %c0_56] : memref<1x32xf32, #tpu.memory_space<vmem>>, vector<1x32xf32>
    %136 = vector.broadcast %135 : vector<1x32xf32> to vector<16x32xf32>
    %137 = arith.addf %134, %136 : vector<16x32xf32>
    %138 = arith.addf %92, %137 : vector<16x32xf32>
    %c0_57 = arith.constant 0 : index
    %c0_58 = arith.constant 0 : index
    %c0_59 = arith.constant 0 : index
    %139 = vector.load %arg13[%c0_57, %c0_58, %c0_59] : memref<1x16x32xf32, #tpu.memory_space<vmem>>, vector<1x16x32xf32>
    %140 = vector.shape_cast %139 : vector<1x16x32xf32> to vector<16x32xf32>
    %141 = vector.shape_cast %138 : vector<16x32xf32> to vector<1x16x32xf32>
    tpu.vector_store %arg13[%c0_57, %c0_58, %c0_59], %141 {strides = array<i32>} : memref<1x16x32xf32, #tpu.memory_space<vmem>>, vector<1x16x32xf32>,
    return
  }
  func.func @transform_0(%arg0: i32) -> (i32, i32, i32) {
    %c0_i32 = arith.constant 0 : i32
    %c0_i32_0 = arith.constant 0 : i32
    %c0_i32_1 = arith.constant 0 : i32
    return %arg0, %c0_i32, %c0_i32_0 : i32, i32, i32
  }
  func.func @transform_1(%arg0: i32) -> (i32, i32) {
    %c0_i32 = arith.constant 0 : i32
    %c0_i32_0 = arith.constant 0 : i32
    %c0_i32_1 = arith.constant 0 : i32
    return %c0_i32, %c0_i32_0 : i32, i32
  }
  func.func @transform_2(%arg0: i32) -> (i32, i32) {
    %c0_i32 = arith.constant 0 : i32
    %c0_i32_0 = arith.constant 0 : i32
    %c0_i32_1 = arith.constant 0 : i32
    return %c0_i32, %c0_i32_0 : i32, i32
  }
  func.func @transform_3(%arg0: i32) -> (i32, i32) {
    %c0_i32 = arith.constant 0 : i32
    %c0_i32_0 = arith.constant 0 : i32
    %c0_i32_1 = arith.constant 0 : i32
    return %c0_i32, %c0_i32_0 : i32, i32
  }
  func.func @transform_4(%arg0: i32) -> (i32, i32) {
    %c0_i32 = arith.constant 0 : i32
    %c0_i32_0 = arith.constant 0 : i32
    %c0_i32_1 = arith.constant 0 : i32
    return %c0_i32, %c0_i32_0 : i32, i32
  }
  func.func @transform_5(%arg0: i32) -> (i32, i32) {
    %c0_i32 = arith.constant 0 : i32
    %c0_i32_0 = arith.constant 0 : i32
    %c0_i32_1 = arith.constant 0 : i32
    return %c0_i32, %c0_i32_0 : i32, i32
  }
  func.func @transform_6(%arg0: i32) -> (i32, i32) {
    %c0_i32 = arith.constant 0 : i32
    %c0_i32_0 = arith.constant 0 : i32
    %c0_i32_1 = arith.constant 0 : i32
    return %c0_i32, %c0_i32_0 : i32, i32
  }
  func.func @transform_7(%arg0: i32) -> (i32, i32) {
    %c0_i32 = arith.constant 0 : i32
    %c0_i32_0 = arith.constant 0 : i32
    %c0_i32_1 = arith.constant 0 : i32
    return %c0_i32, %c0_i32_0 : i32, i32
  }
  func.func @transform_8(%arg0: i32) -> (i32, i32) {
    %c0_i32 = arith.constant 0 : i32
    %c0_i32_0 = arith.constant 0 : i32
    %c0_i32_1 = arith.constant 0 : i32
    return %c0_i32, %c0_i32_0 : i32, i32
  }
  func.func @transform_9(%arg0: i32) -> (i32, i32) {
    %c0_i32 = arith.constant 0 : i32
    %c0_i32_0 = arith.constant 0 : i32
    %c0_i32_1 = arith.constant 0 : i32
    return %c0_i32, %c0_i32_0 : i32, i32
  }
  func.func @transform_10(%arg0: i32) -> (i32, i32) {
    %c0_i32 = arith.constant 0 : i32
    %c0_i32_0 = arith.constant 0 : i32
    %c0_i32_1 = arith.constant 0 : i32
    return %c0_i32, %c0_i32_0 : i32, i32
  }
  func.func @transform_11(%arg0: i32) -> (i32, i32) {
    %c0_i32 = arith.constant 0 : i32
    %c0_i32_0 = arith.constant 0 : i32
    %c0_i32_1 = arith.constant 0 : i32
    return %c0_i32, %c0_i32_0 : i32, i32
  }
  func.func @transform_12(%arg0: i32) -> (i32, i32, i32) {
    %c0_i32 = arith.constant 0 : i32
    %c0_i32_0 = arith.constant 0 : i32
    %c0_i32_1 = arith.constant 0 : i32
    return %arg0, %c0_i32, %c0_i32_0 : i32, i32, i32
  }
}

</mosaic_0001>

<llo_original>
// kernel: tpu_custom_call.1
$region0: #{tpu_custom_call.1}
  #allocation0 [shape = 'u32[]', space=smem, size = 0x4, offset = 0x4, fixed_abs, tag = 'smem constant byte address 0x4 - core index']
  #allocation1 [shape = 'u32[144,128]{1,0:T(1,128)}', space=vmem, size = 0x12000, scoped, tag = 'internal scratch']
  %s0 = inlined_call_operand.vmem [shape: f32[2,16,32], index: 0, kind: input, shape index: {}]
  %s1 = inlined_call_operand.vmem [shape: f32[1,32], index: 1, kind: input, shape index: {}]
  %s2 = inlined_call_operand.vmem [shape: f32[1,32], index: 2, kind: input, shape index: {}]
  %s3 = inlined_call_operand.vmem [shape: f32[32,96], index: 3, kind: input, shape index: {}]
  %s4 = inlined_call_operand.vmem [shape: f32[32,32], index: 4, kind: input, shape index: {}]
  %s5 = inlined_call_operand.vmem [shape: f32[1,32], index: 5, kind: input, shape index: {}]
  %s6 = inlined_call_operand.vmem [shape: f32[1,32], index: 6, kind: input, shape index: {}]
  %s7 = inlined_call_operand.vmem [shape: f32[1,32], index: 7, kind: input, shape index: {}]
  %s8 = inlined_call_operand.vmem [shape: f32[32,128], index: 8, kind: input, shape index: {}]
  %s9 = inlined_call_operand.vmem [shape: f32[1,128], index: 9, kind: input, shape index: {}]
  %s10 = inlined_call_operand.vmem [shape: f32[128,32], index: 10, kind: input, shape index: {}]
  %s11 = inlined_call_operand.vmem [shape: f32[1,32], index: 11, kind: input, shape index: {}]
  %s12 = inlined_call_operand.hbm [shape: f32[2,16,32], index: 12, kind: output, shape index: {}]
  %s13 = sld [smem:[#allocation0]]
  $region81: #{tpu_custom_call.1} parent=0
    _
  %s15 = ssub.s32 1, %s13
  %s16 = scalar_select 0, %s15, %s13
  $region1: #{tpu_custom_call.1} parent=0
    #allocation2 [shape = 'u8[16384]{0}', space=vmem, size = 0x4000, scoped, tag = 'output window, operand 0']
    #allocation3 [shape = 's32[2]{0}', space=sflag, size = 0x8, scoped, tag = 'scoped memory for tpu_custom_call.1']
    %17 = vsyncpa [#allocation3], 0
    %s18 = scalar_lea.sflag [#allocation3], 1
    %19 = vsyncpa %s18, 0
    loop: start=0, step=1, limit=4
    $region2: #{tpu_custom_call.1} parent=1 // loop_pre_header
      _
    $region3: #{tpu_custom_call.1} parent=1 // loop_header
      %s21 = sphi 0, %s25
      %p22 = scmp.ge.s32.totalorder %s21, 4
      %s31 = sphi 0, %s33
      %s34 = sphi 0, %s31
      %s35 = sphi 0, %s34
      %s51 = sphi 0, %s35
      %s55 = sphi 0, %s55
      %s57 = sphi 0, %s55
      %s58 = sphi 0, %s57
      %s72 = sphi 0, %s58
      %s76 = sphi 0, %s76
      %s78 = sphi 0, %s76
      %s79 = sphi 0, %s78
      %s93 = sphi 0, %s79
      %s97 = sphi 0, %s97
      %s99 = sphi 0, %s97
      %s100 = sphi 0, %s99
      %s114 = sphi 0, %s100
      %s118 = sphi 0, %s118
      %s120 = sphi 0, %s118
      %s121 = sphi 0, %s120
      %s135 = sphi 0, %s121
      %s139 = sphi 0, %s139
      %s141 = sphi 0, %s139
      %s142 = sphi 0, %s141
      %s156 = sphi 0, %s142
      %s160 = sphi 0, %s160
      %s162 = sphi 0, %s160
      %s163 = sphi 0, %s162
      %s177 = sphi 0, %s163
      %s181 = sphi 0, %s181
      %s183 = sphi 0, %s181
      %s184 = sphi 0, %s183
      %s198 = sphi 0, %s184
      %s202 = sphi 0, %s202
      %s204 = sphi 0, %s202
      %s205 = sphi 0, %s204
      %s219 = sphi 0, %s205
      %s223 = sphi 0, %s223
      %s225 = sphi 0, %s223
      %s226 = sphi 0, %s225
      %s240 = sphi 0, %s226
      %s244 = sphi 0, %s244
      %s246 = sphi 0, %s244
      %s247 = sphi 0, %s246
      %s261 = sphi 0, %s247
      %s265 = sphi 0, %s265
      %s267 = sphi 0, %s265
      %s268 = sphi 0, %s267
      %s282 = sphi 0, %s268
      %s288 = sphi 0, %s290
      %s291 = sphi 0, %s288
      %s292 = sphi 0, %s291
      %s308 = sphi 0, %s292
    $region4: #{tpu_custom_call.1} parent=1 // loop_header_branch
      %24 = sbr.rel (%p22) target = $region8
    $region5: #{tpu_custom_call.1} parent=1 // loop_body
      %s26 = ssub.s32 %s21, 1
      %s27 = ssub.s32 %s21, 2
      %s28 = sadd.s32 %s21, 1
      %s29 = ssub.s32 %s21, %s28
      %p30 = scmp.eq.s32.totalorder %s29, 0
      %s32 = sadd.s32 %s31, 1
      %s33 = scalar_select %p30, %s31, %s32
      %p36 = pneg %p30
      %p37 = scmp.eq.s32.totalorder %s21, 1
      %p38 = por %p36, %p37
      %p39 = scmp.ne.s32.totalorder %s31, %s34
      %p40 = scmp.eq.s32.totalorder %s21, 0
      %p41 = por %p39, %p40
      %p42 = scmp.ne.s32.totalorder %s31, %s34
      %p43 = scmp.eq.s32.totalorder %s26, 1
      %p44 = por %p42, %p43
      %p45 = scmp.ne.s32.totalorder %s34, %s35
      %p46 = scmp.eq.s32.totalorder %s26, 0
      %p47 = por %p45, %p46
      %p48 = scmp.ne.s32.totalorder %s34, %s35
      %p49 = scmp.eq.s32.totalorder %s27, 1
      %p50 = por %p48, %p49
      %p52 = scmp.ne.s32.totalorder %s35, %s51
      %p53 = scmp.eq.s32.totalorder %s27, 0
      %p54 = por %p52, %p53
      %s56 = sadd.s32 %s55, 1
      %p59 = scmp.eq.s32.totalorder %s21, 1
      %p60 = scmp.ne.s32.totalorder %s55, %s57
      %p61 = scmp.eq.s32.totalorder %s21, 0
      %p62 = por %p60, %p61
      %p63 = scmp.ne.s32.totalorder %s55, %s57
      %p64 = scmp.eq.s32.totalorder %s26, 1
      %p65 = por %p63, %p64
      %p66 = scmp.ne.s32.totalorder %s57, %s58
      %p67 = scmp.eq.s32.totalorder %s26, 0
      %p68 = por %p66, %p67
      %p69 = scmp.ne.s32.totalorder %s57, %s58
      %p70 = scmp.eq.s32.totalorder %s27, 1
      %p71 = por %p69, %p70
      %p73 = scmp.ne.s32.totalorder %s58, %s72
      %p74 = scmp.eq.s32.totalorder %s27, 0
      %p75 = por %p73, %p74
      %s77 = sadd.s32 %s76, 1
      %p80 = scmp.eq.s32.totalorder %s21, 1
      %p81 = scmp.ne.s32.totalorder %s76, %s78
      %p82 = scmp.eq.s32.totalorder %s21, 0
      %p83 = por %p81, %p82
      %p84 = scmp.ne.s32.totalorder %s76, %s78
      %p85 = scmp.eq.s32.totalorder %s26, 1
      %p86 = por %p84, %p85
      %p87 = scmp.ne.s32.totalorder %s78, %s79
      %p88 = scmp.eq.s32.totalorder %s26, 0
      %p89 = por %p87, %p88
      %p90 = scmp.ne.s32.totalorder %s78, %s79
      %p91 = scmp.eq.s32.totalorder %s27, 1
      %p92 = por %p90, %p91
      %p94 = scmp.ne.s32.totalorder %s79, %s93
      %p95 = scmp.eq.s32.totalorder %s27, 0
      %p96 = por %p94, %p95
      %s98 = sadd.s32 %s97, 1
      %p101 = scmp.eq.s32.totalorder %s21, 1
      %p102 = scmp.ne.s32.totalorder %s97, %s99
      %p103 = scmp.eq.s32.totalorder %s21, 0
      %p104 = por %p102, %p103
      %p105 = scmp.ne.s32.totalorder %s97, %s99
      %p106 = scmp.eq.s32.totalorder %s26, 1
      %p107 = por %p105, %p106
      %p108 = scmp.ne.s32.totalorder %s99, %s100
      %p109 = scmp.eq.s32.totalorder %s26, 0
      %p110 = por %p108, %p109
      %p111 = scmp.ne.s32.totalorder %s99, %s100
      %p112 = scmp.eq.s32.totalorder %s27, 1
      %p113 = por %p111, %p112
      %p115 = scmp.ne.s32.totalorder %s100, %s114
      %p116 = scmp.eq.s32.totalorder %s27, 0
      %p117 = por %p115, %p116
      %s119 = sadd.s32 %s118, 1
      %p122 = scmp.eq.s32.totalorder %s21, 1
      %p123 = scmp.ne.s32.totalorder %s118, %s120
      %p124 = scmp.eq.s32.totalorder %s21, 0
      %p125 = por %p123, %p124
      %p126 = scmp.ne.s32.totalorder %s118, %s120
      %p127 = scmp.eq.s32.totalorder %s26, 1
      %p128 = por %p126, %p127
      %p129 = scmp.ne.s32.totalorder %s120, %s121
      %p130 = scmp.eq.s32.totalorder %s26, 0
      %p131 = por %p129, %p130
      %p132 = scmp.ne.s32.totalorder %s120, %s121
      %p133 = scmp.eq.s32.totalorder %s27, 1
      %p134 = por %p132, %p133
      %p136 = scmp.ne.s32.totalorder %s121, %s135
      %p137 = scmp.eq.s32.totalorder %s27, 0
      %p138 = por %p136, %p137
      %s140 = sadd.s32 %s139, 1
      %p143 = scmp.eq.s32.totalorder %s21, 1
      %p144 = scmp.ne.s32.totalorder %s139, %s141
      %p145 = scmp.eq.s32.totalorder %s21, 0
      %p146 = por %p144, %p145
      %p147 = scmp.ne.s32.totalorder %s139, %s141
      %p148 = scmp.eq.s32.totalorder %s26, 1
      %p149 = por %p147, %p148
      %p150 = scmp.ne.s32.totalorder %s141, %s142
      %p151 = scmp.eq.s32.totalorder %s26, 0
      %p152 = por %p150, %p151
      %p153 = scmp.ne.s32.totalorder %s141, %s142
      %p154 = scmp.eq.s32.totalorder %s27, 1
      %p155 = por %p153, %p154
      %p157 = scmp.ne.s32.totalorder %s142, %s156
      %p158 = scmp.eq.s32.totalorder %s27, 0
      %p159 = por %p157, %p158
      %s161 = sadd.s32 %s160, 1
      %p164 = scmp.eq.s32.totalorder %s21, 1
      %p165 = scmp.ne.s32.totalorder %s160, %s162
      %p166 = scmp.eq.s32.totalorder %s21, 0
      %p167 = por %p165, %p166
      %p168 = scmp.ne.s32.totalorder %s160, %s162
      %p169 = scmp.eq.s32.totalorder %s26, 1
      %p170 = por %p168, %p169
      %p171 = scmp.ne.s32.totalorder %s162, %s163
      %p172 = scmp.eq.s32.totalorder %s26, 0
      %p173 = por %p171, %p172
      %p174 = scmp.ne.s32.totalorder %s162, %s163
      %p175 = scmp.eq.s32.totalorder %s27, 1
      %p176 = por %p174, %p175
      %p178 = scmp.ne.s32.totalorder %s163, %s177
      %p179 = scmp.eq.s32.totalorder %s27, 0
      %p180 = por %p178, %p179
      %s182 = sadd.s32 %s181, 1
      %p185 = scmp.eq.s32.totalorder %s21, 1
      %p186 = scmp.ne.s32.totalorder %s181, %s183
      %p187 = scmp.eq.s32.totalorder %s21, 0
      %p188 = por %p186, %p187
      %p189 = scmp.ne.s32.totalorder %s181, %s183
      %p190 = scmp.eq.s32.totalorder %s26, 1
      %p191 = por %p189, %p190
      %p192 = scmp.ne.s32.totalorder %s183, %s184
      %p193 = scmp.eq.s32.totalorder %s26, 0
      %p194 = por %p192, %p193
      %p195 = scmp.ne.s32.totalorder %s183, %s184
      %p196 = scmp.eq.s32.totalorder %s27, 1
      %p197 = por %p195, %p196
      %p199 = scmp.ne.s32.totalorder %s184, %s198
      %p200 = scmp.eq.s32.totalorder %s27, 0
      %p201 = por %p199, %p200
      %s203 = sadd.s32 %s202, 1
      %p206 = scmp.eq.s32.totalorder %s21, 1
      %p207 = scmp.ne.s32.totalorder %s202, %s204
      %p208 = scmp.eq.s32.totalorder %s21, 0
      %p209 = por %p207, %p208
      %p210 = scmp.ne.s32.totalorder %s202, %s204
      %p211 = scmp.eq.s32.totalorder %s26, 1
      %p212 = por %p210, %p211
      %p213 = scmp.ne.s32.totalorder %s204, %s205
      %p214 = scmp.eq.s32.totalorder %s26, 0
      %p215 = por %p213, %p214
      %p216 = scmp.ne.s32.totalorder %s204, %s205
      %p217 = scmp.eq.s32.totalorder %s27, 1
      %p218 = por %p216, %p217
      %p220 = scmp.ne.s32.totalorder %s205, %s219
      %p221 = scmp.eq.s32.totalorder %s27, 0
      %p222 = por %p220, %p221
      %s224 = sadd.s32 %s223, 1
      %p227 = scmp.eq.s32.totalorder %s21, 1
      %p228 = scmp.ne.s32.totalorder %s223, %s225
      %p229 = scmp.eq.s32.totalorder %s21, 0
      %p230 = por %p228, %p229
      %p231 = scmp.ne.s32.totalorder %s223, %s225
      %p232 = scmp.eq.s32.totalorder %s26, 1
      %p233 = por %p231, %p232
      %p234 = scmp.ne.s32.totalorder %s225, %s226
      %p235 = scmp.eq.s32.totalorder %s26, 0
      %p236 = por %p234, %p235
      %p237 = scmp.ne.s32.totalorder %s225, %s226
      %p238 = scmp.eq.s32.totalorder %s27, 1
      %p239 = por %p237, %p238
      %p241 = scmp.ne.s32.totalorder %s226, %s240
      %p242 = scmp.eq.s32.totalorder %s27, 0
      %p243 = por %p241, %p242
      %s245 = sadd.s32 %s244, 1
      %p248 = scmp.eq.s32.totalorder %s21, 1
      %p249 = scmp.ne.s32.totalorder %s244, %s246
      %p250 = scmp.eq.s32.totalorder %s21, 0
      %p251 = por %p249, %p250
      %p252 = scmp.ne.s32.totalorder %s244, %s246
      %p253 = scmp.eq.s32.totalorder %s26, 1
      %p254 = por %p252, %p253
      %p255 = scmp.ne.s32.totalorder %s246, %s247
      %p256 = scmp.eq.s32.totalorder %s26, 0
      %p257 = por %p255, %p256
      %p258 = scmp.ne.s32.totalorder %s246, %s247
      %p259 = scmp.eq.s32.totalorder %s27, 1
      %p260 = por %p258, %p259
      %p262 = scmp.ne.s32.totalorder %s247, %s261
      %p263 = scmp.eq.s32.totalorder %s27, 0
      %p264 = por %p262, %p263
      %s266 = sadd.s32 %s265, 1
      %p269 = scmp.eq.s32.totalorder %s21, 1
      %p270 = scmp.ne.s32.totalorder %s265, %s267
      %p271 = scmp.eq.s32.totalorder %s21, 0
      %p272 = por %p270, %p271
      %p273 = scmp.ne.s32.totalorder %s265, %s267
      %p274 = scmp.eq.s32.totalorder %s26, 1
      %p275 = por %p273, %p274
      %p276 = scmp.ne.s32.totalorder %s267, %s268
      %p277 = scmp.eq.s32.totalorder %s26, 0
      %p278 = por %p276, %p277
      %p279 = scmp.ne.s32.totalorder %s267, %s268
      %p280 = scmp.eq.s32.totalorder %s27, 1
      %p281 = por %p279, %p280
      %p283 = scmp.ne.s32.totalorder %s268, %s282
      %p284 = scmp.eq.s32.totalorder %s27, 0
      %p285 = por %p283, %p284
      %s286 = ssub.s32 %s21, %s28
      %p287 = scmp.eq.s32.totalorder %s286, 0
      %s289 = sadd.s32 %s288, 1
      %s290 = scalar_select %p287, %s288, %s289
      %p293 = pneg %p287
      %p294 = scmp.eq.s32.totalorder %s21, 1
      %p295 = por %p293, %p294
      %p296 = scmp.ne.s32.totalorder %s288, %s291
      %p297 = scmp.eq.s32.totalorder %s21, 0
      %p298 = por %p296, %p297
      %p299 = scmp.ne.s32.totalorder %s288, %s291
      %p300 = scmp.eq.s32.totalorder %s26, 1
      %p301 = por %p299, %p300
      %p302 = scmp.ne.s32.totalorder %s291, %s292
      %p303 = scmp.eq.s32.totalorder %s26, 0
      %p304 = por %p302, %p303
      %p305 = scmp.ne.s32.totalorder %s291, %s292
      %p306 = scmp.eq.s32.totalorder %s27, 1
      %p307 = por %p305, %p306
      %p309 = scmp.ne.s32.totalorder %s292, %s308
      %p310 = scmp.eq.s32.totalorder %s27, 0
      %p311 = por %p309, %p310
      %p312 = scmp.le.s32.totalorder 1, %s21
      %p313 = scmp.lt.s32.totalorder %s21, 3
      %p314 = pnand %p312, %p313
      %p315 = pneg %p314
      // Predicated region
      $region9: #{tpu_custom_call.1} parent=5 // pred_check
        _
      $region10: #{tpu_custom_call.1} parent=5 // pred_check_branch
        %317 = sbr.rel (%p314) target = $region12
      $region11: #{tpu_custom_call.1} parent=5 // pred_region
        %s318 = ssub.s32 %s21, 1
        // Predicated region
        $region13: #{tpu_custom_call.1} parent=11 // pred_check
          %p319 = pneg %p68
        $region14: #{tpu_custom_call.1} parent=11 // pred_check_branch
          %321 = sbr.rel (%p319) target = $region16
        $region15: #{tpu_custom_call.1} parent=11 // pred_region
          _
        $region16: #{tpu_custom_call.1} parent=11 // pred_fallthru
          _
        // Predicated region
        $region17: #{tpu_custom_call.1} parent=11 // pred_check
          %p322 = pneg %p89
        $region18: #{tpu_custom_call.1} parent=11 // pred_check_branch
          %324 = sbr.rel (%p322) target = $region20
        $region19: #{tpu_custom_call.1} parent=11 // pred_region
          _
        $region20: #{tpu_custom_call.1} parent=11 // pred_fallthru
          _
        // Predicated region
        $region21: #{tpu_custom_call.1} parent=11 // pred_check
          %p325 = pneg %p110
        $region22: #{tpu_custom_call.1} parent=11 // pred_check_branch
          %327 = sbr.rel (%p325) target = $region24
        $region23: #{tpu_custom_call.1} parent=11 // pred_region
          _
        $region24: #{tpu_custom_call.1} parent=11 // pred_fallthru
          _
        // Predicated region
        $region25: #{tpu_custom_call.1} parent=11 // pred_check
          %p328 = pneg %p131
        $region26: #{tpu_custom_call.1} parent=11 // pred_check_branch
          %330 = sbr.rel (%p328) target = $region28
        $region27: #{tpu_custom_call.1} parent=11 // pred_region
          _
        $region28: #{tpu_custom_call.1} parent=11 // pred_fallthru
          _
        // Predicated region
        $region29: #{tpu_custom_call.1} parent=11 // pred_check
          %p331 = pneg %p152
        $region30: #{tpu_custom_call.1} parent=11 // pred_check_branch
          %333 = sbr.rel (%p331) target = $region32
        $region31: #{tpu_custom_call.1} parent=11 // pred_region
          _
        $region32: #{tpu_custom_call.1} parent=11 // pred_fallthru
          _
        // Predicated region
        $region33: #{tpu_custom_call.1} parent=11 // pred_check
          %p334 = pneg %p173
        $region34: #{tpu_custom_call.1} parent=11 // pred_check_branch
          %336 = sbr.rel (%p334) target = $region36
        $region35: #{tpu_custom_call.1} parent=11 // pred_region
          _
        $region36: #{tpu_custom_call.1} parent=11 // pred_fallthru
          _
        // Predicated region
        $region37: #{tpu_custom_call.1} parent=11 // pred_check
          %p337 = pneg %p194
        $region38: #{tpu_custom_call.1} parent=11 // pred_check_branch
          %339 = sbr.rel (%p337) target = $region40
        $region39: #{tpu_custom_call.1} parent=11 // pred_region
          _
        $region40: #{tpu_custom_call.1} parent=11 // pred_fallthru
          _
        // Predicated region
        $region41: #{tpu_custom_call.1} parent=11 // pred_check
          %p340 = pneg %p215
        $region42: #{tpu_custom_call.1} parent=11 // pred_check_branch
          %342 = sbr.rel (%p340) target = $region44
        $region43: #{tpu_custom_call.1} parent=11 // pred_region
          _
        $region44: #{tpu_custom_call.1} parent=11 // pred_fallthru
          _
        // Predicated region
        $region45: #{tpu_custom_call.1} parent=11 // pred_check
          %p343 = pneg %p236
        $region46: #{tpu_custom_call.1} parent=11 // pred_check_branch
          %345 = sbr.rel (%p343) target = $region48
        $region47: #{tpu_custom_call.1} parent=11 // pred_region
          _
        $region48: #{tpu_custom_call.1} parent=11 // pred_fallthru
          _
        // Predicated region
        $region49: #{tpu_custom_call.1} parent=11 // pred_check
          %p346 = pneg %p257
        $region50: #{tpu_custom_call.1} parent=11 // pred_check_branch
          %348 = sbr.rel (%p346) target = $region52
        $region51: #{tpu_custom_call.1} parent=11 // pred_region
          _
        $region52: #{tpu_custom_call.1} parent=11 // pred_fallthru
          _
        // Predicated region
        $region53: #{tpu_custom_call.1} parent=11 // pred_check
          %p349 = pneg %p278
        $region54: #{tpu_custom_call.1} parent=11 // pred_check_branch
          %351 = sbr.rel (%p349) target = $region56
        $region55: #{tpu_custom_call.1} parent=11 // pred_region
          _
        $region56: #{tpu_custom_call.1} parent=11 // pred_fallthru
          _
      $region12: #{tpu_custom_call.1} parent=5 // pred_fallthru
        _
      %p352 = scmp.lt.s32.totalorder %s21, 2
      // Predicated region
      $region57: #{tpu_custom_call.1} parent=5 // pred_check
        %p353 = pneg %p352
      $region58: #{tpu_custom_call.1} parent=5 // pred_check_branch
        %355 = sbr.rel (%p353) target = $region60
      $region59: #{tpu_custom_call.1} parent=5 // pred_region
        // Predicated region
        $region61: #{tpu_custom_call.1} parent=59 // pred_check
          %p356 = pneg %p41
        $region62: #{tpu_custom_call.1} parent=59 // pred_check_branch
          %358 = sbr.rel (%p356) target = $region64
        $region63: #{tpu_custom_call.1} parent=59 // pred_region
          %p359 = scmp.lt.s32.totalorder %s21, 1
          %s360 = scalar_select %p359, %s21, 1
          %s361 = smul.addr %s360, 2
          %s362 = smul.addr %s361, 8
          %s363 = scalar_lea.vmem %s0, %s362
        $region64: #{tpu_custom_call.1} parent=59 // pred_fallthru
          _
      $region60: #{tpu_custom_call.1} parent=5 // pred_fallthru
        _
      %p364 = scmp.le.s32.totalorder 1, %s21
      %p365 = scmp.lt.s32.totalorder %s21, 3
      %p366 = pnand %p364, %p365
      %p367 = pneg %p366
      // Predicated region
      $region65: #{tpu_custom_call.1} parent=5 // pred_check
        _
      $region66: #{tpu_custom_call.1} parent=5 // pred_check_branch
        %369 = sbr.rel (%p366) target = $region68
      $region67: #{tpu_custom_call.1} parent=5 // pred_region
        %s370 = ssub.s32 %s21, 1
        %p371 = scmp.lt.s32.totalorder %s26, 1
        %s372 = scalar_select %p371, %s26, 1
        %s373 = smul.addr %s372, 2
        %s374 = smul.addr %s373, 8
        %s375 = scalar_lea.vmem %s0, %s374
        %p376 = pneg %p47
        %p377 = pneg %p44
        %p378 = pneg %p68
        %p379 = pneg %p65
        %p380 = pneg %p89
        %p381 = pneg %p86
        %p382 = pneg %p110
        %p383 = pneg %p107
        %p384 = pneg %p131
        %p385 = pneg %p128
        %p386 = pneg %p152
        %p387 = pneg %p149
        %p388 = pneg %p173
        %p389 = pneg %p170
        %p390 = pneg %p194
        %p391 = pneg %p191
        %p392 = pneg %p215
        %p393 = pneg %p212
        %p394 = pneg %p236
        %p395 = pneg %p233
        %p396 = pneg %p257
        %p397 = pneg %p254
        %p398 = pneg %p278
        %p399 = pneg %p275
        %p400 = pneg %p304
        %p401 = pneg %p301
        %s402 = sand.u32 %s291, 1
        %s403 = scalar_lea.sflag [#allocation3], %s402
        %s404 = sand.u32 %s291, 1
        %s405 = smul.addr %s404, 16
        %s406 = scalar_lea.vmem [#allocation2], %s405
        %p407 = scmp.lt.s32.totalorder %s26, 1
        %s408 = scalar_select %p407, %s26, 1
        %s409 = smul.addr %s408, 2
        %s410 = smul.addr %s409, 8
        %s411 = scalar_lea.vmem %s0, %s410
        %v412 = vld [vmem:[%s411] sm:$0xff]
        %v413 = vld [vmem:[%s411 + $0x8] sm:$0xff]
        %v414 = vld [vmem:[%s1] sm:$0x1]
        %v415 = vld [vmem:[%s2] sm:$0x1]
        %vm416 = vcmask 261120
        %v417 = vsel %vm416, %v412, 0.0
        %418 = vadd.xlane.f32.xlu0 %v417
        %v419 = vpop.xlane.xlu0 %418
        %v420 = vsel %vm416, %v413, 0.0
        %421 = vadd.xlane.f32.xlu0 %v420
        %v422 = vpop.xlane.xlu0 %421
        %v423 = vrcp.pop 32.0
        %v424 = vmul.f32 %v419, %v423
        %v425 = vmul.f32 %v422, %v423
        %v426 = vsub.f32 %v412, %v424
        %v427 = vsub.f32 %v413, %v425
        %v428 = vmul.f32 %v426, %v426
        %v429 = vmul.f32 %v427, %v427
        %v430 = vsel %vm416, %v428, 0.0
        %431 = vadd.xlane.f32.xlu0 %v430
        %v432 = vpop.xlane.xlu0 %431
        %v433 = vsel %vm416, %v429, 0.0
        %434 = vadd.xlane.f32.xlu0 %v433
        %v435 = vpop.xlane.xlu0 %434
        %v436 = vmul.f32 %v432, %v423
        %v437 = vmul.f32 %v435, %v423
        %v438 = vadd.f32 %v436, 1e-05
        %v439 = vadd.f32 %v437, 1e-05
        %v440 = vrsqrt.pop %v438
        %v441 = vrsqrt.pop %v439
        %v442 = vmul.f32 %v426, %v440
        %v443 = vmul.f32 %v427, %v441
        %v445 = vlaneseq
        %v446 = vshrl.u32 %v445, 7
        %v447 = vsub.s32 0, %v446
        %v448 = vrot.slane %v414, %v447
        %v450 = vmul.f32 %v442, %v448
        %v451 = vmul.f32 %v443, %v448
        %v453 = vlaneseq
        %v454 = vshrl.u32 %v453, 7
        %v455 = vsub.s32 0, %v454
        %v456 = vrot.slane %v415, %v455
        %v458 = vadd.f32 %v450, %v456
        %v459 = vadd.f32 %v451, %v456
        %v460 = vld [vmem:[%s3] sm:$0xff]
        %v461 = vld [vmem:[%s3 + $0x8] sm:$0xff]
        %v462 = vld [vmem:[%s3 + $0x10] sm:$0xff]
        %v463 = vld [vmem:[%s3 + $0x18] sm:$0xff]
        %v465 = vsel %vm416, %v458, 0
        %v468 = vsel %vm416, %v459, 0
        %470 = vmatprep.subr.mxu0 0.0
        %471 = vmatpush1.msra.mxu0 %v460
        %472 = vmatprep.subr.mxu0 0.0
        %473 = vmatpush1.msra.mxu0 %v461
        %474 = vmatprep.subr.mxu0 0.0
        %475 = vmatpush1.msra.mxu0 %v462
        %476 = vmatprep.subr.mxu0 0.0
        %477 = vmatpush1.msra.mxu0 %v463
        %478 = vmatprep.subr.mxu0 0.0
        %479 = vmatpush1.msra.mxu0 0.0
        %480 = vmatprep.subr.mxu0 0.0
        %481 = vmatpush1.msra.mxu0 0.0
        %482 = vmatprep.subr.mxu0 0.0
        %483 = vmatpush1.msra.mxu0 0.0
        %484 = vmatprep.subr.mxu0 0.0
        %485 = vmatpush1.msra.mxu0 0.0
        %486 = vmatprep.subr.mxu0 0.0
        %487 = vmatpush1.msra.mxu0 0.0
        %488 = vmatprep.subr.mxu0 0.0
        %489 = vmatpush1.msra.mxu0 0.0
        %490 = vmatprep.subr.mxu0 0.0
        %491 = vmatpush1.msra.mxu0 0.0
        %492 = vmatprep.subr.mxu0 0.0
        %493 = vmatpush1.msra.mxu0 0.0
        %494 = vmatprep.subr.mxu0 0.0
        %495 = vmatpush1.msra.mxu0 0.0
        %496 = vmatprep.subr.mxu0 0.0
        %497 = vmatpush1.msra.mxu0 0.0
        %498 = vmatprep.subr.mxu0 0.0
        %499 = vmatpush1.msra.mxu0 0.0
        %500 = vmatprep.subr.mxu0 0.0
        %501 = vmatpush1.msra.mxu0 0.0
        %502 = vmatprep.subr.mxu0 0.0
        %503 = vmatpush1.msra.mxu0 0.0
        %504 = vmatprep.subr.mxu0 0.0
        %505 = vmatpush1.msra.mxu0 0.0
        %506 = vmatprep.subr.mxu0 0.0
        %507 = vmatpush1.msra.mxu0 0.0
        %508 = vmatprep.subr.mxu0 0.0
        %509 = vmatpush1.msra.mxu0 0.0
        %510 = vmatprep.subr.mxu0 0.0
        %511 = vmatpush1.msra.mxu0 0.0
        %512 = vmatprep.subr.mxu0 0.0
        %513 = vmatpush1.msra.mxu0 0.0
        %514 = vmatprep.subr.mxu0 0.0
        %515 = vmatpush1.msra.mxu0 0.0
        %516 = vmatprep.subr.mxu0 0.0
        %517 = vmatpush1.msra.mxu0 0.0
        %518 = vmatprep.subr.mxu0 0.0
        %519 = vmatpush1.msra.mxu0 0.0
        %520 = vmatprep.subr.mxu0 0.0
        %521 = vmatpush1.msra.mxu0 0.0
        %522 = vmatprep.subr.mxu0 0.0
        %523 = vmatpush1.msra.mxu0 0.0
        %524 = vmatprep.subr.mxu0 0.0
        %525 = vmatpush1.msra.mxu0 0.0
        %526 = vmatprep.subr.mxu0 0.0
        %527 = vmatpush1.msra.mxu0 0.0
        %528 = vmatprep.subr.mxu0 0.0
        %529 = vmatpush1.msra.mxu0 0.0
        %530 = vmatprep.subr.mxu0 0.0
        %531 = vmatpush1.msra.mxu0 0.0
        %532 = vmatprep.subr.mxu0 0.0
        %533 = vmatpush1.msra.mxu0 0.0
        %534 = vmatprep.mubr.f32.mxu0 0.0
        %535 = vmatmul.mubr.f32.gmra.mrb[0].mxu0 %v465
        %v536 = vpop.f32.mrb[0].mxu0
        %v537 = vadd.f32 0.0, %v536
        %v538 = vpop.f32.mrb[0].mxu0
        %539 = vmatprep.mubr.f32.mxu0 0.0
        %540 = vmatmul.mubr.f32.gmra.mrb[0].mxu0 %v468
        %v541 = vpop.f32.mrb[0].mxu0
        %v542 = vadd.f32 0.0, %v541
        %v543 = vpop.f32.mrb[0].mxu0
        %544 = vdwg.mxu0
        %547 = vrot.lane.b32.xlu0 %v537, 96
        %v548 = vpop.permute.xlu0 %547
        %549 = vrot.lane.b32.xlu0 %v542, 96
        %v550 = vpop.permute.xlu0 %549
        %vm551 = vcmask 64512
        %v552 = vsel %vm551, %v537, 0
        %v554 = vsel %vm551, %v542, 0
        %v556 = vsel %vm551, %v548, 0
        %v558 = vsel %vm551, %v550, 0
        %560 = vmatprep.subr.mxu0 0.0
        %561 = vmatpush1.xpose.msra.mxu0 %v556
        %562 = vmatprep.subr.mxu0 0.0
        %563 = vmatpush1.xpose.msra.mxu0 %v558
        %564 = vmatprep.subr.mxu0 0.0
        %565 = vmatpush1.xpose.msra.mxu0 0.0
        %566 = vmatprep.subr.mxu0 0.0
        %567 = vmatpush1.xpose.msra.mxu0 0.0
        %568 = vmatprep.subr.mxu0 0.0
        %569 = vmatpush1.xpose.msra.mxu0 0.0
        %570 = vmatprep.subr.mxu0 0.0
        %571 = vmatpush1.xpose.msra.mxu0 0.0
        %572 = vmatprep.subr.mxu0 0.0
        %573 = vmatpush1.xpose.msra.mxu0 0.0
        %574 = vmatprep.subr.mxu0 0.0
        %575 = vmatpush1.xpose.msra.mxu0 0.0
        %576 = vmatprep.subr.mxu0 0.0
        %577 = vmatpush1.xpose.msra.mxu0 0.0
        %578 = vmatprep.subr.mxu0 0.0
        %579 = vmatpush1.xpose.msra.mxu0 0.0
        %580 = vmatprep.subr.mxu0 0.0
        %581 = vmatpush1.xpose.msra.mxu0 0.0
        %582 = vmatprep.subr.mxu0 0.0
        %583 = vmatpush1.xpose.msra.mxu0 0.0
        %584 = vmatprep.subr.mxu0 0.0
        %585 = vmatpush1.xpose.msra.mxu0 0.0
        %586 = vmatprep.subr.mxu0 0.0
        %587 = vmatpush1.xpose.msra.mxu0 0.0
        %588 = vmatprep.subr.mxu0 0.0
        %589 = vmatpush1.xpose.msra.mxu0 0.0
        %590 = vmatprep.subr.mxu0 0.0
        %591 = vmatpush1.xpose.msra.mxu0 0.0
        %592 = vmatprep.subr.mxu0 0.0
        %593 = vmatpush1.xpose.msra.mxu0 0.0
        %594 = vmatprep.subr.mxu0 0.0
        %595 = vmatpush1.xpose.msra.mxu0 0.0
        %596 = vmatprep.subr.mxu0 0.0
        %597 = vmatpush1.xpose.msra.mxu0 0.0
        %598 = vmatprep.subr.mxu0 0.0
        %599 = vmatpush1.xpose.msra.mxu0 0.0
        %600 = vmatprep.subr.mxu0 0.0
        %601 = vmatpush1.xpose.msra.mxu0 0.0
        %602 = vmatprep.subr.mxu0 0.0
        %603 = vmatpush1.xpose.msra.mxu0 0.0
        %604 = vmatprep.subr.mxu0 0.0
        %605 = vmatpush1.xpose.msra.mxu0 0.0
        %606 = vmatprep.subr.mxu0 0.0
        %607 = vmatpush1.xpose.msra.mxu0 0.0
        %608 = vmatprep.subr.mxu0 0.0
        %609 = vmatpush1.xpose.msra.mxu0 0.0
        %610 = vmatprep.subr.mxu0 0.0
        %611 = vmatpush1.xpose.msra.mxu0 0.0
        %612 = vmatprep.subr.mxu0 0.0
        %613 = vmatpush1.xpose.msra.mxu0 0.0
        %614 = vmatprep.subr.mxu0 0.0
        %615 = vmatpush1.xpose.msra.mxu0 0.0
        %616 = vmatprep.subr.mxu0 0.0
        %617 = vmatpush1.xpose.msra.mxu0 0.0
        %618 = vmatprep.subr.mxu0 0.0
        %619 = vmatpush1.xpose.msra.mxu0 0.0
        %620 = vmatprep.subr.mxu0 0.0
        %621 = vmatpush1.xpose.msra.mxu0 0.0
        %622 = vmatprep.subr.mxu0 0.0
        %623 = vmatpush1.xpose.msra.mxu0 0.0
        %624 = vmatprep.mubr.f32.mxu0 0.0
        %625 = vmatmul.mubr.f32.gmra.mrb[0].mxu0 %v552
        %v626 = vpop.f32.mrb[0].mxu0
        %v627 = vadd.f32 0.0, %v626
        %v628 = vpop.f32.mrb[0].mxu0
        %629 = vmatprep.mubr.f32.mxu0 0.0
        %630 = vmatmul.mubr.f32.gmra.mrb[0].mxu0 %v554
        %v631 = vpop.f32.mrb[0].mxu0
        %v632 = vadd.f32 0.0, %v631
        %v633 = vpop.f32.mrb[0].mxu0
        %634 = vdwg.mxu0
        %vm635 = vcmask 130048
        %v636 = vsel %vm635, %v627, -inf
        %637 = vmax.xlane.f32.xlu0 %v636
        %v638 = vpop.xlane.xlu0 %637
        %v639 = vsel %vm635, %v632, -inf
        %640 = vmax.xlane.f32.xlu0 %v639
        %v641 = vpop.xlane.xlu0 %640
        %v642 = vsub.f32 %v627, %v638
        %v643 = vsub.f32 %v632, %v641
        %v644 = vmul.f32 %v642, 1.442695
        %v645 = vpow.pop %v644
        %v646 = vmul.f32 %v643, 1.442695
        %v647 = vpow.pop %v646
        %v648 = vsel %vm635, %v645, 0.0
        %649 = vadd.xlane.f32.xlu0 %v648
        %v650 = vpop.xlane.xlu0 %649
        %v651 = vsel %vm635, %v647, 0.0
        %652 = vadd.xlane.f32.xlu0 %v651
        %v653 = vpop.xlane.xlu0 %652
        %654 = vrot.lane.b32.xlu0 %v537, 64
        %v655 = vpop.permute.xlu0 %654
        %656 = vrot.lane.b32.xlu0 %v542, 64
        %v657 = vpop.permute.xlu0 %656
        %v661 = vsel %vm635, %v645, 0
        %v664 = vsel %vm635, %v647, 0
        %666 = vmatprep.subr.mxu0 0.0
        %667 = vmatpush1.msra.mxu0 %v655
        %668 = vmatprep.subr.mxu0 0.0
        %669 = vmatpush1.msra.mxu0 %v657
        %670 = vmatprep.subr.mxu0 0.0
        %671 = vmatpush1.msra.mxu0 0.0
        %672 = vmatprep.subr.mxu0 0.0
        %673 = vmatpush1.msra.mxu0 0.0
        %674 = vmatprep.subr.mxu0 0.0
        %675 = vmatpush1.msra.mxu0 0.0
        %676 = vmatprep.subr.mxu0 0.0
        %677 = vmatpush1.msra.mxu0 0.0
        %678 = vmatprep.subr.mxu0 0.0
        %679 = vmatpush1.msra.mxu0 0.0
        %680 = vmatprep.subr.mxu0 0.0
        %681 = vmatpush1.msra.mxu0 0.0
        %682 = vmatprep.subr.mxu0 0.0
        %683 = vmatpush1.msra.mxu0 0.0
        %684 = vmatprep.subr.mxu0 0.0
        %685 = vmatpush1.msra.mxu0 0.0
        %686 = vmatprep.subr.mxu0 0.0
        %687 = vmatpush1.msra.mxu0 0.0
        %688 = vmatprep.subr.mxu0 0.0
        %689 = vmatpush1.msra.mxu0 0.0
        %690 = vmatprep.subr.mxu0 0.0
        %691 = vmatpush1.msra.mxu0 0.0
        %692 = vmatprep.subr.mxu0 0.0
        %693 = vmatpush1.msra.mxu0 0.0
        %694 = vmatprep.subr.mxu0 0.0
        %695 = vmatpush1.msra.mxu0 0.0
        %696 = vmatprep.subr.mxu0 0.0
        %697 = vmatpush1.msra.mxu0 0.0
        %698 = vmatprep.subr.mxu0 0.0
        %699 = vmatpush1.msra.mxu0 0.0
        %700 = vmatprep.subr.mxu0 0.0
        %701 = vmatpush1.msra.mxu0 0.0
        %702 = vmatprep.subr.mxu0 0.0
        %703 = vmatpush1.msra.mxu0 0.0
        %704 = vmatprep.subr.mxu0 0.0
        %705 = vmatpush1.msra.mxu0 0.0
        %706 = vmatprep.subr.mxu0 0.0
        %707 = vmatpush1.msra.mxu0 0.0
        %708 = vmatprep.subr.mxu0 0.0
        %709 = vmatpush1.msra.mxu0 0.0
        %710 = vmatprep.subr.mxu0 0.0
        %711 = vmatpush1.msra.mxu0 0.0
        %712 = vmatprep.subr.mxu0 0.0
        %713 = vmatpush1.msra.mxu0 0.0
        %714 = vmatprep.subr.mxu0 0.0
        %715 = vmatpush1.msra.mxu0 0.0
        %716 = vmatprep.subr.mxu0 0.0
        %717 = vmatpush1.msra.mxu0 0.0
        %718 = vmatprep.subr.mxu0 0.0
        %719 = vmatpush1.msra.mxu0 0.0
        %720 = vmatprep.subr.mxu0 0.0
        %721 = vmatpush1.msra.mxu0 0.0
        %722 = vmatprep.subr.mxu0 0.0
        %723 = vmatpush1.msra.mxu0 0.0
        %724 = vmatprep.subr.mxu0 0.0
        %725 = vmatpush1.msra.mxu0 0.0
        %726 = vmatprep.subr.mxu0 0.0
        %727 = vmatpush1.msra.mxu0 0.0
        %728 = vmatprep.subr.mxu0 0.0
        %729 = vmatpush1.msra.mxu0 0.0
        %730 = vmatprep.mubr.f32.mxu0 0.0
        %731 = vmatmul.mubr.f32.gmra.mrb[0].mxu0 %v661
        %v732 = vpop.f32.mrb[0].mxu0
        %v733 = vadd.f32 0.0, %v732
        %v734 = vpop.f32.mrb[0].mxu0
        %735 = vmatprep.mubr.f32.mxu0 0.0
        %736 = vmatmul.mubr.f32.gmra.mrb[0].mxu0 %v664
        %v737 = vpop.f32.mrb[0].mxu0
        %v738 = vadd.f32 0.0, %v737
        %v739 = vpop.f32.mrb[0].mxu0
        %740 = vdwg.mxu0
        %v741 = vrcp.pop %v650
        %v742 = vrcp.pop %v653
        %v743 = vmul.f32 %v733, %v741
        %v744 = vmul.f32 %v738, %v742
        %745 = vrot.lane.b32.xlu0 %v537, 120
        %v746 = vpop.permute.xlu0 %745
        %747 = vrot.lane.b32.xlu0 %v542, 120
        %v748 = vpop.permute.xlu0 %747
        %749 = vrot.lane.b32.xlu0 %v537, 88
        %v750 = vpop.permute.xlu0 %749
        %751 = vrot.lane.b32.xlu0 %v542, 88
        %v752 = vpop.permute.xlu0 %751
        %v753 = vsel %vm551, %v746, 0
        %v755 = vsel %vm551, %v748, 0
        %v757 = vsel %vm551, %v750, 0
        %v759 = vsel %vm551, %v752, 0
        %761 = vmatprep.subr.mxu0 0.0
        %762 = vmatpush1.xpose.msra.mxu0 %v757
        %763 = vmatprep.subr.mxu0 0.0
        %764 = vmatpush1.xpose.msra.mxu0 %v759
        %765 = vmatprep.subr.mxu0 0.0
        %766 = vmatpush1.xpose.msra.mxu0 0.0
        %767 = vmatprep.subr.mxu0 0.0
        %768 = vmatpush1.xpose.msra.mxu0 0.0
        %769 = vmatprep.subr.mxu0 0.0
        %770 = vmatpush1.xpose.msra.mxu0 0.0
        %771 = vmatprep.subr.mxu0 0.0
        %772 = vmatpush1.xpose.msra.mxu0 0.0
        %773 = vmatprep.subr.mxu0 0.0
        %774 = vmatpush1.xpose.msra.mxu0 0.0
        %775 = vmatprep.subr.mxu0 0.0
        %776 = vmatpush1.xpose.msra.mxu0 0.0
        %777 = vmatprep.subr.mxu0 0.0
        %778 = vmatpush1.xpose.msra.mxu0 0.0
        %779 = vmatprep.subr.mxu0 0.0
        %780 = vmatpush1.xpose.msra.mxu0 0.0
        %781 = vmatprep.subr.mxu0 0.0
        %782 = vmatpush1.xpose.msra.mxu0 0.0
        %783 = vmatprep.subr.mxu0 0.0
        %784 = vmatpush1.xpose.msra.mxu0 0.0
        %785 = vmatprep.subr.mxu0 0.0
        %786 = vmatpush1.xpose.msra.mxu0 0.0
        %787 = vmatprep.subr.mxu0 0.0
        %788 = vmatpush1.xpose.msra.mxu0 0.0
        %789 = vmatprep.subr.mxu0 0.0
        %790 = vmatpush1.xpose.msra.mxu0 0.0
        %791 = vmatprep.subr.mxu0 0.0
        %792 = vmatpush1.xpose.msra.mxu0 0.0
        %793 = vmatprep.subr.mxu0 0.0
        %794 = vmatpush1.xpose.msra.mxu0 0.0
        %795 = vmatprep.subr.mxu0 0.0
        %796 = vmatpush1.xpose.msra.mxu0 0.0
        %797 = vmatprep.subr.mxu0 0.0
        %798 = vmatpush1.xpose.msra.mxu0 0.0
        %799 = vmatprep.subr.mxu0 0.0
        %800 = vmatpush1.xpose.msra.mxu0 0.0
        %801 = vmatprep.subr.mxu0 0.0
        %802 = vmatpush1.xpose.msra.mxu0 0.0
        %803 = vmatprep.subr.mxu0 0.0
        %804 = vmatpush1.xpose.msra.mxu0 0.0
        %805 = vmatprep.subr.mxu0 0.0
        %806 = vmatpush1.xpose.msra.mxu0 0.0
        %807 = vmatprep.subr.mxu0 0.0
        %808 = vmatpush1.xpose.msra.mxu0 0.0
        %809 = vmatprep.subr.mxu0 0.0
        %810 = vmatpush1.xpose.msra.mxu0 0.0
        %811 = vmatprep.subr.mxu0 0.0
        %812 = vmatpush1.xpose.msra.mxu0 0.0
        %813 = vmatprep.subr.mxu0 0.0
        %814 = vmatpush1.xpose.msra.mxu0 0.0
        %815 = vmatprep.subr.mxu0 0.0
        %816 = vmatpush1.xpose.msra.mxu0 0.0
        %817 = vmatprep.subr.mxu0 0.0
        %818 = vmatpush1.xpose.msra.mxu0 0.0
        %819 = vmatprep.subr.mxu0 0.0
        %820 = vmatpush1.xpose.msra.mxu0 0.0
        %821 = vmatprep.subr.mxu0 0.0
        %822 = vmatpush1.xpose.msra.mxu0 0.0
        %823 = vmatprep.subr.mxu0 0.0
        %824 = vmatpush1.xpose.msra.mxu0 0.0
        %825 = vmatprep.mubr.f32.mxu0 0.0
        %826 = vmatmul.mubr.f32.gmra.mrb[0].mxu0 %v753
        %v827 = vpop.f32.mrb[0].mxu0
        %v828 = vadd.f32 0.0, %v827
        %v829 = vpop.f32.mrb[0].mxu0
        %830 = vmatprep.mubr.f32.mxu0 0.0
        %831 = vmatmul.mubr.f32.gmra.mrb[0].mxu0 %v755
        %v832 = vpop.f32.mrb[0].mxu0
        %v833 = vadd.f32 0.0, %v832
        %v834 = vpop.f32.mrb[0].mxu0
        %835 = vdwg.mxu0
        %v836 = vsel %vm635, %v828, -inf
        %837 = vmax.xlane.f32.xlu0 %v836
        %v838 = vpop.xlane.xlu0 %837
        %v839 = vsel %vm635, %v833, -inf
        %840 = vmax.xlane.f32.xlu0 %v839
        %v841 = vpop.xlane.xlu0 %840
        %v842 = vsub.f32 %v828, %v838
        %v843 = vsub.f32 %v833, %v841
        %v844 = vmul.f32 %v842, 1.442695
        %v845 = vpow.pop %v844
        %v846 = vmul.f32 %v843, 1.442695
        %v847 = vpow.pop %v846
        %v848 = vsel %vm635, %v845, 0.0
        %849 = vadd.xlane.f32.xlu0 %v848
        %v850 = vpop.xlane.xlu0 %849
        %v851 = vsel %vm635, %v847, 0.0
        %852 = vadd.xlane.f32.xlu0 %v851
        %v853 = vpop.xlane.xlu0 %852
        %854 = vrot.lane.b32.xlu0 %v537, 56
        %v855 = vpop.permute.xlu0 %854
        %856 = vrot.lane.b32.xlu0 %v542, 56
        %v857 = vpop.permute.xlu0 %856
        %v861 = vsel %vm635, %v845, 0
        %v864 = vsel %vm635, %v847, 0
        %866 = vmatprep.subr.mxu0 0.0
        %867 = vmatpush1.msra.mxu0 %v855
        %868 = vmatprep.subr.mxu0 0.0
        %869 = vmatpush1.msra.mxu0 %v857
        %870 = vmatprep.subr.mxu0 0.0
        %871 = vmatpush1.msra.mxu0 0.0
        %872 = vmatprep.subr.mxu0 0.0
        %873 = vmatpush1.msra.mxu0 0.0
        %874 = vmatprep.subr.mxu0 0.0
        %875 = vmatpush1.msra.mxu0 0.0
        %876 = vmatprep.subr.mxu0 0.0
        %877 = vmatpush1.msra.mxu0 0.0
        %878 = vmatprep.subr.mxu0 0.0
        %879 = vmatpush1.msra.mxu0 0.0
        %880 = vmatprep.subr.mxu0 0.0
        %881 = vmatpush1.msra.mxu0 0.0
        %882 = vmatprep.subr.mxu0 0.0
        %883 = vmatpush1.msra.mxu0 0.0
        %884 = vmatprep.subr.mxu0 0.0
        %885 = vmatpush1.msra.mxu0 0.0
        %886 = vmatprep.subr.mxu0 0.0
        %887 = vmatpush1.msra.mxu0 0.0
        %888 = vmatprep.subr.mxu0 0.0
        %889 = vmatpush1.msra.mxu0 0.0
        %890 = vmatprep.subr.mxu0 0.0
        %891 = vmatpush1.msra.mxu0 0.0
        %892 = vmatprep.subr.mxu0 0.0
        %893 = vmatpush1.msra.mxu0 0.0
        %894 = vmatprep.subr.mxu0 0.0
        %895 = vmatpush1.msra.mxu0 0.0
        %896 = vmatprep.subr.mxu0 0.0
        %897 = vmatpush1.msra.mxu0 0.0
        %898 = vmatprep.subr.mxu0 0.0
        %899 = vmatpush1.msra.mxu0 0.0
        %900 = vmatprep.subr.mxu0 0.0
        %901 = vmatpush1.msra.mxu0 0.0
        %902 = vmatprep.subr.mxu0 0.0
        %903 = vmatpush1.msra.mxu0 0.0
        %904 = vmatprep.subr.mxu0 0.0
        %905 = vmatpush1.msra.mxu0 0.0
        %906 = vmatprep.subr.mxu0 0.0
        %907 = vmatpush1.msra.mxu0 0.0
        %908 = vmatprep.subr.mxu0 0.0
        %909 = vmatpush1.msra.mxu0 0.0
        %910 = vmatprep.subr.mxu0 0.0
        %911 = vmatpush1.msra.mxu0 0.0
        %912 = vmatprep.subr.mxu0 0.0
        %913 = vmatpush1.msra.mxu0 0.0
        %914 = vmatprep.subr.mxu0 0.0
        %915 = vmatpush1.msra.mxu0 0.0
        %916 = vmatprep.subr.mxu0 0.0
        %917 = vmatpush1.msra.mxu0 0.0
        %918 = vmatprep.subr.mxu0 0.0
        %919 = vmatpush1.msra.mxu0 0.0
        %920 = vmatprep.subr.mxu0 0.0
        %921 = vmatpush1.msra.mxu0 0.0
        %922 = vmatprep.subr.mxu0 0.0
        %923 = vmatpush1.msra.mxu0 0.0
        %924 = vmatprep.subr.mxu0 0.0
        %925 = vmatpush1.msra.mxu0 0.0
        %926 = vmatprep.subr.mxu0 0.0
        %927 = vmatpush1.msra.mxu0 0.0
        %928 = vmatprep.subr.mxu0 0.0
        %929 = vmatpush1.msra.mxu0 0.0
        %930 = vmatprep.mubr.f32.mxu0 0.0
        %931 = vmatmul.mubr.f32.gmra.mrb[0].mxu0 %v861
        %v932 = vpop.f32.mrb[0].mxu0
        %v933 = vadd.f32 0.0, %v932
        %v934 = vpop.f32.mrb[0].mxu0
        %935 = vmatprep.mubr.f32.mxu0 0.0
        %936 = vmatmul.mubr.f32.gmra.mrb[0].mxu0 %v864
        %v937 = vpop.f32.mrb[0].mxu0
        %v938 = vadd.f32 0.0, %v937
        %v939 = vpop.f32.mrb[0].mxu0
        %940 = vdwg.mxu0
        %v941 = vrcp.pop %v850
        %v942 = vrcp.pop %v853
        %v943 = vmul.f32 %v933, %v941
        %v944 = vmul.f32 %v938, %v942
        %945 = vrot.lane.b32.xlu0 %v537, 112
        %v946 = vpop.permute.xlu0 %945
        %947 = vrot.lane.b32.xlu0 %v542, 112
        %v948 = vpop.permute.xlu0 %947
        %949 = vrot.lane.b32.xlu0 %v537, 80
        %v950 = vpop.permute.xlu0 %949
        %951 = vrot.lane.b32.xlu0 %v542, 80
        %v952 = vpop.permute.xlu0 %951
        %v953 = vsel %vm551, %v946, 0
        %v955 = vsel %vm551, %v948, 0
        %v957 = vsel %vm551, %v950, 0
        %v959 = vsel %vm551, %v952, 0
        %961 = vmatprep.subr.mxu0 0.0
        %962 = vmatpush1.xpose.msra.mxu0 %v957
        %963 = vmatprep.subr.mxu0 0.0
        %964 = vmatpush1.xpose.msra.mxu0 %v959
        %965 = vmatprep.subr.mxu0 0.0
        %966 = vmatpush1.xpose.msra.mxu0 0.0
        %967 = vmatprep.subr.mxu0 0.0
        %968 = vmatpush1.xpose.msra.mxu0 0.0
        %969 = vmatprep.subr.mxu0 0.0
        %970 = vmatpush1.xpose.msra.mxu0 0.0
        %971 = vmatprep.subr.mxu0 0.0
        %972 = vmatpush1.xpose.msra.mxu0 0.0
        %973 = vmatprep.subr.mxu0 0.0
        %974 = vmatpush1.xpose.msra.mxu0 0.0
        %975 = vmatprep.subr.mxu0 0.0
        %976 = vmatpush1.xpose.msra.mxu0 0.0
        %977 = vmatprep.subr.mxu0 0.0
        %978 = vmatpush1.xpose.msra.mxu0 0.0
        %979 = vmatprep.subr.mxu0 0.0
        %980 = vmatpush1.xpose.msra.mxu0 0.0
        %981 = vmatprep.subr.mxu0 0.0
        %982 = vmatpush1.xpose.msra.mxu0 0.0
        %983 = vmatprep.subr.mxu0 0.0
        %984 = vmatpush1.xpose.msra.mxu0 0.0
        %985 = vmatprep.subr.mxu0 0.0
        %986 = vmatpush1.xpose.msra.mxu0 0.0
        %987 = vmatprep.subr.mxu0 0.0
        %988 = vmatpush1.xpose.msra.mxu0 0.0
        %989 = vmatprep.subr.mxu0 0.0
        %990 = vmatpush1.xpose.msra.mxu0 0.0
        %991 = vmatprep.subr.mxu0 0.0
        %992 = vmatpush1.xpose.msra.mxu0 0.0
        %993 = vmatprep.subr.mxu0 0.0
        %994 = vmatpush1.xpose.msra.mxu0 0.0
        %995 = vmatprep.subr.mxu0 0.0
        %996 = vmatpush1.xpose.msra.mxu0 0.0
        %997 = vmatprep.subr.mxu0 0.0
        %998 = vmatpush1.xpose.msra.mxu0 0.0
        %999 = vmatprep.subr.mxu0 0.0
        %1000 = vmatpush1.xpose.msra.mxu0 0.0
        %1001 = vmatprep.subr.mxu0 0.0
        %1002 = vmatpush1.xpose.msra.mxu0 0.0
        %1003 = vmatprep.subr.mxu0 0.0
        %1004 = vmatpush1.xpose.msra.mxu0 0.0
        %1005 = vmatprep.subr.mxu0 0.0
        %1006 = vmatpush1.xpose.msra.mxu0 0.0
        %1007 = vmatprep.subr.mxu0 0.0
        %1008 = vmatpush1.xpose.msra.mxu0 0.0
        %1009 = vmatprep.subr.mxu0 0.0
        %1010 = vmatpush1.xpose.msra.mxu0 0.0
        %1011 = vmatprep.subr.mxu0 0.0
        %1012 = vmatpush1.xpose.msra.mxu0 0.0
        %1013 = vmatprep.subr.mxu0 0.0
        %1014 = vmatpush1.xpose.msra.mxu0 0.0
        %1015 = vmatprep.subr.mxu0 0.0
        %1016 = vmatpush1.xpose.msra.mxu0 0.0
        %1017 = vmatprep.subr.mxu0 0.0
        %1018 = vmatpush1.xpose.msra.mxu0 0.0
        %1019 = vmatprep.subr.mxu0 0.0
        %1020 = vmatpush1.xpose.msra.mxu0 0.0
        %1021 = vmatprep.subr.mxu0 0.0
        %1022 = vmatpush1.xpose.msra.mxu0 0.0
        %1023 = vmatprep.subr.mxu0 0.0
        %1024 = vmatpush1.xpose.msra.mxu0 0.0
        %1025 = vmatprep.mubr.f32.mxu0 0.0
        %1026 = vmatmul.mubr.f32.gmra.mrb[0].mxu0 %v953
        %v1027 = vpop.f32.mrb[0].mxu0
        %v1028 = vadd.f32 0.0, %v1027
        %v1029 = vpop.f32.mrb[0].mxu0
        %1030 = vmatprep.mubr.f32.mxu0 0.0
        %1031 = vmatmul.mubr.f32.gmra.mrb[0].mxu0 %v955
        %v1032 = vpop.f32.mrb[0].mxu0
        %v1033 = vadd.f32 0.0, %v1032
        %v1034 = vpop.f32.mrb[0].mxu0
        %1035 = vdwg.mxu0
        %v1036 = vsel %vm635, %v1028, -inf
        %1037 = vmax.xlane.f32.xlu0 %v1036
        %v1038 = vpop.xlane.xlu0 %1037
        %v1039 = vsel %vm635, %v1033, -inf
        %1040 = vmax.xlane.f32.xlu0 %v1039
        %v1041 = vpop.xlane.xlu0 %1040
        %v1042 = vsub.f32 %v1028, %v1038
        %v1043 = vsub.f32 %v1033, %v1041
        %v1044 = vmul.f32 %v1042, 1.442695
        %v1045 = vpow.pop %v1044
        %v1046 = vmul.f32 %v1043, 1.442695
        %v1047 = vpow.pop %v1046
        %v1048 = vsel %vm635, %v1045, 0.0
        %1049 = vadd.xlane.f32.xlu0 %v1048
        %v1050 = vpop.xlane.xlu0 %1049
        %v1051 = vsel %vm635, %v1047, 0.0
        %1052 = vadd.xlane.f32.xlu0 %v1051
        %v1053 = vpop.xlane.xlu0 %1052
        %1054 = vrot.lane.b32.xlu0 %v537, 48
        %v1055 = vpop.permute.xlu0 %1054
        %1056 = vrot.lane.b32.xlu0 %v542, 48
        %v1057 = vpop.permute.xlu0 %1056
        %v1061 = vsel %vm635, %v1045, 0
        %v1064 = vsel %vm635, %v1047, 0
        %1066 = vmatprep.subr.mxu0 0.0
        %1067 = vmatpush1.msra.mxu0 %v1055
        %1068 = vmatprep.subr.mxu0 0.0
        %1069 = vmatpush1.msra.mxu0 %v1057
        %1070 = vmatprep.subr.mxu0 0.0
        %1071 = vmatpush1.msra.mxu0 0.0
        %1072 = vmatprep.subr.mxu0 0.0
        %1073 = vmatpush1.msra.mxu0 0.0
        %1074 = vmatprep.subr.mxu0 0.0
        %1075 = vmatpush1.msra.mxu0 0.0
        %1076 = vmatprep.subr.mxu0 0.0
        %1077 = vmatpush1.msra.mxu0 0.0
        %1078 = vmatprep.subr.mxu0 0.0
        %1079 = vmatpush1.msra.mxu0 0.0
        %1080 = vmatprep.subr.mxu0 0.0
        %1081 = vmatpush1.msra.mxu0 0.0
        %1082 = vmatprep.subr.mxu0 0.0
        %1083 = vmatpush1.msra.mxu0 0.0
        %1084 = vmatprep.subr.mxu0 0.0
        %1085 = vmatpush1.msra.mxu0 0.0
        %1086 = vmatprep.subr.mxu0 0.0
        %1087 = vmatpush1.msra.mxu0 0.0
        %1088 = vmatprep.subr.mxu0 0.0
        %1089 = vmatpush1.msra.mxu0 0.0
        %1090 = vmatprep.subr.mxu0 0.0
        %1091 = vmatpush1.msra.mxu0 0.0
        %1092 = vmatprep.subr.mxu0 0.0
        %1093 = vmatpush1.msra.mxu0 0.0
        %1094 = vmatprep.subr.mxu0 0.0
        %1095 = vmatpush1.msra.mxu0 0.0
        %1096 = vmatprep.subr.mxu0 0.0
        %1097 = vmatpush1.msra.mxu0 0.0
        %1098 = vmatprep.subr.mxu0 0.0
        %1099 = vmatpush1.msra.mxu0 0.0
        %1100 = vmatprep.subr.mxu0 0.0
        %1101 = vmatpush1.msra.mxu0 0.0
        %1102 = vmatprep.subr.mxu0 0.0
        %1103 = vmatpush1.msra.mxu0 0.0
        %1104 = vmatprep.subr.mxu0 0.0
        %1105 = vmatpush1.msra.mxu0 0.0
        %1106 = vmatprep.subr.mxu0 0.0
        %1107 = vmatpush1.msra.mxu0 0.0
        %1108 = vmatprep.subr.mxu0 0.0
        %1109 = vmatpush1.msra.mxu0 0.0
        %1110 = vmatprep.subr.mxu0 0.0
        %1111 = vmatpush1.msra.mxu0 0.0
        %1112 = vmatprep.subr.mxu0 0.0
        %1113 = vmatpush1.msra.mxu0 0.0
        %1114 = vmatprep.subr.mxu0 0.0
        %1115 = vmatpush1.msra.mxu0 0.0
        %1116 = vmatprep.subr.mxu0 0.0
        %1117 = vmatpush1.msra.mxu0 0.0
        %1118 = vmatprep.subr.mxu0 0.0
        %1119 = vmatpush1.msra.mxu0 0.0
        %1120 = vmatprep.subr.mxu0 0.0
        %1121 = vmatpush1.msra.mxu0 0.0
        %1122 = vmatprep.subr.mxu0 0.0
        %1123 = vmatpush1.msra.mxu0 0.0
        %1124 = vmatprep.subr.mxu0 0.0
        %1125 = vmatpush1.msra.mxu0 0.0
        %1126 = vmatprep.subr.mxu0 0.0
        %1127 = vmatpush1.msra.mxu0 0.0
        %1128 = vmatprep.subr.mxu0 0.0
        %1129 = vmatpush1.msra.mxu0 0.0
        %1130 = vmatprep.mubr.f32.mxu0 0.0
        %1131 = vmatmul.mubr.f32.gmra.mrb[0].mxu0 %v1061
        %v1132 = vpop.f32.mrb[0].mxu0
        %v1133 = vadd.f32 0.0, %v1132
        %v1134 = vpop.f32.mrb[0].mxu0
        %1135 = vmatprep.mubr.f32.mxu0 0.0
        %1136 = vmatmul.mubr.f32.gmra.mrb[0].mxu0 %v1064
        %v1137 = vpop.f32.mrb[0].mxu0
        %v1138 = vadd.f32 0.0, %v1137
        %v1139 = vpop.f32.mrb[0].mxu0
        %1140 = vdwg.mxu0
        %v1141 = vrcp.pop %v1050
        %v1142 = vrcp.pop %v1053
        %v1143 = vmul.f32 %v1133, %v1141
        %v1144 = vmul.f32 %v1138, %v1142
        %1145 = vrot.lane.b32.xlu0 %v537, 104
        %v1146 = vpop.permute.xlu0 %1145
        %1147 = vrot.lane.b32.xlu0 %v542, 104
        %v1148 = vpop.permute.xlu0 %1147
        %1149 = vrot.lane.b32.xlu0 %v537, 72
        %v1150 = vpop.permute.xlu0 %1149
        %1151 = vrot.lane.b32.xlu0 %v542, 72
        %v1152 = vpop.permute.xlu0 %1151
        %v1153 = vsel %vm551, %v1146, 0
        %v1155 = vsel %vm551, %v1148, 0
        %v1157 = vsel %vm551, %v1150, 0
        %v1159 = vsel %vm551, %v1152, 0
        %1161 = vmatprep.subr.mxu0 0.0
        %1162 = vmatpush1.xpose.msra.mxu0 %v1157
        %1163 = vmatprep.subr.mxu0 0.0
        %1164 = vmatpush1.xpose.msra.mxu0 %v1159
        %1165 = vmatprep.subr.mxu0 0.0
        %1166 = vmatpush1.xpose.msra.mxu0 0.0
        %1167 = vmatprep.subr.mxu0 0.0
        %1168 = vmatpush1.xpose.msra.mxu0 0.0
        %1169 = vmatprep.subr.mxu0 0.0
        %1170 = vmatpush1.xpose.msra.mxu0 0.0
        %1171 = vmatprep.subr.mxu0 0.0
        %1172 = vmatpush1.xpose.msra.mxu0 0.0
        %1173 = vmatprep.subr.mxu0 0.0
        %1174 = vmatpush1.xpose.msra.mxu0 0.0
        %1175 = vmatprep.subr.mxu0 0.0
        %1176 = vmatpush1.xpose.msra.mxu0 0.0
        %1177 = vmatprep.subr.mxu0 0.0
        %1178 = vmatpush1.xpose.msra.mxu0 0.0
        %1179 = vmatprep.subr.mxu0 0.0
        %1180 = vmatpush1.xpose.msra.mxu0 0.0
        %1181 = vmatprep.subr.mxu0 0.0
        %1182 = vmatpush1.xpose.msra.mxu0 0.0
        %1183 = vmatprep.subr.mxu0 0.0
        %1184 = vmatpush1.xpose.msra.mxu0 0.0
        %1185 = vmatprep.subr.mxu0 0.0
        %1186 = vmatpush1.xpose.msra.mxu0 0.0
        %1187 = vmatprep.subr.mxu0 0.0
        %1188 = vmatpush1.xpose.msra.mxu0 0.0
        %1189 = vmatprep.subr.mxu0 0.0
        %1190 = vmatpush1.xpose.msra.mxu0 0.0
        %1191 = vmatprep.subr.mxu0 0.0
        %1192 = vmatpush1.xpose.msra.mxu0 0.0
        %1193 = vmatprep.subr.mxu0 0.0
        %1194 = vmatpush1.xpose.msra.mxu0 0.0
        %1195 = vmatprep.subr.mxu0 0.0
        %1196 = vmatpush1.xpose.msra.mxu0 0.0
        %1197 = vmatprep.subr.mxu0 0.0
        %1198 = vmatpush1.xpose.msra.mxu0 0.0
        %1199 = vmatprep.subr.mxu0 0.0
        %1200 = vmatpush1.xpose.msra.mxu0 0.0
        %1201 = vmatprep.subr.mxu0 0.0
        %1202 = vmatpush1.xpose.msra.mxu0 0.0
        %1203 = vmatprep.subr.mxu0 0.0
        %1204 = vmatpush1.xpose.msra.mxu0 0.0
        %1205 = vmatprep.subr.mxu0 0.0
        %1206 = vmatpush1.xpose.msra.mxu0 0.0
        %1207 = vmatprep.subr.mxu0 0.0
        %1208 = vmatpush1.xpose.msra.mxu0 0.0
        %1209 = vmatprep.subr.mxu0 0.0
        %1210 = vmatpush1.xpose.msra.mxu0 0.0
        %1211 = vmatprep.subr.mxu0 0.0
        %1212 = vmatpush1.xpose.msra.mxu0 0.0
        %1213 = vmatprep.subr.mxu0 0.0
        %1214 = vmatpush1.xpose.msra.mxu0 0.0
        %1215 = vmatprep.subr.mxu0 0.0
        %1216 = vmatpush1.xpose.msra.mxu0 0.0
        %1217 = vmatprep.subr.mxu0 0.0
        %1218 = vmatpush1.xpose.msra.mxu0 0.0
        %1219 = vmatprep.subr.mxu0 0.0
        %1220 = vmatpush1.xpose.msra.mxu0 0.0
        %1221 = vmatprep.subr.mxu0 0.0
        %1222 = vmatpush1.xpose.msra.mxu0 0.0
        %1223 = vmatprep.subr.mxu0 0.0
        %1224 = vmatpush1.xpose.msra.mxu0 0.0
        %1225 = vmatprep.mubr.f32.mxu0 0.0
        %1226 = vmatmul.mubr.f32.gmra.mrb[0].mxu0 %v1153
        %v1227 = vpop.f32.mrb[0].mxu0
        %v1228 = vadd.f32 0.0, %v1227
        %v1229 = vpop.f32.mrb[0].mxu0
        %1230 = vmatprep.mubr.f32.mxu0 0.0
        %1231 = vmatmul.mubr.f32.gmra.mrb[0].mxu0 %v1155
        %v1232 = vpop.f32.mrb[0].mxu0
        %v1233 = vadd.f32 0.0, %v1232
        %v1234 = vpop.f32.mrb[0].mxu0
        %1235 = vdwg.mxu0
        %v1236 = vsel %vm635, %v1228, -inf
        %1237 = vmax.xlane.f32.xlu0 %v1236
        %v1238 = vpop.xlane.xlu0 %1237
        %v1239 = vsel %vm635, %v1233, -inf
        %1240 = vmax.xlane.f32.xlu0 %v1239
        %v1241 = vpop.xlane.xlu0 %1240
        %v1242 = vsub.f32 %v1228, %v1238
        %v1243 = vsub.f32 %v1233, %v1241
        %v1244 = vmul.f32 %v1242, 1.442695
        %v1245 = vpow.pop %v1244
        %v1246 = vmul.f32 %v1243, 1.442695
        %v1247 = vpow.pop %v1246
        %v1248 = vsel %vm635, %v1245, 0.0
        %1249 = vadd.xlane.f32.xlu0 %v1248
        %v1250 = vpop.xlane.xlu0 %1249
        %v1251 = vsel %vm635, %v1247, 0.0
        %1252 = vadd.xlane.f32.xlu0 %v1251
        %v1253 = vpop.xlane.xlu0 %1252
        %1254 = vrot.lane.b32.xlu0 %v537, 40
        %v1255 = vpop.permute.xlu0 %1254
        %1256 = vrot.lane.b32.xlu0 %v542, 40
        %v1257 = vpop.permute.xlu0 %1256
        %v1261 = vsel %vm635, %v1245, 0
        %v1264 = vsel %vm635, %v1247, 0
        %1266 = vmatprep.subr.mxu0 0.0
        %1267 = vmatpush1.msra.mxu0 %v1255
        %1268 = vmatprep.subr.mxu0 0.0
        %1269 = vmatpush1.msra.mxu0 %v1257
        %1270 = vmatprep.subr.mxu0 0.0
        %1271 = vmatpush1.msra.mxu0 0.0
        %1272 = vmatprep.subr.mxu0 0.0
        %1273 = vmatpush1.msra.mxu0 0.0
        %1274 = vmatprep.subr.mxu0 0.0
        %1275 = vmatpush1.msra.mxu0 0.0
        %1276 = vmatprep.subr.mxu0 0.0
        %1277 = vmatpush1.msra.mxu0 0.0
        %1278 = vmatprep.subr.mxu0 0.0
        %1279 = vmatpush1.msra.mxu0 0.0
        %1280 = vmatprep.subr.mxu0 0.0
        %1281 = vmatpush1.msra.mxu0 0.0
        %1282 = vmatprep.subr.mxu0 0.0
        %1283 = vmatpush1.msra.mxu0 0.0
        %1284 = vmatprep.subr.mxu0 0.0
        %1285 = vmatpush1.msra.mxu0 0.0
        %1286 = vmatprep.subr.mxu0 0.0
        %1287 = vmatpush1.msra.mxu0 0.0
        %1288 = vmatprep.subr.mxu0 0.0
        %1289 = vmatpush1.msra.mxu0 0.0
        %1290 = vmatprep.subr.mxu0 0.0
        %1291 = vmatpush1.msra.mxu0 0.0
        %1292 = vmatprep.subr.mxu0 0.0
        %1293 = vmatpush1.msra.mxu0 0.0
        %1294 = vmatprep.subr.mxu0 0.0
        %1295 = vmatpush1.msra.mxu0 0.0
        %1296 = vmatprep.subr.mxu0 0.0
        %1297 = vmatpush1.msra.mxu0 0.0
        %1298 = vmatprep.subr.mxu0 0.0
        %1299 = vmatpush1.msra.mxu0 0.0
        %1300 = vmatprep.subr.mxu0 0.0
        %1301 = vmatpush1.msra.mxu0 0.0
        %1302 = vmatprep.subr.mxu0 0.0
        %1303 = vmatpush1.msra.mxu0 0.0
        %1304 = vmatprep.subr.mxu0 0.0
        %1305 = vmatpush1.msra.mxu0 0.0
        %1306 = vmatprep.subr.mxu0 0.0
        %1307 = vmatpush1.msra.mxu0 0.0
        %1308 = vmatprep.subr.mxu0 0.0
        %1309 = vmatpush1.msra.mxu0 0.0
        %1310 = vmatprep.subr.mxu0 0.0
        %1311 = vmatpush1.msra.mxu0 0.0
        %1312 = vmatprep.subr.mxu0 0.0
        %1313 = vmatpush1.msra.mxu0 0.0
        %1314 = vmatprep.subr.mxu0 0.0
        %1315 = vmatpush1.msra.mxu0 0.0
        %1316 = vmatprep.subr.mxu0 0.0
        %1317 = vmatpush1.msra.mxu0 0.0
        %1318 = vmatprep.subr.mxu0 0.0
        %1319 = vmatpush1.msra.mxu0 0.0
        %1320 = vmatprep.subr.mxu0 0.0
        %1321 = vmatpush1.msra.mxu0 0.0
        %1322 = vmatprep.subr.mxu0 0.0
        %1323 = vmatpush1.msra.mxu0 0.0
        %1324 = vmatprep.subr.mxu0 0.0
        %1325 = vmatpush1.msra.mxu0 0.0
        %1326 = vmatprep.subr.mxu0 0.0
        %1327 = vmatpush1.msra.mxu0 0.0
        %1328 = vmatprep.subr.mxu0 0.0
        %1329 = vmatpush1.msra.mxu0 0.0
        %1330 = vmatprep.mubr.f32.mxu0 0.0
        %1331 = vmatmul.mubr.f32.gmra.mrb[0].mxu0 %v1261
        %v1332 = vpop.f32.mrb[0].mxu0
        %v1333 = vadd.f32 0.0, %v1332
        %v1334 = vpop.f32.mrb[0].mxu0
        %1335 = vmatprep.mubr.f32.mxu0 0.0
        %1336 = vmatmul.mubr.f32.gmra.mrb[0].mxu0 %v1264
        %v1337 = vpop.f32.mrb[0].mxu0
        %v1338 = vadd.f32 0.0, %v1337
        %v1339 = vpop.f32.mrb[0].mxu0
        %1340 = vdwg.mxu0
        %v1341 = vrcp.pop %v1250
        %v1342 = vrcp.pop %v1253
        %v1343 = vmul.f32 %v1333, %v1341
        %v1344 = vmul.f32 %v1338, %v1342
        %1347 = vrot.lane.b32.xlu0 %v943, 8
        %v1348 = vpop.permute.xlu0 %1347
        %1349 = vrot.lane.b32.xlu0 %v944, 8
        %v1350 = vpop.permute.xlu0 %1349
        %1355 = vrot.lane.b32.xlu0 %v1143, 16
        %v1356 = vpop.permute.xlu0 %1355
        %1357 = vrot.lane.b32.xlu0 %v1144, 16
        %v1358 = vpop.permute.xlu0 %1357
        %1363 = vrot.lane.b32.xlu0 %v1343, 24
        %v1364 = vpop.permute.xlu0 %1363
        %1365 = vrot.lane.b32.xlu0 %v1344, 24
        %v1366 = vpop.permute.xlu0 %1365
        %v1369 = vsel %vm551, %v743, %v1348
        %v1370 = vsel %vm551, %v744, %v1350
        %v1371 = vsel %vm635, %v1369, %v1356
        %v1372 = vsel %vm635, %v1370, %v1358
        %vm1373 = vcmask 195584
        %v1374 = vsel %vm1373, %v1371, %v1364
        %v1375 = vsel %vm1373, %v1372, %v1366
        %v1376 = vld [vmem:[%s4] sm:$0xff]
        %v1377 = vld [vmem:[%s4 + $0x8] sm:$0xff]
        %v1378 = vld [vmem:[%s4 + $0x10] sm:$0xff]
        %v1379 = vld [vmem:[%s4 + $0x18] sm:$0xff]
        %v1381 = vsel %vm416, %v1374, 0
        %v1384 = vsel %vm416, %v1375, 0
        %1386 = vmatprep.subr.mxu0 0.0
        %1387 = vmatpush1.msra.mxu0 %v1376
        %1388 = vmatprep.subr.mxu0 0.0
        %1389 = vmatpush1.msra.mxu0 %v1377
        %1390 = vmatprep.subr.mxu0 0.0
        %1391 = vmatpush1.msra.mxu0 %v1378
        %1392 = vmatprep.subr.mxu0 0.0
        %1393 = vmatpush1.msra.mxu0 %v1379
        %1394 = vmatprep.subr.mxu0 0.0
        %1395 = vmatpush1.msra.mxu0 0.0
        %1396 = vmatprep.subr.mxu0 0.0
        %1397 = vmatpush1.msra.mxu0 0.0
        %1398 = vmatprep.subr.mxu0 0.0
        %1399 = vmatpush1.msra.mxu0 0.0
        %1400 = vmatprep.subr.mxu0 0.0
        %1401 = vmatpush1.msra.mxu0 0.0
        %1402 = vmatprep.subr.mxu0 0.0
        %1403 = vmatpush1.msra.mxu0 0.0
        %1404 = vmatprep.subr.mxu0 0.0
        %1405 = vmatpush1.msra.mxu0 0.0
        %1406 = vmatprep.subr.mxu0 0.0
        %1407 = vmatpush1.msra.mxu0 0.0
        %1408 = vmatprep.subr.mxu0 0.0
        %1409 = vmatpush1.msra.mxu0 0.0
        %1410 = vmatprep.subr.mxu0 0.0
        %1411 = vmatpush1.msra.mxu0 0.0
        %1412 = vmatprep.subr.mxu0 0.0
        %1413 = vmatpush1.msra.mxu0 0.0
        %1414 = vmatprep.subr.mxu0 0.0
        %1415 = vmatpush1.msra.mxu0 0.0
        %1416 = vmatprep.subr.mxu0 0.0
        %1417 = vmatpush1.msra.mxu0 0.0
        %1418 = vmatprep.subr.mxu0 0.0
        %1419 = vmatpush1.msra.mxu0 0.0
        %1420 = vmatprep.subr.mxu0 0.0
        %1421 = vmatpush1.msra.mxu0 0.0
        %1422 = vmatprep.subr.mxu0 0.0
        %1423 = vmatpush1.msra.mxu0 0.0
        %1424 = vmatprep.subr.mxu0 0.0
        %1425 = vmatpush1.msra.mxu0 0.0
        %1426 = vmatprep.subr.mxu0 0.0
        %1427 = vmatpush1.msra.mxu0 0.0
        %1428 = vmatprep.subr.mxu0 0.0
        %1429 = vmatpush1.msra.mxu0 0.0
        %1430 = vmatprep.subr.mxu0 0.0
        %1431 = vmatpush1.msra.mxu0 0.0
        %1432 = vmatprep.subr.mxu0 0.0
        %1433 = vmatpush1.msra.mxu0 0.0
        %1434 = vmatprep.subr.mxu0 0.0
        %1435 = vmatpush1.msra.mxu0 0.0
        %1436 = vmatprep.subr.mxu0 0.0
        %1437 = vmatpush1.msra.mxu0 0.0
        %1438 = vmatprep.subr.mxu0 0.0
        %1439 = vmatpush1.msra.mxu0 0.0
        %1440 = vmatprep.subr.mxu0 0.0
        %1441 = vmatpush1.msra.mxu0 0.0
        %1442 = vmatprep.subr.mxu0 0.0
        %1443 = vmatpush1.msra.mxu0 0.0
        %1444 = vmatprep.subr.mxu0 0.0
        %1445 = vmatpush1.msra.mxu0 0.0
        %1446 = vmatprep.subr.mxu0 0.0
        %1447 = vmatpush1.msra.mxu0 0.0
        %1448 = vmatprep.subr.mxu0 0.0
        %1449 = vmatpush1.msra.mxu0 0.0
        %1450 = vmatprep.mubr.f32.mxu0 0.0
        %1451 = vmatmul.mubr.f32.gmra.mrb[0].mxu0 %v1381
        %v1452 = vpop.f32.mrb[0].mxu0
        %v1453 = vadd.f32 0.0, %v1452
        %v1454 = vpop.f32.mrb[0].mxu0
        %1455 = vmatprep.mubr.f32.mxu0 0.0
        %1456 = vmatmul.mubr.f32.gmra.mrb[0].mxu0 %v1384
        %v1457 = vpop.f32.mrb[0].mxu0
        %v1458 = vadd.f32 0.0, %v1457
        %v1459 = vpop.f32.mrb[0].mxu0
        %1460 = vdwg.mxu0
        %v1461 = vadd.f32 %v412, %v1453
        %v1462 = vadd.f32 %v413, %v1458
        %v1463 = vld [vmem:[%s5] sm:$0x1]
        %v1465 = vlaneseq
        %v1466 = vshrl.u32 %v1465, 7
        %v1467 = vsub.s32 0, %v1466
        %v1468 = vrot.slane %v1463, %v1467
        %v1470 = vadd.f32 %v1461, %v1468
        %v1471 = vadd.f32 %v1462, %v1468
        %v1472 = vld [vmem:[%s6] sm:$0x1]
        %v1473 = vld [vmem:[%s7] sm:$0x1]
        %v1474 = vsel %vm416, %v1470, 0.0
        %1475 = vadd.xlane.f32.xlu0 %v1474
        %v1476 = vpop.xlane.xlu0 %1475
        %v1477 = vsel %vm416, %v1471, 0.0
        %1478 = vadd.xlane.f32.xlu0 %v1477
        %v1479 = vpop.xlane.xlu0 %1478
        %v1480 = vmul.f32 %v1476, %v423
        %v1481 = vmul.f32 %v1479, %v423
        %v1482 = vsub.f32 %v1470, %v1480
        %v1483 = vsub.f32 %v1471, %v1481
        %v1484 = vmul.f32 %v1482, %v1482
        %v1485 = vmul.f32 %v1483, %v1483
        %v1486 = vsel %vm416, %v1484, 0.0
        %1487 = vadd.xlane.f32.xlu0 %v1486
        %v1488 = vpop.xlane.xlu0 %1487
        %v1489 = vsel %vm416, %v1485, 0.0
        %1490 = vadd.xlane.f32.xlu0 %v1489
        %v1491 = vpop.xlane.xlu0 %1490
        %v1492 = vmul.f32 %v1488, %v423
        %v1493 = vmul.f32 %v1491, %v423
        %v1494 = vadd.f32 %v1492, 1e-05
        %v1495 = vadd.f32 %v1493, 1e-05
        %v1496 = vrsqrt.pop %v1494
        %v1497 = vrsqrt.pop %v1495
        %v1498 = vmul.f32 %v1482, %v1496
        %v1499 = vmul.f32 %v1483, %v1497
        %v1501 = vlaneseq
        %v1502 = vshrl.u32 %v1501, 7
        %v1503 = vsub.s32 0, %v1502
        %v1504 = vrot.slane %v1472, %v1503
        %v1506 = vmul.f32 %v1498, %v1504
        %v1507 = vmul.f32 %v1499, %v1504
        %v1509 = vlaneseq
        %v1510 = vshrl.u32 %v1509, 7
        %v1511 = vsub.s32 0, %v1510
        %v1512 = vrot.slane %v1473, %v1511
        %v1514 = vadd.f32 %v1506, %v1512
        %v1515 = vadd.f32 %v1507, %v1512
        %v1516 = vld [vmem:[%s8] sm:$0xff]
        %v1517 = vld [vmem:[%s8 + $0x8] sm:$0xff]
        %v1518 = vld [vmem:[%s8 + $0x10] sm:$0xff]
        %v1519 = vld [vmem:[%s8 + $0x18] sm:$0xff]
        %v1520 = vld [vmem:[%s9] sm:$0x1]
        %v1522 = vlaneseq
        %v1523 = vshrl.u32 %v1522, 7
        %v1524 = vsub.s32 0, %v1523
        %v1525 = vrot.slane %v1520, %v1524
        %v1528 = vsel %vm416, %v1514, 0
        %v1531 = vsel %vm416, %v1515, 0
        %1533 = vmatprep.subr.mxu0 0.0
        %1534 = vmatpush1.msra.mxu0 %v1516
        %1535 = vmatprep.subr.mxu0 0.0
        %1536 = vmatpush1.msra.mxu0 %v1517
        %1537 = vmatprep.subr.mxu0 0.0
        %1538 = vmatpush1.msra.mxu0 %v1518
        %1539 = vmatprep.subr.mxu0 0.0
        %1540 = vmatpush1.msra.mxu0 %v1519
        %1541 = vmatprep.subr.mxu0 0.0
        %1542 = vmatpush1.msra.mxu0 0.0
        %1543 = vmatprep.subr.mxu0 0.0
        %1544 = vmatpush1.msra.mxu0 0.0
        %1545 = vmatprep.subr.mxu0 0.0
        %1546 = vmatpush1.msra.mxu0 0.0
        %1547 = vmatprep.subr.mxu0 0.0
        %1548 = vmatpush1.msra.mxu0 0.0
        %1549 = vmatprep.subr.mxu0 0.0
        %1550 = vmatpush1.msra.mxu0 0.0
        %1551 = vmatprep.subr.mxu0 0.0
        %1552 = vmatpush1.msra.mxu0 0.0
        %1553 = vmatprep.subr.mxu0 0.0
        %1554 = vmatpush1.msra.mxu0 0.0
        %1555 = vmatprep.subr.mxu0 0.0
        %1556 = vmatpush1.msra.mxu0 0.0
        %1557 = vmatprep.subr.mxu0 0.0
        %1558 = vmatpush1.msra.mxu0 0.0
        %1559 = vmatprep.subr.mxu0 0.0
        %1560 = vmatpush1.msra.mxu0 0.0
        %1561 = vmatprep.subr.mxu0 0.0
        %1562 = vmatpush1.msra.mxu0 0.0
        %1563 = vmatprep.subr.mxu0 0.0
        %1564 = vmatpush1.msra.mxu0 0.0
        %1565 = vmatprep.subr.mxu0 0.0
        %1566 = vmatpush1.msra.mxu0 0.0
        %1567 = vmatprep.subr.mxu0 0.0
        %1568 = vmatpush1.msra.mxu0 0.0
        %1569 = vmatprep.subr.mxu0 0.0
        %1570 = vmatpush1.msra.mxu0 0.0
        %1571 = vmatprep.subr.mxu0 0.0
        %1572 = vmatpush1.msra.mxu0 0.0
        %1573 = vmatprep.subr.mxu0 0.0
        %1574 = vmatpush1.msra.mxu0 0.0
        %1575 = vmatprep.subr.mxu0 0.0
        %1576 = vmatpush1.msra.mxu0 0.0
        %1577 = vmatprep.subr.mxu0 0.0
        %1578 = vmatpush1.msra.mxu0 0.0
        %1579 = vmatprep.subr.mxu0 0.0
        %1580 = vmatpush1.msra.mxu0 0.0
        %1581 = vmatprep.subr.mxu0 0.0
        %1582 = vmatpush1.msra.mxu0 0.0
        %1583 = vmatprep.subr.mxu0 0.0
        %1584 = vmatpush1.msra.mxu0 0.0
        %1585 = vmatprep.subr.mxu0 0.0
        %1586 = vmatpush1.msra.mxu0 0.0
        %1587 = vmatprep.subr.mxu0 0.0
        %1588 = vmatpush1.msra.mxu0 0.0
        %1589 = vmatprep.subr.mxu0 0.0
        %1590 = vmatpush1.msra.mxu0 0.0
        %1591 = vmatprep.subr.mxu0 0.0
        %1592 = vmatpush1.msra.mxu0 0.0
        %1593 = vmatprep.subr.mxu0 0.0
        %1594 = vmatpush1.msra.mxu0 0.0
        %1595 = vmatprep.subr.mxu0 0.0
        %1596 = vmatpush1.msra.mxu0 0.0
        %1597 = vmatprep.mubr.f32.mxu0 0.0
        %1598 = vmatmul.mubr.f32.gmra.mrb[0].mxu0 %v1528
        %v1599 = vpop.f32.mrb[0].mxu0
        %v1600 = vadd.f32 %v1525, %v1599
        %v1601 = vpop.f32.mrb[0].mxu0
        %1602 = vmatprep.mubr.f32.mxu0 0.0
        %1603 = vmatmul.mubr.f32.gmra.mrb[0].mxu0 %v1531
        %v1604 = vpop.f32.mrb[0].mxu0
        %v1605 = vadd.f32 %v1525, %v1604
        %v1606 = vpop.f32.mrb[0].mxu0
        %1607 = vdwg.mxu0
        %v1608 = vmul.f32 %v1600, 0.5
        %v1609 = vmul.f32 %v1605, 0.5
        %v1610 = vmul.f32 %v1600, %v1600
        %v1611 = vmul.f32 %v1605, %v1605
        %v1612 = vmul.f32 %v1610, %v1600
        %v1613 = vmul.f32 %v1611, %v1605
        %v1614 = vmul.f32 %v1612, 0.044715
        %v1615 = vmul.f32 %v1613, 0.044715
        %v1616 = vadd.f32 %v1600, %v1614
        %v1617 = vadd.f32 %v1605, %v1615
        %v1618 = vmul.f32 %v1616, 0.7978846
        %v1619 = vmul.f32 %v1617, 0.7978846
        %v1620 = vtanh.pop %v1618
        %v1621 = vtanh.pop %v1619
        %v1622 = vadd.f32 %v1620, 1.0
        %v1623 = vadd.f32 %v1621, 1.0
        %v1624 = vmul.f32 %v1608, %v1622
        %v1625 = vmul.f32 %v1609, %v1623
        %v1626 = vld [vmem:[%s10] sm:$0xff]
        %v1627 = vld [vmem:[%s10 + $0x8] sm:$0xff]
        %v1628 = vld [vmem:[%s10 + $0x10] sm:$0xff]
        %v1629 = vld [vmem:[%s10 + $0x18] sm:$0xff]
        %v1630 = vld [vmem:[%s10 + $0x20] sm:$0xff]
        %v1631 = vld [vmem:[%s10 + $0x28] sm:$0xff]
        %v1632 = vld [vmem:[%s10 + $0x30] sm:$0xff]
        %v1633 = vld [vmem:[%s10 + $0x38] sm:$0xff]
        %v1634 = vld [vmem:[%s10 + $0x40] sm:$0xff]
        %v1635 = vld [vmem:[%s10 + $0x48] sm:$0xff]
        %v1636 = vld [vmem:[%s10 + $0x50] sm:$0xff]
        %v1637 = vld [vmem:[%s10 + $0x58] sm:$0xff]
        %v1638 = vld [vmem:[%s10 + $0x60] sm:$0xff]
        %v1639 = vld [vmem:[%s10 + $0x68] sm:$0xff]
        %v1640 = vld [vmem:[%s10 + $0x70] sm:$0xff]
        %v1641 = vld [vmem:[%s10 + $0x78] sm:$0xff]
        %v1642 = vld [vmem:[%s11] sm:$0x1]
        %v1644 = vlaneseq
        %v1645 = vshrl.u32 %v1644, 7
        %v1646 = vsub.s32 0, %v1645
        %v1647 = vrot.slane %v1642, %v1646
        %1649 = vmatprep.subr.mxu0 0.0
        %1650 = vmatpush1.msra.mxu0 %v1626
        %1651 = vmatprep.subr.mxu0 0.0
        %1652 = vmatpush1.msra.mxu0 %v1627
        %1653 = vmatprep.subr.mxu0 0.0
        %1654 = vmatpush1.msra.mxu0 %v1628
        %1655 = vmatprep.subr.mxu0 0.0
        %1656 = vmatpush1.msra.mxu0 %v1629
        %1657 = vmatprep.subr.mxu0 0.0
        %1658 = vmatpush1.msra.mxu0 %v1630
        %1659 = vmatprep.subr.mxu0 0.0
        %1660 = vmatpush1.msra.mxu0 %v1631
        %1661 = vmatprep.subr.mxu0 0.0
        %1662 = vmatpush1.msra.mxu0 %v1632
        %1663 = vmatprep.subr.mxu0 0.0
        %1664 = vmatpush1.msra.mxu0 %v1633
        %1665 = vmatprep.subr.mxu0 0.0
        %1666 = vmatpush1.msra.mxu0 %v1634
        %1667 = vmatprep.subr.mxu0 0.0
        %1668 = vmatpush1.msra.mxu0 %v1635
        %1669 = vmatprep.subr.mxu0 0.0
        %1670 = vmatpush1.msra.mxu0 %v1636
        %1671 = vmatprep.subr.mxu0 0.0
        %1672 = vmatpush1.msra.mxu0 %v1637
        %1673 = vmatprep.subr.mxu0 0.0
        %1674 = vmatpush1.msra.mxu0 %v1638
        %1675 = vmatprep.subr.mxu0 0.0
        %1676 = vmatpush1.msra.mxu0 %v1639
        %1677 = vmatprep.subr.mxu0 0.0
        %1678 = vmatpush1.msra.mxu0 %v1640
        %1679 = vmatprep.subr.mxu0 0.0
        %1680 = vmatpush1.msra.mxu0 %v1641
        %1681 = vmatprep.subr.mxu0 0.0
        %1682 = vmatpush1.msra.mxu0 0.0
        %1683 = vmatprep.subr.mxu0 0.0
        %1684 = vmatpush1.msra.mxu0 0.0
        %1685 = vmatprep.subr.mxu0 0.0
        %1686 = vmatpush1.msra.mxu0 0.0
        %1687 = vmatprep.subr.mxu0 0.0
        %1688 = vmatpush1.msra.mxu0 0.0
        %1689 = vmatprep.subr.mxu0 0.0
        %1690 = vmatpush1.msra.mxu0 0.0
        %1691 = vmatprep.subr.mxu0 0.0
        %1692 = vmatpush1.msra.mxu0 0.0
        %1693 = vmatprep.subr.mxu0 0.0
        %1694 = vmatpush1.msra.mxu0 0.0
        %1695 = vmatprep.subr.mxu0 0.0
        %1696 = vmatpush1.msra.mxu0 0.0
        %1697 = vmatprep.subr.mxu0 0.0
        %1698 = vmatpush1.msra.mxu0 0.0
        %1699 = vmatprep.subr.mxu0 0.0
        %1700 = vmatpush1.msra.mxu0 0.0
        %1701 = vmatprep.subr.mxu0 0.0
        %1702 = vmatpush1.msra.mxu0 0.0
        %1703 = vmatprep.subr.mxu0 0.0
        %1704 = vmatpush1.msra.mxu0 0.0
        %1705 = vmatprep.subr.mxu0 0.0
        %1706 = vmatpush1.msra.mxu0 0.0
        %1707 = vmatprep.subr.mxu0 0.0
        %1708 = vmatpush1.msra.mxu0 0.0
        %1709 = vmatprep.subr.mxu0 0.0
        %1710 = vmatpush1.msra.mxu0 0.0
        %1711 = vmatprep.subr.mxu0 0.0
        %1712 = vmatpush1.msra.mxu0 0.0
        %1713 = vmatprep.mubr.f32.mxu0 0.0
        %1714 = vmatmul.mubr.f32.gmra.mrb[0].mxu0 %v1624
        %v1715 = vpop.f32.mrb[0].mxu0
        %v1716 = vadd.f32 %v1647, %v1715
        %v1717 = vpop.f32.mrb[0].mxu0
        %1718 = vmatprep.mubr.f32.mxu0 0.0
        %1719 = vmatmul.mubr.f32.gmra.mrb[0].mxu0 %v1625
        %v1720 = vpop.f32.mrb[0].mxu0
        %v1721 = vadd.f32 %v1647, %v1720
        %v1722 = vpop.f32.mrb[0].mxu0
        %1723 = vdwg.mxu0
        %v1724 = vadd.f32 %v1470, %v1716
        %v1725 = vadd.f32 %v1471, %v1721
        %1726 = vst.msk [vmem:[%s406] sm:$0xff] %vm416, %v1724
        %1727 = vst.msk [vmem:[%s406 + $0x8] sm:$0xff] %vm416, %v1725
        %s1728 = sand.u32 %s291, 1
        %s1729 = scalar_lea.sflag [#allocation3], %s1728
        %s1730 = sand.u32 %s291, 1
        %s1731 = smul.addr %s1730, 16
        %s1732 = scalar_lea.vmem [#allocation2], %s1731
        // Predicated region
        $region69: #{tpu_custom_call.1} parent=67 // pred_check
          %p1733 = pneg %p301
        $region70: #{tpu_custom_call.1} parent=67 // pred_check_branch
          %1735 = sbr.rel (%p1733) target = $region72
        $region71: #{tpu_custom_call.1} parent=67 // pred_region
          %s1737 = ssub.s32 256, 256
          %1738 = vsyncadd %s1729, %s1737
          %s1739 = smul.addr %s26, 2
          %s1740 = smul.addr %s1739, 128
          %s1741 = scalar_lea.hbm %s12, %s1740
          %s1742 = sshll.u32 %s1732, 4
          %s1743 = int_to_ptr.vmem [resolvable:$true] %s1742
          %1748 = dma.vmem_to_hbm [thread:$0]  %s1743, 256, %s1741, %s1729, 128, 128, 8
        $region72: #{tpu_custom_call.1} parent=67 // pred_fallthru
          _
      $region68: #{tpu_custom_call.1} parent=5 // pred_fallthru
        _
      %p1749 = scmp.le.s32.totalorder 2, %s21
      // Predicated region
      $region73: #{tpu_custom_call.1} parent=5 // pred_check
        %p1750 = pneg %p1749
      $region74: #{tpu_custom_call.1} parent=5 // pred_check_branch
        %1752 = sbr.rel (%p1750) target = $region76
      $region75: #{tpu_custom_call.1} parent=5 // pred_region
        %s1753 = ssub.s32 %s21, 2
        // Predicated region
        $region77: #{tpu_custom_call.1} parent=75 // pred_check
          %p1754 = pneg %p307
        $region78: #{tpu_custom_call.1} parent=75 // pred_check_branch
          %1756 = sbr.rel (%p1754) target = $region80
        $region79: #{tpu_custom_call.1} parent=75 // pred_region
          %s1757 = sand.u32 %s292, 1
          %s1758 = scalar_lea.sflag [#allocation3], %s1757
          %s1759 = sand.u32 %s292, 1
          %s1760 = smul.addr %s1759, 16
          %s1761 = scalar_lea.vmem [#allocation2], %s1760
          %1762 = dma.done %s1758, 256
        $region80: #{tpu_custom_call.1} parent=75 // pred_fallthru
          _
      $region76: #{tpu_custom_call.1} parent=5 // pred_fallthru
        _
    $region6: #{tpu_custom_call.1} parent=1 // loop_footer
      %s25 = sadd.s32 1, %s21
    $region7: #{tpu_custom_call.1} parent=1 // loop_footer_branch
      %20 = sbr.rel target = $region3
    $region8: #{tpu_custom_call.1} parent=1 // loop_exit
      _
    %1763 = vsyncpa [#allocation3], 1
    %s1764 = scalar_lea.sflag [#allocation3], 1
    %1765 = vsyncpa %s1764, 1

// kernel: tpu_custom_call.1
$region0: #{tpu_custom_call.1}
  #allocation0 [shape = 'u32[]', space=smem, size = 0x4, offset = 0x4, fixed_abs, tag = 'smem constant byte address 0x4 - core index']
  #allocation1 [shape = 'u32[144,128]{1,0:T(1,128)}', space=vmem, size = 0x12000, scoped, tag = 'internal scratch']
  %s0 = inlined_call_operand.vmem [shape: f32[2,16,32], index: 0, kind: input, shape index: {}]
  %s1 = inlined_call_operand.vmem [shape: f32[1,32], index: 1, kind: input, shape index: {}]
  %s2 = inlined_call_operand.vmem [shape: f32[1,32], index: 2, kind: input, shape index: {}]
  %s3 = inlined_call_operand.vmem [shape: f32[32,96], index: 3, kind: input, shape index: {}]
  %s4 = inlined_call_operand.vmem [shape: f32[32,32], index: 4, kind: input, shape index: {}]
  %s5 = inlined_call_operand.vmem [shape: f32[1,32], index: 5, kind: input, shape index: {}]
  %s6 = inlined_call_operand.vmem [shape: f32[1,32], index: 6, kind: input, shape index: {}]
  %s7 = inlined_call_operand.vmem [shape: f32[1,32], index: 7, kind: input, shape index: {}]
  %s8 = inlined_call_operand.vmem [shape: f32[32,128], index: 8, kind: input, shape index: {}]
  %s9 = inlined_call_operand.vmem [shape: f32[1,128], index: 9, kind: input, shape index: {}]
  %s10 = inlined_call_operand.vmem [shape: f32[128,32], index: 10, kind: input, shape index: {}]
  %s11 = inlined_call_operand.vmem [shape: f32[1,32], index: 11, kind: input, shape index: {}]
  %s12 = inlined_call_operand.hbm [shape: f32[2,16,32], index: 12, kind: output, shape index: {}]
  %s13 = sld [smem:[#allocation0]]
  $region81: #{tpu_custom_call.1} parent=0
    _
  %s15 = ssub.s32 1, %s13
  %s16 = scalar_select 0, %s15, %s13
  $region1: #{tpu_custom_call.1} parent=0
    #allocation2 [shape = 'u8[16384]{0}', space=vmem, size = 0x4000, scoped, tag = 'output window, operand 0']
    #allocation3 [shape = 's32[2]{0}', space=sflag, size = 0x8, scoped, tag = 'scoped memory for tpu_custom_call.1']
    %17 = vsyncpa [#allocation3], 0
    %s18 = scalar_lea.sflag [#allocation3], 1
    %19 = vsyncpa %s18, 0
    loop: start=0, step=1, limit=4
    $region2: #{tpu_custom_call.1} parent=1 // loop_pre_header
      _
    $region3: #{tpu_custom_call.1} parent=1 // loop_header
      %s21 = sphi 0, %s25
      %p22 = scmp.ge.s32.totalorder %s21, 4
      %s31 = sphi 0, %s33
      %s34 = sphi 0, %s31
      %s35 = sphi 0, %s34
      %s51 = sphi 0, %s35
      %s55 = sphi 0, %s55
      %s57 = sphi 0, %s55
      %s58 = sphi 0, %s57
      %s72 = sphi 0, %s58
      %s76 = sphi 0, %s76
      %s78 = sphi 0, %s76
      %s79 = sphi 0, %s78
      %s93 = sphi 0, %s79
      %s97 = sphi 0, %s97
      %s99 = sphi 0, %s97
      %s100 = sphi 0, %s99
      %s114 = sphi 0, %s100
      %s118 = sphi 0, %s118
      %s120 = sphi 0, %s118
      %s121 = sphi 0, %s120
      %s135 = sphi 0, %s121
      %s139 = sphi 0, %s139
      %s141 = sphi 0, %s139
      %s142 = sphi 0, %s141
      %s156 = sphi 0, %s142
      %s160 = sphi 0, %s160
      %s162 = sphi 0, %s160
      %s163 = sphi 0, %s162
      %s177 = sphi 0, %s163
      %s181 = sphi 0, %s181
      %s183 = sphi 0, %s181
      %s184 = sphi 0, %s183
      %s198 = sphi 0, %s184
      %s202 = sphi 0, %s202
      %s204 = sphi 0, %s202
      %s205 = sphi 0, %s204
      %s219 = sphi 0, %s205
      %s223 = sphi 0, %s223
      %s225 = sphi 0, %s223
      %s226 = sphi 0, %s225
      %s240 = sphi 0, %s226
      %s244 = sphi 0, %s244
      %s246 = sphi 0, %s244
      %s247 = sphi 0, %s246
      %s261 = sphi 0, %s247
      %s265 = sphi 0, %s265
      %s267 = sphi 0, %s265
      %s268 = sphi 0, %s267
      %s282 = sphi 0, %s268
      %s288 = sphi 0, %s290
      %s291 = sphi 0, %s288
      %s292 = sphi 0, %s291
      %s308 = sphi 0, %s292
    $region4: #{tpu_custom_call.1} parent=1 // loop_header_branch
      %24 = sbr.rel (%p22) target = $region8
    $region5: #{tpu_custom_call.1} parent=1 // loop_body
      %s26 = ssub.s32 %s21, 1
      %s27 = ssub.s32 %s21, 2
      %s28 = sadd.s32 %s21, 1
      %s29 = ssub.s32 %s21, %s28
      %p30 = scmp.eq.s32.totalorder %s29, 0
      %s32 = sadd.s32 %s31, 1
      %s33 = scalar_select %p30, %s31, %s32
      %p36 = pneg %p30
      %p37 = scmp.eq.s32.totalorder %s21, 1
      %p38 = por %p36, %p37
      %p39 = scmp.ne.s32.totalorder %s31, %s34
      %p40 = scmp.eq.s32.totalorder %s21, 0
      %p41 = por %p39, %p40
      %p42 = scmp.ne.s32.totalorder %s31, %s34
      %p43 = scmp.eq.s32.totalorder %s26, 1
      %p44 = por %p42, %p43
      %p45 = scmp.ne.s32.totalorder %s34, %s35
      %p46 = scmp.eq.s32.totalorder %s26, 0
      %p47 = por %p45, %p46
      %p48 = scmp.ne.s32.totalorder %s34, %s35
      %p49 = scmp.eq.s32.totalorder %s27, 1
      %p50 = por %p48, %p49
      %p52 = scmp.ne.s32.totalorder %s35, %s51
      %p53 = scmp.eq.s32.totalorder %s27, 0
      %p54 = por %p52, %p53
      %s56 = sadd.s32 %s55, 1
      %p59 = scmp.eq.s32.totalorder %s21, 1
      %p60 = scmp.ne.s32.totalorder %s55, %s57
      %p61 = scmp.eq.s32.totalorder %s21, 0
      %p62 = por %p60, %p61
      %p63 = scmp.ne.s32.totalorder %s55, %s57
      %p64 = scmp.eq.s32.totalorder %s26, 1
      %p65 = por %p63, %p64
      %p66 = scmp.ne.s32.totalorder %s57, %s58
      %p67 = scmp.eq.s32.totalorder %s26, 0
      %p68 = por %p66, %p67
      %p69 = scmp.ne.s32.totalorder %s57, %s58
      %p70 = scmp.eq.s32.totalorder %s27, 1
      %p71 = por %p69, %p70
      %p73 = scmp.ne.s32.totalorder %s58, %s72
      %p74 = scmp.eq.s32.totalorder %s27, 0
      %p75 = por %p73, %p74
      %s77 = sadd.s32 %s76, 1
      %p80 = scmp.eq.s32.totalorder %s21, 1
      %p81 = scmp.ne.s32.totalorder %s76, %s78
      %p82 = scmp.eq.s32.totalorder %s21, 0
      %p83 = por %p81, %p82
      %p84 = scmp.ne.s32.totalorder %s76, %s78
      %p85 = scmp.eq.s32.totalorder %s26, 1
      %p86 = por %p84, %p85
      %p87 = scmp.ne.s32.totalorder %s78, %s79
      %p88 = scmp.eq.s32.totalorder %s26, 0
      %p89 = por %p87, %p88
      %p90 = scmp.ne.s32.totalorder %s78, %s79
      %p91 = scmp.eq.s32.totalorder %s27, 1
      %p92 = por %p90, %p91
      %p94 = scmp.ne.s32.totalorder %s79, %s93
      %p95 = scmp.eq.s32.totalorder %s27, 0
      %p96 = por %p94, %p95
      %s98 = sadd.s32 %s97, 1
      %p101 = scmp.eq.s32.totalorder %s21, 1
      %p102 = scmp.ne.s32.totalorder %s97, %s99
      %p103 = scmp.eq.s32.totalorder %s21, 0
      %p104 = por %p102, %p103
      %p105 = scmp.ne.s32.totalorder %s97, %s99
      %p106 = scmp.eq.s32.totalorder %s26, 1
      %p107 = por %p105, %p106
      %p108 = scmp.ne.s32.totalorder %s99, %s100
      %p109 = scmp.eq.s32.totalorder %s26, 0
      %p110 = por %p108, %p109
      %p111 = scmp.ne.s32.totalorder %s99, %s100
      %p112 = scmp.eq.s32.totalorder %s27, 1
      %p113 = por %p111, %p112
      %p115 = scmp.ne.s32.totalorder %s100, %s114
      %p116 = scmp.eq.s32.totalorder %s27, 0
      %p117 = por %p115, %p116
      %s119 = sadd.s32 %s118, 1
      %p122 = scmp.eq.s32.totalorder %s21, 1
      %p123 = scmp.ne.s32.totalorder %s118, %s120
      %p124 = scmp.eq.s32.totalorder %s21, 0
      %p125 = por %p123, %p124
      %p126 = scmp.ne.s32.totalorder %s118, %s120
      %p127 = scmp.eq.s32.totalorder %s26, 1
      %p128 = por %p126, %p127
      %p129 = scmp.ne.s32.totalorder %s120, %s121
      %p130 = scmp.eq.s32.totalorder %s26, 0
      %p131 = por %p129, %p130
      %p132 = scmp.ne.s32.totalorder %s120, %s121
      %p133 = scmp.eq.s32.totalorder %s27, 1
      %p134 = por %p132, %p133
      %p136 = scmp.ne.s32.totalorder %s121, %s135
      %p137 = scmp.eq.s32.totalorder %s27, 0
      %p138 = por %p136, %p137
      %s140 = sadd.s32 %s139, 1
      %p143 = scmp.eq.s32.totalorder %s21, 1
      %p144 = scmp.ne.s32.totalorder %s139, %s141
      %p145 = scmp.eq.s32.totalorder %s21, 0
      %p146 = por %p144, %p145
      %p147 = scmp.ne.s32.totalorder %s139, %s141
      %p148 = scmp.eq.s32.totalorder %s26, 1
      %p149 = por %p147, %p148
      %p150 = scmp.ne.s32.totalorder %s141, %s142
      %p151 = scmp.eq.s32.totalorder %s26, 0
      %p152 = por %p150, %p151
      %p153 = scmp.ne.s32.totalorder %s141, %s142
      %p154 = scmp.eq.s32.totalorder %s27, 1
      %p155 = por %p153, %p154
      %p157 = scmp.ne.s32.totalorder %s142, %s156
      %p158 = scmp.eq.s32.totalorder %s27, 0
      %p159 = por %p157, %p158
      %s161 = sadd.s32 %s160, 1
      %p164 = scmp.eq.s32.totalorder %s21, 1
      %p165 = scmp.ne.s32.totalorder %s160, %s162
      %p166 = scmp.eq.s32.totalorder %s21, 0
      %p167 = por %p165, %p166
      %p168 = scmp.ne.s32.totalorder %s160, %s162
      %p169 = scmp.eq.s32.totalorder %s26, 1
      %p170 = por %p168, %p169
      %p171 = scmp.ne.s32.totalorder %s162, %s163
      %p172 = scmp.eq.s32.totalorder %s26, 0
      %p173 = por %p171, %p172
      %p174 = scmp.ne.s32.totalorder %s162, %s163
      %p175 = scmp.eq.s32.totalorder %s27, 1
      %p176 = por %p174, %p175
      %p178 = scmp.ne.s32.totalorder %s163, %s177
      %p179 = scmp.eq.s32.totalorder %s27, 0
      %p180 = por %p178, %p179
      %s182 = sadd.s32 %s181, 1
      %p185 = scmp.eq.s32.totalorder %s21, 1
      %p186 = scmp.ne.s32.totalorder %s181, %s183
      %p187 = scmp.eq.s32.totalorder %s21, 0
      %p188 = por %p186, %p187
      %p189 = scmp.ne.s32.totalorder %s181, %s183
      %p190 = scmp.eq.s32.totalorder %s26, 1
      %p191 = por %p189, %p190
      %p192 = scmp.ne.s32.totalorder %s183, %s184
      %p193 = scmp.eq.s32.totalorder %s26, 0
      %p194 = por %p192, %p193
      %p195 = scmp.ne.s32.totalorder %s183, %s184
      %p196 = scmp.eq.s32.totalorder %s27, 1
      %p197 = por %p195, %p196
      %p199 = scmp.ne.s32.totalorder %s184, %s198
      %p200 = scmp.eq.s32.totalorder %s27, 0
      %p201 = por %p199, %p200
      %s203 = sadd.s32 %s202, 1
      %p206 = scmp.eq.s32.totalorder %s21, 1
      %p207 = scmp.ne.s32.totalorder %s202, %s204
      %p208 = scmp.eq.s32.totalorder %s21, 0
      %p209 = por %p207, %p208
      %p210 = scmp.ne.s32.totalorder %s202, %s204
      %p211 = scmp.eq.s32.totalorder %s26, 1
      %p212 = por %p210, %p211
      %p213 = scmp.ne.s32.totalorder %s204, %s205
      %p214 = scmp.eq.s32.totalorder %s26, 0
      %p215 = por %p213, %p214
      %p216 = scmp.ne.s32.totalorder %s204, %s205
      %p217 = scmp.eq.s32.totalorder %s27, 1
      %p218 = por %p216, %p217
      %p220 = scmp.ne.s32.totalorder %s205, %s219
      %p221 = scmp.eq.s32.totalorder %s27, 0
      %p222 = por %p220, %p221
      %s224 = sadd.s32 %s223, 1
      %p227 = scmp.eq.s32.totalorder %s21, 1
      %p228 = scmp.ne.s32.totalorder %s223, %s225
      %p229 = scmp.eq.s32.totalorder %s21, 0
      %p230 = por %p228, %p229
      %p231 = scmp.ne.s32.totalorder %s223, %s225
      %p232 = scmp.eq.s32.totalorder %s26, 1
      %p233 = por %p231, %p232
      %p234 = scmp.ne.s32.totalorder %s225, %s226
      %p235 = scmp.eq.s32.totalorder %s26, 0
      %p236 = por %p234, %p235
      %p237 = scmp.ne.s32.totalorder %s225, %s226
      %p238 = scmp.eq.s32.totalorder %s27, 1
      %p239 = por %p237, %p238
      %p241 = scmp.ne.s32.totalorder %s226, %s240
      %p242 = scmp.eq.s32.totalorder %s27, 0
      %p243 = por %p241, %p242
      %s245 = sadd.s32 %s244, 1
      %p248 = scmp.eq.s32.totalorder %s21, 1
      %p249 = scmp.ne.s32.totalorder %s244, %s246
      %p250 = scmp.eq.s32.totalorder %s21, 0
      %p251 = por %p249, %p250
      %p252 = scmp.ne.s32.totalorder %s244, %s246
      %p253 = scmp.eq.s32.totalorder %s26, 1
      %p254 = por %p252, %p253
      %p255 = scmp.ne.s32.totalorder %s246, %s247
      %p256 = scmp.eq.s32.totalorder %s26, 0
      %p257 = por %p255, %p256
      %p258 = scmp.ne.s32.totalorder %s246, %s247
      %p259 = scmp.eq.s32.totalorder %s27, 1
      %p260 = por %p258, %p259
      %p262 = scmp.ne.s32.totalorder %s247, %s261
      %p263 = scmp.eq.s32.totalorder %s27, 0
      %p264 = por %p262, %p263
      %s266 = sadd.s32 %s265, 1
      %p269 = scmp.eq.s32.totalorder %s21, 1
      %p270 = scmp.ne.s32.totalorder %s265, %s267
      %p271 = scmp.eq.s32.totalorder %s21, 0
      %p272 = por %p270, %p271
      %p273 = scmp.ne.s32.totalorder %s265, %s267
      %p274 = scmp.eq.s32.totalorder %s26, 1
      %p275 = por %p273, %p274
      %p276 = scmp.ne.s32.totalorder %s267, %s268
      %p277 = scmp.eq.s32.totalorder %s26, 0
      %p278 = por %p276, %p277
      %p279 = scmp.ne.s32.totalorder %s267, %s268
      %p280 = scmp.eq.s32.totalorder %s27, 1
      %p281 = por %p279, %p280
      %p283 = scmp.ne.s32.totalorder %s268, %s282
      %p284 = scmp.eq.s32.totalorder %s27, 0
      %p285 = por %p283, %p284
      %s286 = ssub.s32 %s21, %s28
      %p287 = scmp.eq.s32.totalorder %s286, 0
      %s289 = sadd.s32 %s288, 1
      %s290 = scalar_select %p287, %s288, %s289
      %p293 = pneg %p287
      %p294 = scmp.eq.s32.totalorder %s21, 1
      %p295 = por %p293, %p294
      %p296 = scmp.ne.s32.totalorder %s288, %s291
      %p297 = scmp.eq.s32.totalorder %s21, 0
      %p298 = por %p296, %p297
      %p299 = scmp.ne.s32.totalorder %s288, %s291
      %p300 = scmp.eq.s32.totalorder %s26, 1
      %p301 = por %p299, %p300
      %p302 = scmp.ne.s32.totalorder %s291, %s292
      %p303 = scmp.eq.s32.totalorder %s26, 0
      %p304 = por %p302, %p303
      %p305 = scmp.ne.s32.totalorder %s291, %s292
      %p306 = scmp.eq.s32.totalorder %s27, 1
      %p307 = por %p305, %p306
      %p309 = scmp.ne.s32.totalorder %s292, %s308
      %p310 = scmp.eq.s32.totalorder %s27, 0
      %p311 = por %p309, %p310
      %p312 = scmp.le.s32.totalorder 1, %s21
      %p313 = scmp.lt.s32.totalorder %s21, 3
      %p314 = pnand %p312, %p313
      %p315 = pneg %p314
      // Predicated region
      $region9: #{tpu_custom_call.1} parent=5 // pred_check
        _
      $region10: #{tpu_custom_call.1} parent=5 // pred_check_branch
        %317 = sbr.rel (%p314) target = $region12
      $region11: #{tpu_custom_call.1} parent=5 // pred_region
        %s318 = ssub.s32 %s21, 1
        // Predicated region
        $region13: #{tpu_custom_call.1} parent=11 // pred_check
          %p319 = pneg %p68
        $region14: #{tpu_custom_call.1} parent=11 // pred_check_branch
          %321 = sbr.rel (%p319) target = $region16
        $region15: #{tpu_custom_call.1} parent=11 // pred_region
          _
        $region16: #{tpu_custom_call.1} parent=11 // pred_fallthru
          _
        // Predicated region
        $region17: #{tpu_custom_call.1} parent=11 // pred_check
          %p322 = pneg %p89
        $region18: #{tpu_custom_call.1} parent=11 // pred_check_branch
          %324 = sbr.rel (%p322) target = $region20
        $region19: #{tpu_custom_call.1} parent=11 // pred_region
          _
        $region20: #{tpu_custom_call.1} parent=11 // pred_fallthru
          _
        // Predicated region
        $region21: #{tpu_custom_call.1} parent=11 // pred_check
          %p325 = pneg %p110
        $region22: #{tpu_custom_call.1} parent=11 // pred_check_branch
          %327 = sbr.rel (%p325) target = $region24
        $region23: #{tpu_custom_call.1} parent=11 // pred_region
          _
        $region24: #{tpu_custom_call.1} parent=11 // pred_fallthru
          _
        // Predicated region
        $region25: #{tpu_custom_call.1} parent=11 // pred_check
          %p328 = pneg %p131
        $region26: #{tpu_custom_call.1} parent=11 // pred_check_branch
          %330 = sbr.rel (%p328) target = $region28
        $region27: #{tpu_custom_call.1} parent=11 // pred_region
          _
        $region28: #{tpu_custom_call.1} parent=11 // pred_fallthru
          _
        // Predicated region
        $region29: #{tpu_custom_call.1} parent=11 // pred_check
          %p331 = pneg %p152
        $region30: #{tpu_custom_call.1} parent=11 // pred_check_branch
          %333 = sbr.rel (%p331) target = $region32
        $region31: #{tpu_custom_call.1} parent=11 // pred_region
          _
        $region32: #{tpu_custom_call.1} parent=11 // pred_fallthru
          _
        // Predicated region
        $region33: #{tpu_custom_call.1} parent=11 // pred_check
          %p334 = pneg %p173
        $region34: #{tpu_custom_call.1} parent=11 // pred_check_branch
          %336 = sbr.rel (%p334) target = $region36
        $region35: #{tpu_custom_call.1} parent=11 // pred_region
          _
        $region36: #{tpu_custom_call.1} parent=11 // pred_fallthru
          _
        // Predicated region
        $region37: #{tpu_custom_call.1} parent=11 // pred_check
          %p337 = pneg %p194
        $region38: #{tpu_custom_call.1} parent=11 // pred_check_branch
          %339 = sbr.rel (%p337) target = $region40
        $region39: #{tpu_custom_call.1} parent=11 // pred_region
          _
        $region40: #{tpu_custom_call.1} parent=11 // pred_fallthru
          _
        // Predicated region
        $region41: #{tpu_custom_call.1} parent=11 // pred_check
          %p340 = pneg %p215
        $region42: #{tpu_custom_call.1} parent=11 // pred_check_branch
          %342 = sbr.rel (%p340) target = $region44
        $region43: #{tpu_custom_call.1} parent=11 // pred_region
          _
        $region44: #{tpu_custom_call.1} parent=11 // pred_fallthru
          _
        // Predicated region
        $region45: #{tpu_custom_call.1} parent=11 // pred_check
          %p343 = pneg %p236
        $region46: #{tpu_custom_call.1} parent=11 // pred_check_branch
          %345 = sbr.rel (%p343) target = $region48
        $region47: #{tpu_custom_call.1} parent=11 // pred_region
          _
        $region48: #{tpu_custom_call.1} parent=11 // pred_fallthru
          _
        // Predicated region
        $region49: #{tpu_custom_call.1} parent=11 // pred_check
          %p346 = pneg %p257
        $region50: #{tpu_custom_call.1} parent=11 // pred_check_branch
          %348 = sbr.rel (%p346) target = $region52
        $region51: #{tpu_custom_call.1} parent=11 // pred_region
          _
        $region52: #{tpu_custom_call.1} parent=11 // pred_fallthru
          _
        // Predicated region
        $region53: #{tpu_custom_call.1} parent=11 // pred_check
          %p349 = pneg %p278
        $region54: #{tpu_custom_call.1} parent=11 // pred_check_branch
          %351 = sbr.rel (%p349) target = $region56
        $region55: #{tpu_custom_call.1} parent=11 // pred_region
          _
        $region56: #{tpu_custom_call.1} parent=11 // pred_fallthru
          _
      $region12: #{tpu_custom_call.1} parent=5 // pred_fallthru
        _
      %p352 = scmp.lt.s32.totalorder %s21, 2
      // Predicated region
      $region57: #{tpu_custom_call.1} parent=5 // pred_check
        %p353 = pneg %p352
      $region58: #{tpu_custom_call.1} parent=5 // pred_check_branch
        %355 = sbr.rel (%p353) target = $region60
      $region59: #{tpu_custom_call.1} parent=5 // pred_region
        // Predicated region
        $region61: #{tpu_custom_call.1} parent=59 // pred_check
          %p356 = pneg %p41
        $region62: #{tpu_custom_call.1} parent=59 // pred_check_branch
          %358 = sbr.rel (%p356) target = $region64
        $region63: #{tpu_custom_call.1} parent=59 // pred_region
          %p359 = scmp.lt.s32.totalorder %s21, 1
          %s360 = scalar_select %p359, %s21, 1
          %s361 = smul.addr %s360, 2
          %s362 = smul.addr %s361, 8
          %s363 = scalar_lea.vmem %s0, %s362
        $region64: #{tpu_custom_call.1} parent=59 // pred_fallthru
          _
      $region60: #{tpu_custom_call.1} parent=5 // pred_fallthru
        _
      %p364 = scmp.le.s32.totalorder 1, %s21
      %p365 = scmp.lt.s32.totalorder %s21, 3
      %p366 = pnand %p364, %p365
      %p367 = pneg %p366
      // Predicated region
      $region65: #{tpu_custom_call.1} parent=5 // pred_check
        _
      $region66: #{tpu_custom_call.1} parent=5 // pred_check_branch
        %369 = sbr.rel (%p366) target = $region68
      $region67: #{tpu_custom_call.1} parent=5 // pred_region
        %s370 = ssub.s32 %s21, 1
        %p371 = scmp.lt.s32.totalorder %s26, 1
        %s372 = scalar_select %p371, %s26, 1
        %s373 = smul.addr %s372, 2
        %s374 = smul.addr %s373, 8
        %s375 = scalar_lea.vmem %s0, %s374
        %p376 = pneg %p47
        %p377 = pneg %p44
        %p378 = pneg %p68
        %p379 = pneg %p65
        %p380 = pneg %p89
        %p381 = pneg %p86
        %p382 = pneg %p110
        %p383 = pneg %p107
        %p384 = pneg %p131
        %p385 = pneg %p128
        %p386 = pneg %p152
        %p387 = pneg %p149
        %p388 = pneg %p173
        %p389 = pneg %p170
        %p390 = pneg %p194
        %p391 = pneg %p191
        %p392 = pneg %p215
        %p393 = pneg %p212
        %p394 = pneg %p236
        %p395 = pneg %p233
        %p396 = pneg %p257
        %p397 = pneg %p254
        %p398 = pneg %p278
        %p399 = pneg %p275
        %p400 = pneg %p304
        %p401 = pneg %p301
        %s402 = sand.u32 %s291, 1
        %s403 = scalar_lea.sflag [#allocation3], %s402
        %s404 = sand.u32 %s291, 1
        %s405 = smul.addr %s404, 16
        %s406 = scalar_lea.vmem [#allocation2], %s405
        %p407 = scmp.lt.s32.totalorder %s26, 1
        %s408 = scalar_select %p407, %s26, 1
        %s409 = smul.addr %s408, 2
        %s410 = smul.addr %s409, 8
        %s411 = scalar_lea.vmem %s0, %s410
        %v412 = vld [vmem:[%s411] sm:$0xff]
        %v413 = vld [vmem:[%s411 + $0x8] sm:$0xff]
        %v414 = vld [vmem:[%s1] sm:$0x1]
        %v415 = vld [vmem:[%s2] sm:$0x1]
        %vm416 = vcmask 261120
        %v417 = vsel %vm416, %v412, 0.0
        %418 = vadd.xlane.f32.xlu0 %v417
        %v419 = vpop.xlane.xlu0 %418
        %v420 = vsel %vm416, %v413, 0.0
        %421 = vadd.xlane.f32.xlu0 %v420
        %v422 = vpop.xlane.xlu0 %421
        %v423 = vrcp.pop 32.0
        %v424 = vmul.f32 %v419, %v423
        %v425 = vmul.f32 %v422, %v423
        %v426 = vsub.f32 %v412, %v424
        %v427 = vsub.f32 %v413, %v425
        %v428 = vmul.f32 %v426, %v426
        %v429 = vmul.f32 %v427, %v427
        %v430 = vsel %vm416, %v428, 0.0
        %431 = vadd.xlane.f32.xlu0 %v430
        %v432 = vpop.xlane.xlu0 %431
        %v433 = vsel %vm416, %v429, 0.0
        %434 = vadd.xlane.f32.xlu0 %v433
        %v435 = vpop.xlane.xlu0 %434
        %v436 = vmul.f32 %v432, %v423
        %v437 = vmul.f32 %v435, %v423
        %v438 = vadd.f32 %v436, 1e-05
        %v439 = vadd.f32 %v437, 1e-05
        %v440 = vrsqrt.pop %v438
        %v441 = vrsqrt.pop %v439
        %v442 = vmul.f32 %v426, %v440
        %v443 = vmul.f32 %v427, %v441
        %v445 = vlaneseq
        %v446 = vshrl.u32 %v445, 7
        %v447 = vsub.s32 0, %v446
        %v448 = vrot.slane %v414, %v447
        %v450 = vmul.f32 %v442, %v448
        %v451 = vmul.f32 %v443, %v448
        %v453 = vlaneseq
        %v454 = vshrl.u32 %v453, 7
        %v455 = vsub.s32 0, %v454
        %v456 = vrot.slane %v415, %v455
        %v458 = vadd.f32 %v450, %v456
        %v459 = vadd.f32 %v451, %v456
        %v460 = vld [vmem:[%s3] sm:$0xff]
        %v461 = vld [vmem:[%s3 + $0x8] sm:$0xff]
        %v462 = vld [vmem:[%s3 + $0x10] sm:$0xff]
        %v463 = vld [vmem:[%s3 + $0x18] sm:$0xff]
        %v465 = vsel %vm416, %v458, 0
        %v468 = vsel %vm416, %v459, 0
        %470 = vmatprep.subr.mxu0 0.0
        %471 = vmatpush1.msra.mxu0 %v460
        %472 = vmatprep.subr.mxu0 0.0
        %473 = vmatpush1.msra.mxu0 %v461
        %474 = vmatprep.subr.mxu0 0.0
        %475 = vmatpush1.msra.mxu0 %v462
        %476 = vmatprep.subr.mxu0 0.0
        %477 = vmatpush1.msra.mxu0 %v463
        %478 = vmatprep.subr.mxu0 0.0
        %479 = vmatpush1.msra.mxu0 0.0
        %480 = vmatprep.subr.mxu0 0.0
        %481 = vmatpush1.msra.mxu0 0.0
        %482 = vmatprep.subr.mxu0 0.0
        %483 = vmatpush1.msra.mxu0 0.0
        %484 = vmatprep.subr.mxu0 0.0
        %485 = vmatpush1.msra.mxu0 0.0
        %486 = vmatprep.subr.mxu0 0.0
        %487 = vmatpush1.msra.mxu0 0.0
        %488 = vmatprep.subr.mxu0 0.0
        %489 = vmatpush1.msra.mxu0 0.0
        %490 = vmatprep.subr.mxu0 0.0
        %491 = vmatpush1.msra.mxu0 0.0
        %492 = vmatprep.subr.mxu0 0.0
        %493 = vmatpush1.msra.mxu0 0.0
        %494 = vmatprep.subr.mxu0 0.0
        %495 = vmatpush1.msra.mxu0 0.0
        %496 = vmatprep.subr.mxu0 0.0
        %497 = vmatpush1.msra.mxu0 0.0
        %498 = vmatprep.subr.mxu0 0.0
        %499 = vmatpush1.msra.mxu0 0.0
        %500 = vmatprep.subr.mxu0 0.0
        %501 = vmatpush1.msra.mxu0 0.0
        %502 = vmatprep.subr.mxu0 0.0
        %503 = vmatpush1.msra.mxu0 0.0
        %504 = vmatprep.subr.mxu0 0.0
        %505 = vmatpush1.msra.mxu0 0.0
        %506 = vmatprep.subr.mxu0 0.0
        %507 = vmatpush1.msra.mxu0 0.0
        %508 = vmatprep.subr.mxu0 0.0
        %509 = vmatpush1.msra.mxu0 0.0
        %510 = vmatprep.subr.mxu0 0.0
        %511 = vmatpush1.msra.mxu0 0.0
        %512 = vmatprep.subr.mxu0 0.0
        %513 = vmatpush1.msra.mxu0 0.0
        %514 = vmatprep.subr.mxu0 0.0
        %515 = vmatpush1.msra.mxu0 0.0
        %516 = vmatprep.subr.mxu0 0.0
        %517 = vmatpush1.msra.mxu0 0.0
        %518 = vmatprep.subr.mxu0 0.0
        %519 = vmatpush1.msra.mxu0 0.0
        %520 = vmatprep.subr.mxu0 0.0
        %521 = vmatpush1.msra.mxu0 0.0
        %522 = vmatprep.subr.mxu0 0.0
        %523 = vmatpush1.msra.mxu0 0.0
        %524 = vmatprep.subr.mxu0 0.0
        %525 = vmatpush1.msra.mxu0 0.0
        %526 = vmatprep.subr.mxu0 0.0
        %527 = vmatpush1.msra.mxu0 0.0
        %528 = vmatprep.subr.mxu0 0.0
        %529 = vmatpush1.msra.mxu0 0.0
        %530 = vmatprep.subr.mxu0 0.0
        %531 = vmatpush1.msra.mxu0 0.0
        %532 = vmatprep.subr.mxu0 0.0
        %533 = vmatpush1.msra.mxu0 0.0
        %534 = vmatprep.mubr.f32.mxu0 0.0
        %535 = vmatmul.mubr.f32.gmra.mrb[0].mxu0 %v465
        %v536 = vpop.f32.mrb[0].mxu0
        %v537 = vadd.f32 0.0, %v536
        %v538 = vpop.f32.mrb[0].mxu0
        %539 = vmatprep.mubr.f32.mxu0 0.0
        %540 = vmatmul.mubr.f32.gmra.mrb[0].mxu0 %v468
        %v541 = vpop.f32.mrb[0].mxu0
        %v542 = vadd.f32 0.0, %v541
        %v543 = vpop.f32.mrb[0].mxu0
        %544 = vdwg.mxu0
        %547 = vrot.lane.b32.xlu0 %v537, 96
        %v548 = vpop.permute.xlu0 %547
        %549 = vrot.lane.b32.xlu0 %v542, 96
        %v550 = vpop.permute.xlu0 %549
        %vm551 = vcmask 64512
        %v552 = vsel %vm551, %v537, 0
        %v554 = vsel %vm551, %v542, 0
        %v556 = vsel %vm551, %v548, 0
        %v558 = vsel %vm551, %v550, 0
        %560 = vmatprep.subr.mxu0 0.0
        %561 = vmatpush1.xpose.msra.mxu0 %v556
        %562 = vmatprep.subr.mxu0 0.0
        %563 = vmatpush1.xpose.msra.mxu0 %v558
        %564 = vmatprep.subr.mxu0 0.0
        %565 = vmatpush1.xpose.msra.mxu0 0.0
        %566 = vmatprep.subr.mxu0 0.0
        %567 = vmatpush1.xpose.msra.mxu0 0.0
        %568 = vmatprep.subr.mxu0 0.0
        %569 = vmatpush1.xpose.msra.mxu0 0.0
        %570 = vmatprep.subr.mxu0 0.0
        %571 = vmatpush1.xpose.msra.mxu0 0.0
        %572 = vmatprep.subr.mxu0 0.0
        %573 = vmatpush1.xpose.msra.mxu0 0.0
        %574 = vmatprep.subr.mxu0 0.0
        %575 = vmatpush1.xpose.msra.mxu0 0.0
        %576 = vmatprep.subr.mxu0 0.0
        %577 = vmatpush1.xpose.msra.mxu0 0.0
        %578 = vmatprep.subr.mxu0 0.0
        %579 = vmatpush1.xpose.msra.mxu0 0.0
        %580 = vmatprep.subr.mxu0 0.0
        %581 = vmatpush1.xpose.msra.mxu0 0.0
        %582 = vmatprep.subr.mxu0 0.0
        %583 = vmatpush1.xpose.msra.mxu0 0.0
        %584 = vmatprep.subr.mxu0 0.0
        %585 = vmatpush1.xpose.msra.mxu0 0.0
        %586 = vmatprep.subr.mxu0 0.0
        %587 = vmatpush1.xpose.msra.mxu0 0.0
        %588 = vmatprep.subr.mxu0 0.0
        %589 = vmatpush1.xpose.msra.mxu0 0.0
        %590 = vmatprep.subr.mxu0 0.0
        %591 = vmatpush1.xpose.msra.mxu0 0.0
        %592 = vmatprep.subr.mxu0 0.0
        %593 = vmatpush1.xpose.msra.mxu0 0.0
        %594 = vmatprep.subr.mxu0 0.0
        %595 = vmatpush1.xpose.msra.mxu0 0.0
        %596 = vmatprep.subr.mxu0 0.0
        %597 = vmatpush1.xpose.msra.mxu0 0.0
        %598 = vmatprep.subr.mxu0 0.0
        %599 = vmatpush1.xpose.msra.mxu0 0.0
        %600 = vmatprep.subr.mxu0 0.0
        %601 = vmatpush1.xpose.msra.mxu0 0.0
        %602 = vmatprep.subr.mxu0 0.0
        %603 = vmatpush1.xpose.msra.mxu0 0.0
        %604 = vmatprep.subr.mxu0 0.0
        %605 = vmatpush1.xpose.msra.mxu0 0.0
        %606 = vmatprep.subr.mxu0 0.0
        %607 = vmatpush1.xpose.msra.mxu0 0.0
        %608 = vmatprep.subr.mxu0 0.0
        %609 = vmatpush1.xpose.msra.mxu0 0.0
        %610 = vmatprep.subr.mxu0 0.0
        %611 = vmatpush1.xpose.msra.mxu0 0.0
        %612 = vmatprep.subr.mxu0 0.0
        %613 = vmatpush1.xpose.msra.mxu0 0.0
        %614 = vmatprep.subr.mxu0 0.0
        %615 = vmatpush1.xpose.msra.mxu0 0.0
        %616 = vmatprep.subr.mxu0 0.0
        %617 = vmatpush1.xpose.msra.mxu0 0.0
        %618 = vmatprep.subr.mxu0 0.0
        %619 = vmatpush1.xpose.msra.mxu0 0.0
        %620 = vmatprep.subr.mxu0 0.0
        %621 = vmatpush1.xpose.msra.mxu0 0.0
        %622 = vmatprep.subr.mxu0 0.0
        %623 = vmatpush1.xpose.msra.mxu0 0.0
        %624 = vmatprep.mubr.f32.mxu0 0.0
        %625 = vmatmul.mubr.f32.gmra.mrb[0].mxu0 %v552
        %v626 = vpop.f32.mrb[0].mxu0
        %v627 = vadd.f32 0.0, %v626
        %v628 = vpop.f32.mrb[0].mxu0
        %629 = vmatprep.mubr.f32.mxu0 0.0
        %630 = vmatmul.mubr.f32.gmra.mrb[0].mxu0 %v554
        %v631 = vpop.f32.mrb[0].mxu0
        %v632 = vadd.f32 0.0, %v631
        %v633 = vpop.f32.mrb[0].mxu0
        %634 = vdwg.mxu0
        %vm635 = vcmask 130048
        %v636 = vsel %vm635, %v627, -inf
        %637 = vmax.xlane.f32.xlu0 %v636
        %v638 = vpop.xlane.xlu0 %637
        %v639 = vsel %vm635, %v632, -inf
        %640 = vmax.xlane.f32.xlu0 %v639
        %v641 = vpop.xlane.xlu0 %640
        %v642 = vsub.f32 %v627, %v638
        %v643 = vsub.f32 %v632, %v641
        %v644 = vmul.f32 %v642, 1.442695
        %v645 = vpow.pop %v644
        %v646 = vmul.f32 %v643, 1.442695
        %v647 = vpow.pop %v646
        %v648 = vsel %vm635, %v645, 0.0
        %649 = vadd.xlane.f32.xlu0 %v648
        %v650 = vpop.xlane.xlu0 %649
        %v651 = vsel %vm635, %v647, 0.0
        %652 = vadd.xlane.f32.xlu0 %v651
        %v653 = vpop.xlane.xlu0 %652
        %654 = vrot.lane.b32.xlu0 %v537, 64
        %v655 = vpop.permute.xlu0 %654
        %656 = vrot.lane.b32.xlu0 %v542, 64
        %v657 = vpop.permute.xlu0 %656
        %v661 = vsel %vm635, %v645, 0
        %v664 = vsel %vm635, %v647, 0
        %666 = vmatprep.subr.mxu0 0.0
        %667 = vmatpush1.msra.mxu0 %v655
        %668 = vmatprep.subr.mxu0 0.0
        %669 = vmatpush1.msra.mxu0 %v657
        %670 = vmatprep.subr.mxu0 0.0
        %671 = vmatpush1.msra.mxu0 0.0
        %672 = vmatprep.subr.mxu0 0.0
        %673 = vmatpush1.msra.mxu0 0.0
        %674 = vmatprep.subr.mxu0 0.0
        %675 = vmatpush1.msra.mxu0 0.0
        %676 = vmatprep.subr.mxu0 0.0
        %677 = vmatpush1.msra.mxu0 0.0
        %678 = vmatprep.subr.mxu0 0.0
        %679 = vmatpush1.msra.mxu0 0.0
        %680 = vmatprep.subr.mxu0 0.0
        %681 = vmatpush1.msra.mxu0 0.0
        %682 = vmatprep.subr.mxu0 0.0
        %683 = vmatpush1.msra.mxu0 0.0
        %684 = vmatprep.subr.mxu0 0.0
        %685 = vmatpush1.msra.mxu0 0.0
        %686 = vmatprep.subr.mxu0 0.0
        %687 = vmatpush1.msra.mxu0 0.0
        %688 = vmatprep.subr.mxu0 0.0
        %689 = vmatpush1.msra.mxu0 0.0
        %690 = vmatprep.subr.mxu0 0.0
        %691 = vmatpush1.msra.mxu0 0.0
        %692 = vmatprep.subr.mxu0 0.0
        %693 = vmatpush1.msra.mxu0 0.0
        %694 = vmatprep.subr.mxu0 0.0
        %695 = vmatpush1.msra.mxu0 0.0
        %696 = vmatprep.subr.mxu0 0.0
        %697 = vmatpush1.msra.mxu0 0.0
        %698 = vmatprep.subr.mxu0 0.0
        %699 = vmatpush1.msra.mxu0 0.0
        %700 = vmatprep.subr.mxu0 0.0
        %701 = vmatpush1.msra.mxu0 0.0
        %702 = vmatprep.subr.mxu0 0.0
        %703 = vmatpush1.msra.mxu0 0.0
        %704 = vmatprep.subr.mxu0 0.0
        %705 = vmatpush1.msra.mxu0 0.0
        %706 = vmatprep.subr.mxu0 0.0
        %707 = vmatpush1.msra.mxu0 0.0
        %708 = vmatprep.subr.mxu0 0.0
        %709 = vmatpush1.msra.mxu0 0.0
        %710 = vmatprep.subr.mxu0 0.0
        %711 = vmatpush1.msra.mxu0 0.0
        %712 = vmatprep.subr.mxu0 0.0
        %713 = vmatpush1.msra.mxu0 0.0
        %714 = vmatprep.subr.mxu0 0.0
        %715 = vmatpush1.msra.mxu0 0.0
        %716 = vmatprep.subr.mxu0 0.0
        %717 = vmatpush1.msra.mxu0 0.0
        %718 = vmatprep.subr.mxu0 0.0
        %719 = vmatpush1.msra.mxu0 0.0
        %720 = vmatprep.subr.mxu0 0.0
        %721 = vmatpush1.msra.mxu0 0.0
        %722 = vmatprep.subr.mxu0 0.0
        %723 = vmatpush1.msra.mxu0 0.0
        %724 = vmatprep.subr.mxu0 0.0
        %725 = vmatpush1.msra.mxu0 0.0
        %726 = vmatprep.subr.mxu0 0.0
        %727 = vmatpush1.msra.mxu0 0.0
        %728 = vmatprep.subr.mxu0 0.0
        %729 = vmatpush1.msra.mxu0 0.0
        %730 = vmatprep.mubr.f32.mxu0 0.0
        %731 = vmatmul.mubr.f32.gmra.mrb[0].mxu0 %v661
        %v732 = vpop.f32.mrb[0].mxu0
        %v733 = vadd.f32 0.0, %v732
        %v734 = vpop.f32.mrb[0].mxu0
        %735 = vmatprep.mubr.f32.mxu0 0.0
        %736 = vmatmul.mubr.f32.gmra.mrb[0].mxu0 %v664
        %v737 = vpop.f32.mrb[0].mxu0
        %v738 = vadd.f32 0.0, %v737
        %v739 = vpop.f32.mrb[0].mxu0
        %740 = vdwg.mxu0
        %v741 = vrcp.pop %v650
        %v742 = vrcp.pop %v653
        %v743 = vmul.f32 %v733, %v741
        %v744 = vmul.f32 %v738, %v742
        %745 = vrot.lane.b32.xlu0 %v537, 120
        %v746 = vpop.permute.xlu0 %745
        %747 = vrot.lane.b32.xlu0 %v542, 120
        %v748 = vpop.permute.xlu0 %747
        %749 = vrot.lane.b32.xlu0 %v537, 88
        %v750 = vpop.permute.xlu0 %749
        %751 = vrot.lane.b32.xlu0 %v542, 88
        %v752 = vpop.permute.xlu0 %751
        %v753 = vsel %vm551, %v746, 0
        %v755 = vsel %vm551, %v748, 0
        %v757 = vsel %vm551, %v750, 0
        %v759 = vsel %vm551, %v752, 0
        %761 = vmatprep.subr.mxu0 0.0
        %762 = vmatpush1.xpose.msra.mxu0 %v757
        %763 = vmatprep.subr.mxu0 0.0
        %764 = vmatpush1.xpose.msra.mxu0 %v759
        %765 = vmatprep.subr.mxu0 0.0
        %766 = vmatpush1.xpose.msra.mxu0 0.0
        %767 = vmatprep.subr.mxu0 0.0
        %768 = vmatpush1.xpose.msra.mxu0 0.0
        %769 = vmatprep.subr.mxu0 0.0
        %770 = vmatpush1.xpose.msra.mxu0 0.0
        %771 = vmatprep.subr.mxu0 0.0
        %772 = vmatpush1.xpose.msra.mxu0 0.0
        %773 = vmatprep.subr.mxu0 0.0
        %774 = vmatpush1.xpose.msra.mxu0 0.0
        %775 = vmatprep.subr.mxu0 0.0
        %776 = vmatpush1.xpose.msra.mxu0 0.0
        %777 = vmatprep.subr.mxu0 0.0
        %778 = vmatpush1.xpose.msra.mxu0 0.0
        %779 = vmatprep.subr.mxu0 0.0
        %780 = vmatpush1.xpose.msra.mxu0 0.0
        %781 = vmatprep.subr.mxu0 0.0
        %782 = vmatpush1.xpose.msra.mxu0 0.0
        %783 = vmatprep.subr.mxu0 0.0
        %784 = vmatpush1.xpose.msra.mxu0 0.0
        %785 = vmatprep.subr.mxu0 0.0
        %786 = vmatpush1.xpose.msra.mxu0 0.0
        %787 = vmatprep.subr.mxu0 0.0
        %788 = vmatpush1.xpose.msra.mxu0 0.0
        %789 = vmatprep.subr.mxu0 0.0
        %790 = vmatpush1.xpose.msra.mxu0 0.0
        %791 = vmatprep.subr.mxu0 0.0
        %792 = vmatpush1.xpose.msra.mxu0 0.0
        %793 = vmatprep.subr.mxu0 0.0
        %794 = vmatpush1.xpose.msra.mxu0 0.0
        %795 = vmatprep.subr.mxu0 0.0
        %796 = vmatpush1.xpose.msra.mxu0 0.0
        %797 = vmatprep.subr.mxu0 0.0
        %798 = vmatpush1.xpose.msra.mxu0 0.0
        %799 = vmatprep.subr.mxu0 0.0
        %800 = vmatpush1.xpose.msra.mxu0 0.0
        %801 = vmatprep.subr.mxu0 0.0
        %802 = vmatpush1.xpose.msra.mxu0 0.0
        %803 = vmatprep.subr.mxu0 0.0
        %804 = vmatpush1.xpose.msra.mxu0 0.0
        %805 = vmatprep.subr.mxu0 0.0
        %806 = vmatpush1.xpose.msra.mxu0 0.0
        %807 = vmatprep.subr.mxu0 0.0
        %808 = vmatpush1.xpose.msra.mxu0 0.0
        %809 = vmatprep.subr.mxu0 0.0
        %810 = vmatpush1.xpose.msra.mxu0 0.0
        %811 = vmatprep.subr.mxu0 0.0
        %812 = vmatpush1.xpose.msra.mxu0 0.0
        %813 = vmatprep.subr.mxu0 0.0
        %814 = vmatpush1.xpose.msra.mxu0 0.0
        %815 = vmatprep.subr.mxu0 0.0
        %816 = vmatpush1.xpose.msra.mxu0 0.0
        %817 = vmatprep.subr.mxu0 0.0
        %818 = vmatpush1.xpose.msra.mxu0 0.0
        %819 = vmatprep.subr.mxu0 0.0
        %820 = vmatpush1.xpose.msra.mxu0 0.0
        %821 = vmatprep.subr.mxu0 0.0
        %822 = vmatpush1.xpose.msra.mxu0 0.0
        %823 = vmatprep.subr.mxu0 0.0
        %824 = vmatpush1.xpose.msra.mxu0 0.0
        %825 = vmatprep.mubr.f32.mxu0 0.0
        %826 = vmatmul.mubr.f32.gmra.mrb[0].mxu0 %v753
        %v827 = vpop.f32.mrb[0].mxu0
        %v828 = vadd.f32 0.0, %v827
        %v829 = vpop.f32.mrb[0].mxu0
        %830 = vmatprep.mubr.f32.mxu0 0.0
        %831 = vmatmul.mubr.f32.gmra.mrb[0].mxu0 %v755
        %v832 = vpop.f32.mrb[0].mxu0
        %v833 = vadd.f32 0.0, %v832
        %v834 = vpop.f32.mrb[0].mxu0
        %835 = vdwg.mxu0
        %v836 = vsel %vm635, %v828, -inf
        %837 = vmax.xlane.f32.xlu0 %v836
        %v838 = vpop.xlane.xlu0 %837
        %v839 = vsel %vm635, %v833, -inf
        %840 = vmax.xlane.f32.xlu0 %v839
        %v841 = vpop.xlane.xlu0 %840
        %v842 = vsub.f32 %v828, %v838
        %v843 = vsub.f32 %v833, %v841
        %v844 = vmul.f32 %v842, 1.442695
        %v845 = vpow.pop %v844
        %v846 = vmul.f32 %v843, 1.442695
        %v847 = vpow.pop %v846
        %v848 = vsel %vm635, %v845, 0.0
        %849 = vadd.xlane.f32.xlu0 %v848
        %v850 = vpop.xlane.xlu0 %849
        %v851 = vsel %vm635, %v847, 0.0
        %852 = vadd.xlane.f32.xlu0 %v851
        %v853 = vpop.xlane.xlu0 %852
        %854 = vrot.lane.b32.xlu0 %v537, 56
        %v855 = vpop.permute.xlu0 %854
        %856 = vrot.lane.b32.xlu0 %v542, 56
        %v857 = vpop.permute.xlu0 %856
        %v861 = vsel %vm635, %v845, 0
        %v864 = vsel %vm635, %v847, 0
        %866 = vmatprep.subr.mxu0 0.0
        %867 = vmatpush1.msra.mxu0 %v855
        %868 = vmatprep.subr.mxu0 0.0
        %869 = vmatpush1.msra.mxu0 %v857
        %870 = vmatprep.subr.mxu0 0.0
        %871 = vmatpush1.msra.mxu0 0.0
        %872 = vmatprep.subr.mxu0 0.0
        %873 = vmatpush1.msra.mxu0 0.0
        %874 = vmatprep.subr.mxu0 0.0
        %875 = vmatpush1.msra.mxu0 0.0
        %876 = vmatprep.subr.mxu0 0.0
        %877 = vmatpush1.msra.mxu0 0.0
        %878 = vmatprep.subr.mxu0 0.0
        %879 = vmatpush1.msra.mxu0 0.0
        %880 = vmatprep.subr.mxu0 0.0
        %881 = vmatpush1.msra.mxu0 0.0
        %882 = vmatprep.subr.mxu0 0.0
        %883 = vmatpush1.msra.mxu0 0.0
        %884 = vmatprep.subr.mxu0 0.0
        %885 = vmatpush1.msra.mxu0 0.0
        %886 = vmatprep.subr.mxu0 0.0
        %887 = vmatpush1.msra.mxu0 0.0
        %888 = vmatprep.subr.mxu0 0.0
        %889 = vmatpush1.msra.mxu0 0.0
        %890 = vmatprep.subr.mxu0 0.0
        %891 = vmatpush1.msra.mxu0 0.0
        %892 = vmatprep.subr.mxu0 0.0
        %893 = vmatpush1.msra.mxu0 0.0
        %894 = vmatprep.subr.mxu0 0.0
        %895 = vmatpush1.msra.mxu0 0.0
        %896 = vmatprep.subr.mxu0 0.0
        %897 = vmatpush1.msra.mxu0 0.0
        %898 = vmatprep.subr.mxu0 0.0
        %899 = vmatpush1.msra.mxu0 0.0
        %900 = vmatprep.subr.mxu0 0.0
        %901 = vmatpush1.msra.mxu0 0.0
        %902 = vmatprep.subr.mxu0 0.0
        %903 = vmatpush1.msra.mxu0 0.0
        %904 = vmatprep.subr.mxu0 0.0
        %905 = vmatpush1.msra.mxu0 0.0
        %906 = vmatprep.subr.mxu0 0.0
        %907 = vmatpush1.msra.mxu0 0.0
        %908 = vmatprep.subr.mxu0 0.0
        %909 = vmatpush1.msra.mxu0 0.0
        %910 = vmatprep.subr.mxu0 0.0
        %911 = vmatpush1.msra.mxu0 0.0
        %912 = vmatprep.subr.mxu0 0.0
        %913 = vmatpush1.msra.mxu0 0.0
        %914 = vmatprep.subr.mxu0 0.0
        %915 = vmatpush1.msra.mxu0 0.0
        %916 = vmatprep.subr.mxu0 0.0
        %917 = vmatpush1.msra.mxu0 0.0
        %918 = vmatprep.subr.mxu0 0.0
        %919 = vmatpush1.msra.mxu0 0.0
        %920 = vmatprep.subr.mxu0 0.0
        %921 = vmatpush1.msra.mxu0 0.0
        %922 = vmatprep.subr.mxu0 0.0
        %923 = vmatpush1.msra.mxu0 0.0
        %924 = vmatprep.subr.mxu0 0.0
        %925 = vmatpush1.msra.mxu0 0.0
        %926 = vmatprep.subr.mxu0 0.0
        %927 = vmatpush1.msra.mxu0 0.0
        %928 = vmatprep.subr.mxu0 0.0
        %929 = vmatpush1.msra.mxu0 0.0
        %930 = vmatprep.mubr.f32.mxu0 0.0
        %931 = vmatmul.mubr.f32.gmra.mrb[0].mxu0 %v861
        %v932 = vpop.f32.mrb[0].mxu0
        %v933 = vadd.f32 0.0, %v932
        %v934 = vpop.f32.mrb[0].mxu0
        %935 = vmatprep.mubr.f32.mxu0 0.0
        %936 = vmatmul.mubr.f32.gmra.mrb[0].mxu0 %v864
        %v937 = vpop.f32.mrb[0].mxu0
        %v938 = vadd.f32 0.0, %v937
        %v939 = vpop.f32.mrb[0].mxu0
        %940 = vdwg.mxu0
        %v941 = vrcp.pop %v850
        %v942 = vrcp.pop %v853
        %v943 = vmul.f32 %v933, %v941
        %v944 = vmul.f32 %v938, %v942
        %945 = vrot.lane.b32.xlu0 %v537, 112
        %v946 = vpop.permute.xlu0 %945
        %947 = vrot.lane.b32.xlu0 %v542, 112
        %v948 = vpop.permute.xlu0 %947
        %949 = vrot.lane.b32.xlu0 %v537, 80
        %v950 = vpop.permute.xlu0 %949
        %951 = vrot.lane.b32.xlu0 %v542, 80
        %v952 = vpop.permute.xlu0 %951
        %v953 = vsel %vm551, %v946, 0
        %v955 = vsel %vm551, %v948, 0
        %v957 = vsel %vm551, %v950, 0
        %v959 = vsel %vm551, %v952, 0
        %961 = vmatprep.subr.mxu0 0.0
        %962 = vmatpush1.xpose.msra.mxu0 %v957
        %963 = vmatprep.subr.mxu0 0.0
        %964 = vmatpush1.xpose.msra.mxu0 %v959
        %965 = vmatprep.subr.mxu0 0.0
        %966 = vmatpush1.xpose.msra.mxu0 0.0
        %967 = vmatprep.subr.mxu0 0.0
        %968 = vmatpush1.xpose.msra.mxu0 0.0
        %969 = vmatprep.subr.mxu0 0.0
        %970 = vmatpush1.xpose.msra.mxu0 0.0
        %971 = vmatprep.subr.mxu0 0.0
        %972 = vmatpush1.xpose.msra.mxu0 0.0
        %973 = vmatprep.subr.mxu0 0.0
        %974 = vmatpush1.xpose.msra.mxu0 0.0
        %975 = vmatprep.subr.mxu0 0.0
        %976 = vmatpush1.xpose.msra.mxu0 0.0
        %977 = vmatprep.subr.mxu0 0.0
        %978 = vmatpush1.xpose.msra.mxu0 0.0
        %979 = vmatprep.subr.mxu0 0.0
        %980 = vmatpush1.xpose.msra.mxu0 0.0
        %981 = vmatprep.subr.mxu0 0.0
        %982 = vmatpush1.xpose.msra.mxu0 0.0
        %983 = vmatprep.subr.mxu0 0.0
        %984 = vmatpush1.xpose.msra.mxu0 0.0
        %985 = vmatprep.subr.mxu0 0.0
        %986 = vmatpush1.xpose.msra.mxu0 0.0
        %987 = vmatprep.subr.mxu0 0.0
        %988 = vmatpush1.xpose.msra.mxu0 0.0
        %989 = vmatprep.subr.mxu0 0.0
        %990 = vmatpush1.xpose.msra.mxu0 0.0
        %991 = vmatprep.subr.mxu0 0.0
        %992 = vmatpush1.xpose.msra.mxu0 0.0
        %993 = vmatprep.subr.mxu0 0.0
        %994 = vmatpush1.xpose.msra.mxu0 0.0
        %995 = vmatprep.subr.mxu0 0.0
        %996 = vmatpush1.xpose.msra.mxu0 0.0
        %997 = vmatprep.subr.mxu0 0.0
        %998 = vmatpush1.xpose.msra.mxu0 0.0
        %999 = vmatprep.subr.mxu0 0.0
        %1000 = vmatpush1.xpose.msra.mxu0 0.0
        %1001 = vmatprep.subr.mxu0 0.0
        %1002 = vmatpush1.xpose.msra.mxu0 0.0
        %1003 = vmatprep.subr.mxu0 0.0
        %1004 = vmatpush1.xpose.msra.mxu0 0.0
        %1005 = vmatprep.subr.mxu0 0.0
        %1006 = vmatpush1.xpose.msra.mxu0 0.0
        %1007 = vmatprep.subr.mxu0 0.0
        %1008 = vmatpush1.xpose.msra.mxu0 0.0
        %1009 = vmatprep.subr.mxu0 0.0
        %1010 = vmatpush1.xpose.msra.mxu0 0.0
        %1011 = vmatprep.subr.mxu0 0.0
        %1012 = vmatpush1.xpose.msra.mxu0 0.0
        %1013 = vmatprep.subr.mxu0 0.0
        %1014 = vmatpush1.xpose.msra.mxu0 0.0
        %1015 = vmatprep.subr.mxu0 0.0
        %1016 = vmatpush1.xpose.msra.mxu0 0.0
        %1017 = vmatprep.subr.mxu0 0.0
        %1018 = vmatpush1.xpose.msra.mxu0 0.0
        %1019 = vmatprep.subr.mxu0 0.0
        %1020 = vmatpush1.xpose.msra.mxu0 0.0
        %1021 = vmatprep.subr.mxu0 0.0
        %1022 = vmatpush1.xpose.msra.mxu0 0.0
        %1023 = vmatprep.subr.mxu0 0.0
        %1024 = vmatpush1.xpose.msra.mxu0 0.0
        %1025 = vmatprep.mubr.f32.mxu0 0.0
        %1026 = vmatmul.mubr.f32.gmra.mrb[0].mxu0 %v953
        %v1027 = vpop.f32.mrb[0].mxu0
        %v1028 = vadd.f32 0.0, %v1027
        %v1029 = vpop.f32.mrb[0].mxu0
        %1030 = vmatprep.mubr.f32.mxu0 0.0
        %1031 = vmatmul.mubr.f32.gmra.mrb[0].mxu0 %v955
        %v1032 = vpop.f32.mrb[0].mxu0
        %v1033 = vadd.f32 0.0, %v1032
        %v1034 = vpop.f32.mrb[0].mxu0
        %1035 = vdwg.mxu0
        %v1036 = vsel %vm635, %v1028, -inf
        %1037 = vmax.xlane.f32.xlu0 %v1036
        %v1038 = vpop.xlane.xlu0 %1037
        %v1039 = vsel %vm635, %v1033, -inf
        %1040 = vmax.xlane.f32.xlu0 %v1039
        %v1041 = vpop.xlane.xlu0 %1040
        %v1042 = vsub.f32 %v1028, %v1038
        %v1043 = vsub.f32 %v1033, %v1041
        %v1044 = vmul.f32 %v1042, 1.442695
        %v1045 = vpow.pop %v1044
        %v1046 = vmul.f32 %v1043, 1.442695
        %v1047 = vpow.pop %v1046
        %v1048 = vsel %vm635, %v1045, 0.0
        %1049 = vadd.xlane.f32.xlu0 %v1048
        %v1050 = vpop.xlane.xlu0 %1049
        %v1051 = vsel %vm635, %v1047, 0.0
        %1052 = vadd.xlane.f32.xlu0 %v1051
        %v1053 = vpop.xlane.xlu0 %1052
        %1054 = vrot.lane.b32.xlu0 %v537, 48
        %v1055 = vpop.permute.xlu0 %1054
        %1056 = vrot.lane.b32.xlu0 %v542, 48
        %v1057 = vpop.permute.xlu0 %1056
        %v1061 = vsel %vm635, %v1045, 0
        %v1064 = vsel %vm635, %v1047, 0
        %1066 = vmatprep.subr.mxu0 0.0
        %1067 = vmatpush1.msra.mxu0 %v1055
        %1068 = vmatprep.subr.mxu0 0.0
        %1069 = vmatpush1.msra.mxu0 %v1057
        %1070 = vmatprep.subr.mxu0 0.0
        %1071 = vmatpush1.msra.mxu0 0.0
        %1072 = vmatprep.subr.mxu0 0.0
        %1073 = vmatpush1.msra.mxu0 0.0
        %1074 = vmatprep.subr.mxu0 0.0
        %1075 = vmatpush1.msra.mxu0 0.0
        %1076 = vmatprep.subr.mxu0 0.0
        %1077 = vmatpush1.msra.mxu0 0.0
        %1078 = vmatprep.subr.mxu0 0.0
        %1079 = vmatpush1.msra.mxu0 0.0
        %1080 = vmatprep.subr.mxu0 0.0
        %1081 = vmatpush1.msra.mxu0 0.0
        %1082 = vmatprep.subr.mxu0 0.0
        %1083 = vmatpush1.msra.mxu0 0.0
        %1084 = vmatprep.subr.mxu0 0.0
        %1085 = vmatpush1.msra.mxu0 0.0
        %1086 = vmatprep.subr.mxu0 0.0
        %1087 = vmatpush1.msra.mxu0 0.0
        %1088 = vmatprep.subr.mxu0 0.0
        %1089 = vmatpush1.msra.mxu0 0.0
        %1090 = vmatprep.subr.mxu0 0.0
        %1091 = vmatpush1.msra.mxu0 0.0
        %1092 = vmatprep.subr.mxu0 0.0
        %1093 = vmatpush1.msra.mxu0 0.0
        %1094 = vmatprep.subr.mxu0 0.0
        %1095 = vmatpush1.msra.mxu0 0.0
        %1096 = vmatprep.subr.mxu0 0.0
        %1097 = vmatpush1.msra.mxu0 0.0
        %1098 = vmatprep.subr.mxu0 0.0
        %1099 = vmatpush1.msra.mxu0 0.0
        %1100 = vmatprep.subr.mxu0 0.0
        %1101 = vmatpush1.msra.mxu0 0.0
        %1102 = vmatprep.subr.mxu0 0.0
        %1103 = vmatpush1.msra.mxu0 0.0
        %1104 = vmatprep.subr.mxu0 0.0
        %1105 = vmatpush1.msra.mxu0 0.0
        %1106 = vmatprep.subr.mxu0 0.0
        %1107 = vmatpush1.msra.mxu0 0.0
        %1108 = vmatprep.subr.mxu0 0.0
        %1109 = vmatpush1.msra.mxu0 0.0
        %1110 = vmatprep.subr.mxu0 0.0
        %1111 = vmatpush1.msra.mxu0 0.0
        %1112 = vmatprep.subr.mxu0 0.0
        %1113 = vmatpush1.msra.mxu0 0.0
        %1114 = vmatprep.subr.mxu0 0.0
        %1115 = vmatpush1.msra.mxu0 0.0
        %1116 = vmatprep.subr.mxu0 0.0
        %1117 = vmatpush1.msra.mxu0 0.0
        %1118 = vmatprep.subr.mxu0 0.0
        %1119 = vmatpush1.msra.mxu0 0.0
        %1120 = vmatprep.subr.mxu0 0.0
        %1121 = vmatpush1.msra.mxu0 0.0
        %1122 = vmatprep.subr.mxu0 0.0
        %1123 = vmatpush1.msra.mxu0 0.0
        %1124 = vmatprep.subr.mxu0 0.0
        %1125 = vmatpush1.msra.mxu0 0.0
        %1126 = vmatprep.subr.mxu0 0.0
        %1127 = vmatpush1.msra.mxu0 0.0
        %1128 = vmatprep.subr.mxu0 0.0
        %1129 = vmatpush1.msra.mxu0 0.0
        %1130 = vmatprep.mubr.f32.mxu0 0.0
        %1131 = vmatmul.mubr.f32.gmra.mrb[0].mxu0 %v1061
        %v1132 = vpop.f32.mrb[0].mxu0
        %v1133 = vadd.f32 0.0, %v1132
        %v1134 = vpop.f32.mrb[0].mxu0
        %1135 = vmatprep.mubr.f32.mxu0 0.0
        %1136 = vmatmul.mubr.f32.gmra.mrb[0].mxu0 %v1064
        %v1137 = vpop.f32.mrb[0].mxu0
        %v1138 = vadd.f32 0.0, %v1137
        %v1139 = vpop.f32.mrb[0].mxu0
        %1140 = vdwg.mxu0
        %v1141 = vrcp.pop %v1050
        %v1142 = vrcp.pop %v1053
        %v1143 = vmul.f32 %v1133, %v1141
        %v1144 = vmul.f32 %v1138, %v1142
        %1145 = vrot.lane.b32.xlu0 %v537, 104
        %v1146 = vpop.permute.xlu0 %1145
        %1147 = vrot.lane.b32.xlu0 %v542, 104
        %v1148 = vpop.permute.xlu0 %1147
        %1149 = vrot.lane.b32.xlu0 %v537, 72
        %v1150 = vpop.permute.xlu0 %1149
        %1151 = vrot.lane.b32.xlu0 %v542, 72
        %v1152 = vpop.permute.xlu0 %1151
        %v1153 = vsel %vm551, %v1146, 0
        %v1155 = vsel %vm551, %v1148, 0
        %v1157 = vsel %vm551, %v1150, 0
        %v1159 = vsel %vm551, %v1152, 0
        %1161 = vmatprep.subr.mxu0 0.0
        %1162 = vmatpush1.xpose.msra.mxu0 %v1157
        %1163 = vmatprep.subr.mxu0 0.0
        %1164 = vmatpush1.xpose.msra.mxu0 %v1159
        %1165 = vmatprep.subr.mxu0 0.0
        %1166 = vmatpush1.xpose.msra.mxu0 0.0
        %1167 = vmatprep.subr.mxu0 0.0
        %1168 = vmatpush1.xpose.msra.mxu0 0.0
        %1169 = vmatprep.subr.mxu0 0.0
        %1170 = vmatpush1.xpose.msra.mxu0 0.0
        %1171 = vmatprep.subr.mxu0 0.0
        %1172 = vmatpush1.xpose.msra.mxu0 0.0
        %1173 = vmatprep.subr.mxu0 0.0
        %1174 = vmatpush1.xpose.msra.mxu0 0.0
        %1175 = vmatprep.subr.mxu0 0.0
        %1176 = vmatpush1.xpose.msra.mxu0 0.0
        %1177 = vmatprep.subr.mxu0 0.0
        %1178 = vmatpush1.xpose.msra.mxu0 0.0
        %1179 = vmatprep.subr.mxu0 0.0
        %1180 = vmatpush1.xpose.msra.mxu0 0.0
        %1181 = vmatprep.subr.mxu0 0.0
        %1182 = vmatpush1.xpose.msra.mxu0 0.0
        %1183 = vmatprep.subr.mxu0 0.0
        %1184 = vmatpush1.xpose.msra.mxu0 0.0
        %1185 = vmatprep.subr.mxu0 0.0
        %1186 = vmatpush1.xpose.msra.mxu0 0.0
        %1187 = vmatprep.subr.mxu0 0.0
        %1188 = vmatpush1.xpose.msra.mxu0 0.0
        %1189 = vmatprep.subr.mxu0 0.0
        %1190 = vmatpush1.xpose.msra.mxu0 0.0
        %1191 = vmatprep.subr.mxu0 0.0
        %1192 = vmatpush1.xpose.msra.mxu0 0.0
        %1193 = vmatprep.subr.mxu0 0.0
        %1194 = vmatpush1.xpose.msra.mxu0 0.0
        %1195 = vmatprep.subr.mxu0 0.0
        %1196 = vmatpush1.xpose.msra.mxu0 0.0
        %1197 = vmatprep.subr.mxu0 0.0
        %1198 = vmatpush1.xpose.msra.mxu0 0.0
        %1199 = vmatprep.subr.mxu0 0.0
        %1200 = vmatpush1.xpose.msra.mxu0 0.0
        %1201 = vmatprep.subr.mxu0 0.0
        %1202 = vmatpush1.xpose.msra.mxu0 0.0
        %1203 = vmatprep.subr.mxu0 0.0
        %1204 = vmatpush1.xpose.msra.mxu0 0.0
        %1205 = vmatprep.subr.mxu0 0.0
        %1206 = vmatpush1.xpose.msra.mxu0 0.0
        %1207 = vmatprep.subr.mxu0 0.0
        %1208 = vmatpush1.xpose.msra.mxu0 0.0
        %1209 = vmatprep.subr.mxu0 0.0
        %1210 = vmatpush1.xpose.msra.mxu0 0.0
        %1211 = vmatprep.subr.mxu0 0.0
        %1212 = vmatpush1.xpose.msra.mxu0 0.0
        %1213 = vmatprep.subr.mxu0 0.0
        %1214 = vmatpush1.xpose.msra.mxu0 0.0
        %1215 = vmatprep.subr.mxu0 0.0
        %1216 = vmatpush1.xpose.msra.mxu0 0.0
        %1217 = vmatprep.subr.mxu0 0.0
        %1218 = vmatpush1.xpose.msra.mxu0 0.0
        %1219 = vmatprep.subr.mxu0 0.0
        %1220 = vmatpush1.xpose.msra.mxu0 0.0
        %1221 = vmatprep.subr.mxu0 0.0
        %1222 = vmatpush1.xpose.msra.mxu0 0.0
        %1223 = vmatprep.subr.mxu0 0.0
        %1224 = vmatpush1.xpose.msra.mxu0 0.0
        %1225 = vmatprep.mubr.f32.mxu0 0.0
        %1226 = vmatmul.mubr.f32.gmra.mrb[0].mxu0 %v1153
        %v1227 = vpop.f32.mrb[0].mxu0
        %v1228 = vadd.f32 0.0, %v1227
        %v1229 = vpop.f32.mrb[0].mxu0
        %1230 = vmatprep.mubr.f32.mxu0 0.0
        %1231 = vmatmul.mubr.f32.gmra.mrb[0].mxu0 %v1155
        %v1232 = vpop.f32.mrb[0].mxu0
        %v1233 = vadd.f32 0.0, %v1232
        %v1234 = vpop.f32.mrb[0].mxu0
        %1235 = vdwg.mxu0
        %v1236 = vsel %vm635, %v1228, -inf
        %1237 = vmax.xlane.f32.xlu0 %v1236
        %v1238 = vpop.xlane.xlu0 %1237
        %v1239 = vsel %vm635, %v1233, -inf
        %1240 = vmax.xlane.f32.xlu0 %v1239
        %v1241 = vpop.xlane.xlu0 %1240
        %v1242 = vsub.f32 %v1228, %v1238
        %v1243 = vsub.f32 %v1233, %v1241
        %v1244 = vmul.f32 %v1242, 1.442695
        %v1245 = vpow.pop %v1244
        %v1246 = vmul.f32 %v1243, 1.442695
        %v1247 = vpow.pop %v1246
        %v1248 = vsel %vm635, %v1245, 0.0
        %1249 = vadd.xlane.f32.xlu0 %v1248
        %v1250 = vpop.xlane.xlu0 %1249
        %v1251 = vsel %vm635, %v1247, 0.0
        %1252 = vadd.xlane.f32.xlu0 %v1251
        %v1253 = vpop.xlane.xlu0 %1252
        %1254 = vrot.lane.b32.xlu0 %v537, 40
        %v1255 = vpop.permute.xlu0 %1254
        %1256 = vrot.lane.b32.xlu0 %v542, 40
        %v1257 = vpop.permute.xlu0 %1256
        %v1261 = vsel %vm635, %v1245, 0
        %v1264 = vsel %vm635, %v1247, 0
        %1266 = vmatprep.subr.mxu0 0.0
        %1267 = vmatpush1.msra.mxu0 %v1255
        %1268 = vmatprep.subr.mxu0 0.0
        %1269 = vmatpush1.msra.mxu0 %v1257
        %1270 = vmatprep.subr.mxu0 0.0
        %1271 = vmatpush1.msra.mxu0 0.0
        %1272 = vmatprep.subr.mxu0 0.0
        %1273 = vmatpush1.msra.mxu0 0.0
        %1274 = vmatprep.subr.mxu0 0.0
        %1275 = vmatpush1.msra.mxu0 0.0
        %1276 = vmatprep.subr.mxu0 0.0
        %1277 = vmatpush1.msra.mxu0 0.0
        %1278 = vmatprep.subr.mxu0 0.0
        %1279 = vmatpush1.msra.mxu0 0.0
        %1280 = vmatprep.subr.mxu0 0.0
        %1281 = vmatpush1.msra.mxu0 0.0
        %1282 = vmatprep.subr.mxu0 0.0
        %1283 = vmatpush1.msra.mxu0 0.0
        %1284 = vmatprep.subr.mxu0 0.0
        %1285 = vmatpush1.msra.mxu0 0.0
        %1286 = vmatprep.subr.mxu0 0.0
        %1287 = vmatpush1.msra.mxu0 0.0
        %1288 = vmatprep.subr.mxu0 0.0
        %1289 = vmatpush1.msra.mxu0 0.0
        %1290 = vmatprep.subr.mxu0 0.0
        %1291 = vmatpush1.msra.mxu0 0.0
        %1292 = vmatprep.subr.mxu0 0.0
        %1293 = vmatpush1.msra.mxu0 0.0
        %1294 = vmatprep.subr.mxu0 0.0
        %1295 = vmatpush1.msra.mxu0 0.0
        %1296 = vmatprep.subr.mxu0 0.0
        %1297 = vmatpush1.msra.mxu0 0.0
        %1298 = vmatprep.subr.mxu0 0.0
        %1299 = vmatpush1.msra.mxu0 0.0
        %1300 = vmatprep.subr.mxu0 0.0
        %1301 = vmatpush1.msra.mxu0 0.0
        %1302 = vmatprep.subr.mxu0 0.0
        %1303 = vmatpush1.msra.mxu0 0.0
        %1304 = vmatprep.subr.mxu0 0.0
        %1305 = vmatpush1.msra.mxu0 0.0
        %1306 = vmatprep.subr.mxu0 0.0
        %1307 = vmatpush1.msra.mxu0 0.0
        %1308 = vmatprep.subr.mxu0 0.0
        %1309 = vmatpush1.msra.mxu0 0.0
        %1310 = vmatprep.subr.mxu0 0.0
        %1311 = vmatpush1.msra.mxu0 0.0
        %1312 = vmatprep.subr.mxu0 0.0
        %1313 = vmatpush1.msra.mxu0 0.0
        %1314 = vmatprep.subr.mxu0 0.0
        %1315 = vmatpush1.msra.mxu0 0.0
        %1316 = vmatprep.subr.mxu0 0.0
        %1317 = vmatpush1.msra.mxu0 0.0
        %1318 = vmatprep.subr.mxu0 0.0
        %1319 = vmatpush1.msra.mxu0 0.0
        %1320 = vmatprep.subr.mxu0 0.0
        %1321 = vmatpush1.msra.mxu0 0.0
        %1322 = vmatprep.subr.mxu0 0.0
        %1323 = vmatpush1.msra.mxu0 0.0
        %1324 = vmatprep.subr.mxu0 0.0
        %1325 = vmatpush1.msra.mxu0 0.0
        %1326 = vmatprep.subr.mxu0 0.0
        %1327 = vmatpush1.msra.mxu0 0.0
        %1328 = vmatprep.subr.mxu0 0.0
        %1329 = vmatpush1.msra.mxu0 0.0
        %1330 = vmatprep.mubr.f32.mxu0 0.0
        %1331 = vmatmul.mubr.f32.gmra.mrb[0].mxu0 %v1261
        %v1332 = vpop.f32.mrb[0].mxu0
        %v1333 = vadd.f32 0.0, %v1332
        %v1334 = vpop.f32.mrb[0].mxu0
        %1335 = vmatprep.mubr.f32.mxu0 0.0
        %1336 = vmatmul.mubr.f32.gmra.mrb[0].mxu0 %v1264
        %v1337 = vpop.f32.mrb[0].mxu0
        %v1338 = vadd.f32 0.0, %v1337
        %v1339 = vpop.f32.mrb[0].mxu0
        %1340 = vdwg.mxu0
        %v1341 = vrcp.pop %v1250
        %v1342 = vrcp.pop %v1253
        %v1343 = vmul.f32 %v1333, %v1341
        %v1344 = vmul.f32 %v1338, %v1342
        %1347 = vrot.lane.b32.xlu0 %v943, 8
        %v1348 = vpop.permute.xlu0 %1347
        %1349 = vrot.lane.b32.xlu0 %v944, 8
        %v1350 = vpop.permute.xlu0 %1349
        %1355 = vrot.lane.b32.xlu0 %v1143, 16
        %v1356 = vpop.permute.xlu0 %1355
        %1357 = vrot.lane.b32.xlu0 %v1144, 16
        %v1358 = vpop.permute.xlu0 %1357
        %1363 = vrot.lane.b32.xlu0 %v1343, 24
        %v1364 = vpop.permute.xlu0 %1363
        %1365 = vrot.lane.b32.xlu0 %v1344, 24
        %v1366 = vpop.permute.xlu0 %1365
        %v1369 = vsel %vm551, %v743, %v1348
        %v1370 = vsel %vm551, %v744, %v1350
        %v1371 = vsel %vm635, %v1369, %v1356
        %v1372 = vsel %vm635, %v1370, %v1358
        %vm1373 = vcmask 195584
        %v1374 = vsel %vm1373, %v1371, %v1364
        %v1375 = vsel %vm1373, %v1372, %v1366
        %v1376 = vld [vmem:[%s4] sm:$0xff]
        %v1377 = vld [vmem:[%s4 + $0x8] sm:$0xff]
        %v1378 = vld [vmem:[%s4 + $0x10] sm:$0xff]
        %v1379 = vld [vmem:[%s4 + $0x18] sm:$0xff]
        %v1381 = vsel %vm416, %v1374, 0
        %v1384 = vsel %vm416, %v1375, 0
        %1386 = vmatprep.subr.mxu0 0.0
        %1387 = vmatpush1.msra.mxu0 %v1376
        %1388 = vmatprep.subr.mxu0 0.0
        %1389 = vmatpush1.msra.mxu0 %v1377
        %1390 = vmatprep.subr.mxu0 0.0
        %1391 = vmatpush1.msra.mxu0 %v1378
        %1392 = vmatprep.subr.mxu0 0.0
        %1393 = vmatpush1.msra.mxu0 %v1379
        %1394 = vmatprep.subr.mxu0 0.0
        %1395 = vmatpush1.msra.mxu0 0.0
        %1396 = vmatprep.subr.mxu0 0.0
        %1397 = vmatpush1.msra.mxu0 0.0
        %1398 = vmatprep.subr.mxu0 0.0
        %1399 = vmatpush1.msra.mxu0 0.0
        %1400 = vmatprep.subr.mxu0 0.0
        %1401 = vmatpush1.msra.mxu0 0.0
        %1402 = vmatprep.subr.mxu0 0.0
        %1403 = vmatpush1.msra.mxu0 0.0
        %1404 = vmatprep.subr.mxu0 0.0
        %1405 = vmatpush1.msra.mxu0 0.0
        %1406 = vmatprep.subr.mxu0 0.0
        %1407 = vmatpush1.msra.mxu0 0.0
        %1408 = vmatprep.subr.mxu0 0.0
        %1409 = vmatpush1.msra.mxu0 0.0
        %1410 = vmatprep.subr.mxu0 0.0
        %1411 = vmatpush1.msra.mxu0 0.0
        %1412 = vmatprep.subr.mxu0 0.0
        %1413 = vmatpush1.msra.mxu0 0.0
        %1414 = vmatprep.subr.mxu0 0.0
        %1415 = vmatpush1.msra.mxu0 0.0
        %1416 = vmatprep.subr.mxu0 0.0
        %1417 = vmatpush1.msra.mxu0 0.0
        %1418 = vmatprep.subr.mxu0 0.0
        %1419 = vmatpush1.msra.mxu0 0.0
        %1420 = vmatprep.subr.mxu0 0.0
        %1421 = vmatpush1.msra.mxu0 0.0
        %1422 = vmatprep.subr.mxu0 0.0
        %1423 = vmatpush1.msra.mxu0 0.0
        %1424 = vmatprep.subr.mxu0 0.0
        %1425 = vmatpush1.msra.mxu0 0.0
        %1426 = vmatprep.subr.mxu0 0.0
        %1427 = vmatpush1.msra.mxu0 0.0
        %1428 = vmatprep.subr.mxu0 0.0
        %1429 = vmatpush1.msra.mxu0 0.0
        %1430 = vmatprep.subr.mxu0 0.0
        %1431 = vmatpush1.msra.mxu0 0.0
        %1432 = vmatprep.subr.mxu0 0.0
        %1433 = vmatpush1.msra.mxu0 0.0
        %1434 = vmatprep.subr.mxu0 0.0
        %1435 = vmatpush1.msra.mxu0 0.0
        %1436 = vmatprep.subr.mxu0 0.0
        %1437 = vmatpush1.msra.mxu0 0.0
        %1438 = vmatprep.subr.mxu0 0.0
        %1439 = vmatpush1.msra.mxu0 0.0
        %1440 = vmatprep.subr.mxu0 0.0
        %1441 = vmatpush1.msra.mxu0 0.0
        %1442 = vmatprep.subr.mxu0 0.0
        %1443 = vmatpush1.msra.mxu0 0.0
        %1444 = vmatprep.subr.mxu0 0.0
        %1445 = vmatpush1.msra.mxu0 0.0
        %1446 = vmatprep.subr.mxu0 0.0
        %1447 = vmatpush1.msra.mxu0 0.0
        %1448 = vmatprep.subr.mxu0 0.0
        %1449 = vmatpush1.msra.mxu0 0.0
        %1450 = vmatprep.mubr.f32.mxu0 0.0
        %1451 = vmatmul.mubr.f32.gmra.mrb[0].mxu0 %v1381
        %v1452 = vpop.f32.mrb[0].mxu0
        %v1453 = vadd.f32 0.0, %v1452
        %v1454 = vpop.f32.mrb[0].mxu0
        %1455 = vmatprep.mubr.f32.mxu0 0.0
        %1456 = vmatmul.mubr.f32.gmra.mrb[0].mxu0 %v1384
        %v1457 = vpop.f32.mrb[0].mxu0
        %v1458 = vadd.f32 0.0, %v1457
        %v1459 = vpop.f32.mrb[0].mxu0
        %1460 = vdwg.mxu0
        %v1461 = vadd.f32 %v412, %v1453
        %v1462 = vadd.f32 %v413, %v1458
        %v1463 = vld [vmem:[%s5] sm:$0x1]
        %v1465 = vlaneseq
        %v1466 = vshrl.u32 %v1465, 7
        %v1467 = vsub.s32 0, %v1466
        %v1468 = vrot.slane %v1463, %v1467
        %v1470 = vadd.f32 %v1461, %v1468
        %v1471 = vadd.f32 %v1462, %v1468
        %v1472 = vld [vmem:[%s6] sm:$0x1]
        %v1473 = vld [vmem:[%s7] sm:$0x1]
        %v1474 = vsel %vm416, %v1470, 0.0
        %1475 = vadd.xlane.f32.xlu0 %v1474
        %v1476 = vpop.xlane.xlu0 %1475
        %v1477 = vsel %vm416, %v1471, 0.0
        %1478 = vadd.xlane.f32.xlu0 %v1477
        %v1479 = vpop.xlane.xlu0 %1478
        %v1480 = vmul.f32 %v1476, %v423
        %v1481 = vmul.f32 %v1479, %v423
        %v1482 = vsub.f32 %v1470, %v1480
        %v1483 = vsub.f32 %v1471, %v1481
        %v1484 = vmul.f32 %v1482, %v1482
        %v1485 = vmul.f32 %v1483, %v1483
        %v1486 = vsel %vm416, %v1484, 0.0
        %1487 = vadd.xlane.f32.xlu0 %v1486
        %v1488 = vpop.xlane.xlu0 %1487
        %v1489 = vsel %vm416, %v1485, 0.0
        %1490 = vadd.xlane.f32.xlu0 %v1489
        %v1491 = vpop.xlane.xlu0 %1490
        %v1492 = vmul.f32 %v1488, %v423
        %v1493 = vmul.f32 %v1491, %v423
        %v1494 = vadd.f32 %v1492, 1e-05
        %v1495 = vadd.f32 %v1493, 1e-05
        %v1496 = vrsqrt.pop %v1494
        %v1497 = vrsqrt.pop %v1495
        %v1498 = vmul.f32 %v1482, %v1496
        %v1499 = vmul.f32 %v1483, %v1497
        %v1501 = vlaneseq
        %v1502 = vshrl.u32 %v1501, 7
        %v1503 = vsub.s32 0, %v1502
        %v1504 = vrot.slane %v1472, %v1503
        %v1506 = vmul.f32 %v1498, %v1504
        %v1507 = vmul.f32 %v1499, %v1504
        %v1509 = vlaneseq
        %v1510 = vshrl.u32 %v1509, 7
        %v1511 = vsub.s32 0, %v1510
        %v1512 = vrot.slane %v1473, %v1511
        %v1514 = vadd.f32 %v1506, %v1512
        %v1515 = vadd.f32 %v1507, %v1512
        %v1516 = vld [vmem:[%s8] sm:$0xff]
        %v1517 = vld [vmem:[%s8 + $0x8] sm:$0xff]
        %v1518 = vld [vmem:[%s8 + $0x10] sm:$0xff]
        %v1519 = vld [vmem:[%s8 + $0x18] sm:$0xff]
        %v1520 = vld [vmem:[%s9] sm:$0x1]
        %v1522 = vlaneseq
        %v1523 = vshrl.u32 %v1522, 7
        %v1524 = vsub.s32 0, %v1523
        %v1525 = vrot.slane %v1520, %v1524
        %v1528 = vsel %vm416, %v1514, 0
        %v1531 = vsel %vm416, %v1515, 0
        %1533 = vmatprep.subr.mxu0 0.0
        %1534 = vmatpush1.msra.mxu0 %v1516
        %1535 = vmatprep.subr.mxu0 0.0
        %1536 = vmatpush1.msra.mxu0 %v1517
        %1537 = vmatprep.subr.mxu0 0.0
        %1538 = vmatpush1.msra.mxu0 %v1518
        %1539 = vmatprep.subr.mxu0 0.0
        %1540 = vmatpush1.msra.mxu0 %v1519
        %1541 = vmatprep.subr.mxu0 0.0
        %1542 = vmatpush1.msra.mxu0 0.0
        %1543 = vmatprep.subr.mxu0 0.0
        %1544 = vmatpush1.msra.mxu0 0.0
        %1545 = vmatprep.subr.mxu0 0.0
        %1546 = vmatpush1.msra.mxu0 0.0
        %1547 = vmatprep.subr.mxu0 0.0
        %1548 = vmatpush1.msra.mxu0 0.0
        %1549 = vmatprep.subr.mxu0 0.0
        %1550 = vmatpush1.msra.mxu0 0.0
        %1551 = vmatprep.subr.mxu0 0.0
        %1552 = vmatpush1.msra.mxu0 0.0
        %1553 = vmatprep.subr.mxu0 0.0
        %1554 = vmatpush1.msra.mxu0 0.0
        %1555 = vmatprep.subr.mxu0 0.0
        %1556 = vmatpush1.msra.mxu0 0.0
        %1557 = vmatprep.subr.mxu0 0.0
        %1558 = vmatpush1.msra.mxu0 0.0
        %1559 = vmatprep.subr.mxu0 0.0
        %1560 = vmatpush1.msra.mxu0 0.0
        %1561 = vmatprep.subr.mxu0 0.0
        %1562 = vmatpush1.msra.mxu0 0.0
        %1563 = vmatprep.subr.mxu0 0.0
        %1564 = vmatpush1.msra.mxu0 0.0
        %1565 = vmatprep.subr.mxu0 0.0
        %1566 = vmatpush1.msra.mxu0 0.0
        %1567 = vmatprep.subr.mxu0 0.0
        %1568 = vmatpush1.msra.mxu0 0.0
        %1569 = vmatprep.subr.mxu0 0.0
        %1570 = vmatpush1.msra.mxu0 0.0
        %1571 = vmatprep.subr.mxu0 0.0
        %1572 = vmatpush1.msra.mxu0 0.0
        %1573 = vmatprep.subr.mxu0 0.0
        %1574 = vmatpush1.msra.mxu0 0.0
        %1575 = vmatprep.subr.mxu0 0.0
        %1576 = vmatpush1.msra.mxu0 0.0
        %1577 = vmatprep.subr.mxu0 0.0
        %1578 = vmatpush1.msra.mxu0 0.0
        %1579 = vmatprep.subr.mxu0 0.0
        %1580 = vmatpush1.msra.mxu0 0.0
        %1581 = vmatprep.subr.mxu0 0.0
        %1582 = vmatpush1.msra.mxu0 0.0
        %1583 = vmatprep.subr.mxu0 0.0
        %1584 = vmatpush1.msra.mxu0 0.0
        %1585 = vmatprep.subr.mxu0 0.0
        %1586 = vmatpush1.msra.mxu0 0.0
        %1587 = vmatprep.subr.mxu0 0.0
        %1588 = vmatpush1.msra.mxu0 0.0
        %1589 = vmatprep.subr.mxu0 0.0
        %1590 = vmatpush1.msra.mxu0 0.0
        %1591 = vmatprep.subr.mxu0 0.0
        %1592 = vmatpush1.msra.mxu0 0.0
        %1593 = vmatprep.subr.mxu0 0.0
        %1594 = vmatpush1.msra.mxu0 0.0
        %1595 = vmatprep.subr.mxu0 0.0
        %1596 = vmatpush1.msra.mxu0 0.0
        %1597 = vmatprep.mubr.f32.mxu0 0.0
        %1598 = vmatmul.mubr.f32.gmra.mrb[0].mxu0 %v1528
        %v1599 = vpop.f32.mrb[0].mxu0
        %v1600 = vadd.f32 %v1525, %v1599
        %v1601 = vpop.f32.mrb[0].mxu0
        %1602 = vmatprep.mubr.f32.mxu0 0.0
        %1603 = vmatmul.mubr.f32.gmra.mrb[0].mxu0 %v1531
        %v1604 = vpop.f32.mrb[0].mxu0
        %v1605 = vadd.f32 %v1525, %v1604
        %v1606 = vpop.f32.mrb[0].mxu0
        %1607 = vdwg.mxu0
        %v1608 = vmul.f32 %v1600, 0.5
        %v1609 = vmul.f32 %v1605, 0.5
        %v1610 = vmul.f32 %v1600, %v1600
        %v1611 = vmul.f32 %v1605, %v1605
        %v1612 = vmul.f32 %v1610, %v1600
        %v1613 = vmul.f32 %v1611, %v1605
        %v1614 = vmul.f32 %v1612, 0.044715
        %v1615 = vmul.f32 %v1613, 0.044715
        %v1616 = vadd.f32 %v1600, %v1614
        %v1617 = vadd.f32 %v1605, %v1615
        %v1618 = vmul.f32 %v1616, 0.7978846
        %v1619 = vmul.f32 %v1617, 0.7978846
        %v1620 = vtanh.pop %v1618
        %v1621 = vtanh.pop %v1619
        %v1622 = vadd.f32 %v1620, 1.0
        %v1623 = vadd.f32 %v1621, 1.0
        %v1624 = vmul.f32 %v1608, %v1622
        %v1625 = vmul.f32 %v1609, %v1623
        %v1626 = vld [vmem:[%s10] sm:$0xff]
        %v1627 = vld [vmem:[%s10 + $0x8] sm:$0xff]
        %v1628 = vld [vmem:[%s10 + $0x10] sm:$0xff]
        %v1629 = vld [vmem:[%s10 + $0x18] sm:$0xff]
        %v1630 = vld [vmem:[%s10 + $0x20] sm:$0xff]
        %v1631 = vld [vmem:[%s10 + $0x28] sm:$0xff]
        %v1632 = vld [vmem:[%s10 + $0x30] sm:$0xff]
        %v1633 = vld [vmem:[%s10 + $0x38] sm:$0xff]
        %v1634 = vld [vmem:[%s10 + $0x40] sm:$0xff]
        %v1635 = vld [vmem:[%s10 + $0x48] sm:$0xff]
        %v1636 = vld [vmem:[%s10 + $0x50] sm:$0xff]
        %v1637 = vld [vmem:[%s10 + $0x58] sm:$0xff]
        %v1638 = vld [vmem:[%s10 + $0x60] sm:$0xff]
        %v1639 = vld [vmem:[%s10 + $0x68] sm:$0xff]
        %v1640 = vld [vmem:[%s10 + $0x70] sm:$0xff]
        %v1641 = vld [vmem:[%s10 + $0x78] sm:$0xff]
        %v1642 = vld [vmem:[%s11] sm:$0x1]
        %v1644 = vlaneseq
        %v1645 = vshrl.u32 %v1644, 7
        %v1646 = vsub.s32 0, %v1645
        %v1647 = vrot.slane %v1642, %v1646
        %1649 = vmatprep.subr.mxu0 0.0
        %1650 = vmatpush1.msra.mxu0 %v1626
        %1651 = vmatprep.subr.mxu0 0.0
        %1652 = vmatpush1.msra.mxu0 %v1627
        %1653 = vmatprep.subr.mxu0 0.0
        %1654 = vmatpush1.msra.mxu0 %v1628
        %1655 = vmatprep.subr.mxu0 0.0
        %1656 = vmatpush1.msra.mxu0 %v1629
        %1657 = vmatprep.subr.mxu0 0.0
        %1658 = vmatpush1.msra.mxu0 %v1630
        %1659 = vmatprep.subr.mxu0 0.0
        %1660 = vmatpush1.msra.mxu0 %v1631
        %1661 = vmatprep.subr.mxu0 0.0
        %1662 = vmatpush1.msra.mxu0 %v1632
        %1663 = vmatprep.subr.mxu0 0.0
        %1664 = vmatpush1.msra.mxu0 %v1633
        %1665 = vmatprep.subr.mxu0 0.0
        %1666 = vmatpush1.msra.mxu0 %v1634
        %1667 = vmatprep.subr.mxu0 0.0
        %1668 = vmatpush1.msra.mxu0 %v1635
        %1669 = vmatprep.subr.mxu0 0.0
        %1670 = vmatpush1.msra.mxu0 %v1636
        %1671 = vmatprep.subr.mxu0 0.0
        %1672 = vmatpush1.msra.mxu0 %v1637
        %1673 = vmatprep.subr.mxu0 0.0
        %1674 = vmatpush1.msra.mxu0 %v1638
        %1675 = vmatprep.subr.mxu0 0.0
        %1676 = vmatpush1.msra.mxu0 %v1639
        %1677 = vmatprep.subr.mxu0 0.0
        %1678 = vmatpush1.msra.mxu0 %v1640
        %1679 = vmatprep.subr.mxu0 0.0
        %1680 = vmatpush1.msra.mxu0 %v1641
        %1681 = vmatprep.subr.mxu0 0.0
        %1682 = vmatpush1.msra.mxu0 0.0
        %1683 = vmatprep.subr.mxu0 0.0
        %1684 = vmatpush1.msra.mxu0 0.0
        %1685 = vmatprep.subr.mxu0 0.0
        %1686 = vmatpush1.msra.mxu0 0.0
        %1687 = vmatprep.subr.mxu0 0.0
        %1688 = vmatpush1.msra.mxu0 0.0
        %1689 = vmatprep.subr.mxu0 0.0
        %1690 = vmatpush1.msra.mxu0 0.0
        %1691 = vmatprep.subr.mxu0 0.0
        %1692 = vmatpush1.msra.mxu0 0.0
        %1693 = vmatprep.subr.mxu0 0.0
        %1694 = vmatpush1.msra.mxu0 0.0
        %1695 = vmatprep.subr.mxu0 0.0
        %1696 = vmatpush1.msra.mxu0 0.0
        %1697 = vmatprep.subr.mxu0 0.0
        %1698 = vmatpush1.msra.mxu0 0.0
        %1699 = vmatprep.subr.mxu0 0.0
        %1700 = vmatpush1.msra.mxu0 0.0
        %1701 = vmatprep.subr.mxu0 0.0
        %1702 = vmatpush1.msra.mxu0 0.0
        %1703 = vmatprep.subr.mxu0 0.0
        %1704 = vmatpush1.msra.mxu0 0.0
        %1705 = vmatprep.subr.mxu0 0.0
        %1706 = vmatpush1.msra.mxu0 0.0
        %1707 = vmatprep.subr.mxu0 0.0
        %1708 = vmatpush1.msra.mxu0 0.0
        %1709 = vmatprep.subr.mxu0 0.0
        %1710 = vmatpush1.msra.mxu0 0.0
        %1711 = vmatprep.subr.mxu0 0.0
        %1712 = vmatpush1.msra.mxu0 0.0
        %1713 = vmatprep.mubr.f32.mxu0 0.0
        %1714 = vmatmul.mubr.f32.gmra.mrb[0].mxu0 %v1624
        %v1715 = vpop.f32.mrb[0].mxu0
        %v1716 = vadd.f32 %v1647, %v1715
        %v1717 = vpop.f32.mrb[0].mxu0
        %1718 = vmatprep.mubr.f32.mxu0 0.0
        %1719 = vmatmul.mubr.f32.gmra.mrb[0].mxu0 %v1625
        %v1720 = vpop.f32.mrb[0].mxu0
        %v1721 = vadd.f32 %v1647, %v1720
        %v1722 = vpop.f32.mrb[0].mxu0
        %1723 = vdwg.mxu0
        %v1724 = vadd.f32 %v1470, %v1716
        %v1725 = vadd.f32 %v1471, %v1721
        %1726 = vst.msk [vmem:[%s406] sm:$0xff] %vm416, %v1724
        %1727 = vst.msk [vmem:[%s406 + $0x8] sm:$0xff] %vm416, %v1725
        %s1728 = sand.u32 %s291, 1
        %s1729 = scalar_lea.sflag [#allocation3], %s1728
        %s1730 = sand.u32 %s291, 1
        %s1731 = smul.addr %s1730, 16
        %s1732 = scalar_lea.vmem [#allocation2], %s1731
        // Predicated region
        $region69: #{tpu_custom_call.1} parent=67 // pred_check
          %p1733 = pneg %p301
        $region70: #{tpu_custom_call.1} parent=67 // pred_check_branch
          %1735 = sbr.rel (%p1733) target = $region72
        $region71: #{tpu_custom_call.1} parent=67 // pred_region
          %s1737 = ssub.s32 256, 256
          %1738 = vsyncadd %s1729, %s1737
          %s1739 = smul.addr %s26, 2
          %s1740 = smul.addr %s1739, 128
          %s1741 = scalar_lea.hbm %s12, %s1740
          %s1742 = sshll.u32 %s1732, 4
          %s1743 = int_to_ptr.vmem [resolvable:$true] %s1742
          %1748 = dma.vmem_to_hbm [thread:$0]  %s1743, 256, %s1741, %s1729, 128, 128, 8
        $region72: #{tpu_custom_call.1} parent=67 // pred_fallthru
          _
      $region68: #{tpu_custom_call.1} parent=5 // pred_fallthru
        _
      %p1749 = scmp.le.s32.totalorder 2, %s21
      // Predicated region
      $region73: #{tpu_custom_call.1} parent=5 // pred_check
        %p1750 = pneg %p1749
      $region74: #{tpu_custom_call.1} parent=5 // pred_check_branch
        %1752 = sbr.rel (%p1750) target = $region76
      $region75: #{tpu_custom_call.1} parent=5 // pred_region
        %s1753 = ssub.s32 %s21, 2
        // Predicated region
        $region77: #{tpu_custom_call.1} parent=75 // pred_check
          %p1754 = pneg %p307
        $region78: #{tpu_custom_call.1} parent=75 // pred_check_branch
          %1756 = sbr.rel (%p1754) target = $region80
        $region79: #{tpu_custom_call.1} parent=75 // pred_region
          %s1757 = sand.u32 %s292, 1
          %s1758 = scalar_lea.sflag [#allocation3], %s1757
          %s1759 = sand.u32 %s292, 1
          %s1760 = smul.addr %s1759, 16
          %s1761 = scalar_lea.vmem [#allocation2], %s1760
          %1762 = dma.done %s1758, 256
        $region80: #{tpu_custom_call.1} parent=75 // pred_fallthru
          _
      $region76: #{tpu_custom_call.1} parent=5 // pred_fallthru
        _
    $region6: #{tpu_custom_call.1} parent=1 // loop_footer
      %s25 = sadd.s32 1, %s21
    $region7: #{tpu_custom_call.1} parent=1 // loop_footer_branch
      %20 = sbr.rel target = $region3
    $region8: #{tpu_custom_call.1} parent=1 // loop_exit
      _
    %1763 = vsyncpa [#allocation3], 1
    %s1764 = scalar_lea.sflag [#allocation3], 1
    %1765 = vsyncpa %s1764, 1

</llo_original>
